<compile_context>
chip_gen: v7x
topology: tpu7x:2x2x1
jax: 0.10.0
libtpu: 0.0.40
codegen_flags: <defaults>
</compile_context>

<pallas_src>
import jax
import jax.numpy as jnp
from jax.experimental import pallas as pl
from jax.experimental.pallas import tpu as pltpu

HIDDEN = 512


def _round_up(x, m):
    return (x + m - 1) // m * m


def _mlp_kernel(x_ref, w1_ref, b1_ref, w2_ref, b2_ref, w3_ref, b3_ref,
                o_ref, acc_ref):
    """Fused 3-layer MLP over one batch tile, K-tiled over input features.

    x:  [TB, TK] bf16       w1: [TK, 512] bf16    b1: [1, 512] f32
    w2: [512, 512] bf16     b2: [1, 512] f32
    w3: [512, F_out_pad]    b3: [1, F_out_pad]    o: [TB, F_out_pad] f32
    acc: [TB, 512] f32 scratch (layer-1 pre-activation accumulator)
    """
    k = pl.program_id(1)

    @pl.when(k == 0)
    def _():
        acc_ref[...] = jnp.zeros_like(acc_ref)

    # Layer-1 partial product, accumulated in f32 across K tiles.
    acc_ref[...] += jnp.dot(x_ref[...], w1_ref[...],
                            preferred_element_type=jnp.float32)

    @pl.when(k == pl.num_programs(1) - 1)
    def _():
        h1 = jnp.maximum(acc_ref[...] + b1_ref[...], 0.0).astype(w2_ref.dtype)
        h2 = jnp.dot(h1, w2_ref[...],
                     preferred_element_type=jnp.float32) + b2_ref[...]
        h2 = jnp.maximum(h2, 0.0).astype(w3_ref.dtype)
        logits = jnp.dot(h2, w3_ref[...],
                         preferred_element_type=jnp.float32) + b3_ref[...]
        o_ref[...] = logits.astype(o_ref.dtype)


def mlp_forward(x_nchw, params):
    """Fused MLP forward. x_nchw: [B, C, H, W] float32. Returns [B, F_out] f32."""
    w1, b1, w2, b2, w3, b3 = params
    B = x_nchw.shape[0]
    x = x_nchw.reshape(B, -1)            # flatten (glue, plain JAX)
    F_in = x.shape[1]
    F_out = w3.shape[1]

    # ---- tiling / padding choices (MXU- and lane-shaped) -------------------
    TB = 256 if B > 128 else 128          # batch tile: MXU M dimension
    B_pad = _round_up(B, TB)
    TK_CAP = 2048                         # keep the w1 K-slice small in VMEM
    TK = min(TK_CAP, _round_up(F_in, 128))
    F_in_pad = _round_up(F_in, TK)
    F_out_pad = _round_up(F_out, 128)     # lane-dense output (no vst.msk)
    nb = B_pad // TB
    nk = F_in_pad // TK

    # ---- pad + cast: bf16 activations/weights, f32 biases ------------------
    xp = jnp.pad(x.astype(jnp.float32),
                 ((0, B_pad - B), (0, F_in_pad - F_in))).astype(jnp.bfloat16)
    w1p = jnp.pad(w1, ((0, F_in_pad - F_in), (0, 0))).astype(jnp.bfloat16)
    w2p = w2.astype(jnp.bfloat16)
    w3p = jnp.pad(w3, ((0, 0), (0, F_out_pad - F_out))).astype(jnp.bfloat16)
    b1p = b1.astype(jnp.float32)
    b2p = b2.astype(jnp.float32)
    b3p = jnp.pad(b3, ((0, 0), (0, F_out_pad - F_out))).astype(jnp.float32)

    # ---- cost estimate + VMEM budget ---------------------------------------
    flops = 2 * B_pad * (F_in_pad * HIDDEN + HIDDEN * HIDDEN + HIDDEN * F_out_pad)
    bytes_accessed = (xp.size * 2 + w1p.size * 2 + w2p.size * 2 + w3p.size * 2
                      + (b1p.size + b2p.size + b3p.size) * 4
                      + B_pad * F_out_pad * 4)
    vmem_need = (2 * TB * TK * 2            # x tile (double-buffered, bf16)
                 + 2 * TK * HIDDEN * 2      # w1 K-slice (double-buffered)
                 + 2 * HIDDEN * HIDDEN * 2  # w2
                 + 2 * HIDDEN * F_out_pad * 2
                 + 2 * TB * F_out_pad * 4   # out tile
                 + TB * HIDDEN * 4          # f32 accumulator scratch
                 + 4 * TB * HIDDEN * 4)     # h1/h2 intermediates + headroom
    vmem_limit = int(min(48 * 1024 * 1024, max(vmem_need, 16 * 1024 * 1024)))

    out_padded = pl.pallas_call(
        _mlp_kernel,
        out_shape=jax.ShapeDtypeStruct((B_pad, F_out_pad), jnp.float32),
        grid_spec=pltpu.PrefetchScalarGridSpec(
            num_scalar_prefetch=0,
            grid=(nb, nk),                                           # (batch, K)
            in_specs=[
                pl.BlockSpec((TB, TK), lambda i, k: (i, k)),             # x
                pl.BlockSpec((TK, HIDDEN), lambda i, k: (k, 0)),         # w1
                pl.BlockSpec((1, HIDDEN), lambda i, k: (0, 0)),          # b1
                pl.BlockSpec((HIDDEN, HIDDEN), lambda i, k: (0, 0)),     # w2
                pl.BlockSpec((1, HIDDEN), lambda i, k: (0, 0)),          # b2
                pl.BlockSpec((HIDDEN, F_out_pad), lambda i, k: (0, 0)),  # w3
                pl.BlockSpec((1, F_out_pad), lambda i, k: (0, 0)),       # b3
            ],
            out_specs=pl.BlockSpec((TB, F_out_pad), lambda i, k: (i, 0)),
            scratch_shapes=[pltpu.VMEM((TB, HIDDEN), jnp.float32)],
        ),
        compiler_params=pltpu.CompilerParams(
            dimension_semantics=("parallel", "arbitrary"),
            vmem_limit_bytes=vmem_limit,
        ),
        cost_estimate=pl.CostEstimate(flops=flops, transcendentals=0,
                                      bytes_accessed=bytes_accessed),
    )(xp, w1p, b1p, w2p, b2p, w3p, b3p)

    # Drop batch / output-feature padding.
    return out_padded[:B, :F_out]


def init_params(key, input_size, output_size):
    """Deterministic init mimicking torch.nn.Linear default (U(+/- 1/sqrt(fan_in))).
    Weights stored transposed relative to PyTorch: [in_features, out_features]."""
    ks = jax.random.split(key, 6)

    def linear(kw, kb, fan_in, fan_out):
        bound = 1.0 / jnp.sqrt(fan_in)
        w = jax.random.uniform(kw, (fan_in, fan_out), jnp.float32, -bound, bound)
        b = jax.random.uniform(kb, (1, fan_out), jnp.float32, -bound, bound)
        return w, b

    w1, b1 = linear(ks[0], ks[1], input_size, HIDDEN)
    w2, b2 = linear(ks[2], ks[3], HIDDEN, HIDDEN)
    w3, b3 = linear(ks[4], ks[5], HIDDEN, output_size)
    return (w1, b1, w2, b2, w3, b3)


if __name__ == "__main__":
    key = jax.random.PRNGKey(0)
    k_x, k_p = jax.random.split(key)

    # Small shapes consistent with the module: batch=2, channels=4, spatial=16.
    B, C, H, W = 2, 4, 16, 16
    input_size = C * H * W   # 1024
    output_size = 10

    x = jax.random.normal(k_x, (B, C, H, W), dtype=jnp.float32)
    params = init_params(k_p, input_size, output_size)

    out = mlp_forward(x, params)
    out = jax.block_until_ready(out)

    # Reference in plain JAX matching the kernel's bf16-weight math path.
    w1, b1, w2, b2, w3, b3 = params
    bf = lambda a: a.astype(jnp.bfloat16).astype(jnp.float32)
    xr = bf(x.reshape(B, -1))
    h1 = jnp.maximum(xr @ bf(w1) + b1, 0.0)
    h2 = jnp.maximum(bf(h1) @ bf(w2) + b2, 0.0)
    ref = bf(h2) @ bf(w3) + b3

    assert out.shape == (B, output_size)
    assert jnp.allclose(out, ref, atol=2e-2, rtol=2e-2)

    print("KERNEL_OK")
</pallas_src>

<mosaic_0001>
module attributes {stable_mosaic.version = 11 : i64} {
  func.func @_mlp_kernel(%arg0: i32, %arg1: i32, %arg2: memref<128x1024xbf16, #tpu.memory_space<vmem>>, %arg3: memref<1024x512xbf16, #tpu.memory_space<vmem>>, %arg4: memref<1x512xf32, #tpu.memory_space<vmem>>, %arg5: memref<512x512xbf16, #tpu.memory_space<vmem>>, %arg6: memref<1x512xf32, #tpu.memory_space<vmem>>, %arg7: memref<512x128xbf16, #tpu.memory_space<vmem>>, %arg8: memref<1x128xf32, #tpu.memory_space<vmem>>, %arg9: memref<128x128xf32, #tpu.memory_space<vmem>>, %arg10: memref<128x512xf32, #tpu.memory_space<vmem>>) attributes {dimension_semantics = [#tpu.dimension_semantics<parallel>, #tpu.dimension_semantics<arbitrary>], iteration_bounds = array<i64: 1, 1>, scalar_prefetch = 0 : i64, scratch_operands = 1 : i64, tpu.core_type = #tpu.core_type<tc>, window_params = [{transform_indices = @transform_0, window_bounds = array<i64: 128, 1024>}, {transform_indices = @transform_1, window_bounds = array<i64: 1024, 512>}, {pipeline_mode = #tpu.pipeline_mode<synchronous>, transform_indices = @transform_2, window_bounds = array<i64: 1, 512>}, {pipeline_mode = #tpu.pipeline_mode<synchronous>, transform_indices = @transform_3, window_bounds = array<i64: 512, 512>}, {pipeline_mode = #tpu.pipeline_mode<synchronous>, transform_indices = @transform_4, window_bounds = array<i64: 1, 512>}, {pipeline_mode = #tpu.pipeline_mode<synchronous>, transform_indices = @transform_5, window_bounds = array<i64: 512, 128>}, {pipeline_mode = #tpu.pipeline_mode<synchronous>, transform_indices = @transform_6, window_bounds = array<i64: 1, 128>}, {transform_indices = @transform_7, window_bounds = array<i64: 128, 128>}]} {
    %c0_i32 = arith.constant 0 : i32
    %0 = arith.cmpi eq, %arg1, %c0_i32 : i32
    %1 = arith.extui %0 : i1 to i32
    %c0_i32_0 = arith.constant 0 : i32
    %2 = arith.cmpi ne, %1, %c0_i32_0 : i32
    scf.if %2 {
      %cst_10 = arith.constant 0.000000e+00 : f32
      %12 = vector.broadcast %cst_10 : f32 to vector<128x512xf32>
      %c0_11 = arith.constant 0 : index
      %c0_12 = arith.constant 0 : index
      %13 = vector.load %arg10[%c0_11, %c0_12] : memref<128x512xf32, #tpu.memory_space<vmem>>, vector<128x512xf32>
      tpu.vector_store %arg10[%c0_11, %c0_12], %12 {strides = array<i32>} : memref<128x512xf32, #tpu.memory_space<vmem>>, vector<128x512xf32>,
    } else {
    }
    %c0 = arith.constant 0 : index
    %c0_1 = arith.constant 0 : index
    %3 = vector.load %arg10[%c0, %c0_1] : memref<128x512xf32, #tpu.memory_space<vmem>>, vector<128x512xf32>
    %c0_2 = arith.constant 0 : index
    %c0_3 = arith.constant 0 : index
    %4 = vector.load %arg2[%c0_2, %c0_3] : memref<128x1024xbf16, #tpu.memory_space<vmem>>, vector<128x1024xbf16>
    %c0_4 = arith.constant 0 : index
    %c0_5 = arith.constant 0 : index
    %5 = vector.load %arg3[%c0_4, %c0_5] : memref<1024x512xbf16, #tpu.memory_space<vmem>>, vector<1024x512xbf16>
    %cst = arith.constant dense<0.000000e+00> : vector<128x512xf32>
    %6 = tpu.matmul %4, %5, %cst {dimension_numbers = #tpu.dot_dimension_numbers<[1], [0], [0], [1], [0, 0, 1, 1], [], []>} : vector<128x1024xbf16>, vector<1024x512xbf16>, vector<128x512xf32> -> vector<128x512xf32>
    %7 = arith.addf %3, %6 : vector<128x512xf32>
    %c0_6 = arith.constant 0 : index
    %c0_7 = arith.constant 0 : index
    %8 = vector.load %arg10[%c0_6, %c0_7] : memref<128x512xf32, #tpu.memory_space<vmem>>, vector<128x512xf32>
    tpu.vector_store %arg10[%c0_6, %c0_7], %7 {strides = array<i32>} : memref<128x512xf32, #tpu.memory_space<vmem>>, vector<128x512xf32>,
    %c0_i32_8 = arith.constant 0 : i32
    %9 = arith.cmpi eq, %arg1, %c0_i32_8 : i32
    %10 = arith.extui %9 : i1 to i32
    %c0_i32_9 = arith.constant 0 : i32
    %11 = arith.cmpi ne, %10, %c0_i32_9 : i32
    scf.if %11 {
      %c0_10 = arith.constant 0 : index
      %c0_11 = arith.constant 0 : index
      %12 = vector.load %arg10[%c0_10, %c0_11] : memref<128x512xf32, #tpu.memory_space<vmem>>, vector<128x512xf32>
      %c0_12 = arith.constant 0 : index
      %c0_13 = arith.constant 0 : index
      %13 = vector.load %arg4[%c0_12, %c0_13] : memref<1x512xf32, #tpu.memory_space<vmem>>, vector<1x512xf32>
      %14 = vector.broadcast %13 : vector<1x512xf32> to vector<128x512xf32>
      %15 = arith.addf %12, %14 : vector<128x512xf32>
      %cst_14 = arith.constant 0.000000e+00 : f32
      %16 = vector.broadcast %cst_14 : f32 to vector<128x512xf32>
      %17 = arith.maximumf %15, %16 : vector<128x512xf32>
      %18 = arith.truncf %17 : vector<128x512xf32> to vector<128x512xbf16>
      %c0_15 = arith.constant 0 : index
      %c0_16 = arith.constant 0 : index
      %19 = vector.load %arg5[%c0_15, %c0_16] : memref<512x512xbf16, #tpu.memory_space<vmem>>, vector<512x512xbf16>
      %cst_17 = arith.constant dense<0.000000e+00> : vector<128x512xf32>
      %20 = tpu.matmul %18, %19, %cst_17 {dimension_numbers = #tpu.dot_dimension_numbers<[1], [0], [0], [1], [0, 0, 1, 1], [], []>} : vector<128x512xbf16>, vector<512x512xbf16>, vector<128x512xf32> -> vector<128x512xf32>
      %c0_18 = arith.constant 0 : index
      %c0_19 = arith.constant 0 : index
      %21 = vector.load %arg6[%c0_18, %c0_19] : memref<1x512xf32, #tpu.memory_space<vmem>>, vector<1x512xf32>
      %22 = vector.broadcast %21 : vector<1x512xf32> to vector<128x512xf32>
      %23 = arith.addf %20, %22 : vector<128x512xf32>
      %cst_20 = arith.constant 0.000000e+00 : f32
      %24 = vector.broadcast %cst_20 : f32 to vector<128x512xf32>
      %25 = arith.maximumf %23, %24 : vector<128x512xf32>
      %26 = arith.truncf %25 : vector<128x512xf32> to vector<128x512xbf16>
      %c0_21 = arith.constant 0 : index
      %c0_22 = arith.constant 0 : index
      %27 = vector.load %arg7[%c0_21, %c0_22] : memref<512x128xbf16, #tpu.memory_space<vmem>>, vector<512x128xbf16>
      %cst_23 = arith.constant dense<0.000000e+00> : vector<128x128xf32>
      %28 = tpu.matmul %26, %27, %cst_23 {dimension_numbers = #tpu.dot_dimension_numbers<[1], [0], [0], [1], [0, 0, 1, 1], [], []>} : vector<128x512xbf16>, vector<512x128xbf16>, vector<128x128xf32> -> vector<128x128xf32>
      %c0_24 = arith.constant 0 : index
      %c0_25 = arith.constant 0 : index
      %29 = vector.load %arg8[%c0_24, %c0_25] : memref<1x128xf32, #tpu.memory_space<vmem>>, vector<1x128xf32>
      %30 = vector.broadcast %29 : vector<1x128xf32> to vector<128x128xf32>
      %31 = arith.addf %28, %30 : vector<128x128xf32>
      %c0_26 = arith.constant 0 : index
      %c0_27 = arith.constant 0 : index
      %32 = vector.load %arg9[%c0_26, %c0_27] : memref<128x128xf32, #tpu.memory_space<vmem>>, vector<128x128xf32>
      tpu.vector_store %arg9[%c0_26, %c0_27], %31 {strides = array<i32>} : memref<128x128xf32, #tpu.memory_space<vmem>>, vector<128x128xf32>,
    } else {
    }
    return
  }
  func.func @transform_0(%arg0: i32, %arg1: i32) -> (i32, i32) {
    %c0_i32 = arith.constant 0 : i32
    return %arg0, %arg1 : i32, i32
  }
  func.func @transform_1(%arg0: i32, %arg1: i32) -> (i32, i32) {
    %c0_i32 = arith.constant 0 : i32
    %c0_i32_0 = arith.constant 0 : i32
    return %arg1, %c0_i32 : i32, i32
  }
  func.func @transform_2(%arg0: i32, %arg1: i32) -> (i32, i32) {
    %c0_i32 = arith.constant 0 : i32
    %c0_i32_0 = arith.constant 0 : i32
    %c0_i32_1 = arith.constant 0 : i32
    return %c0_i32, %c0_i32_0 : i32, i32
  }
  func.func @transform_3(%arg0: i32, %arg1: i32) -> (i32, i32) {
    %c0_i32 = arith.constant 0 : i32
    %c0_i32_0 = arith.constant 0 : i32
    %c0_i32_1 = arith.constant 0 : i32
    return %c0_i32, %c0_i32_0 : i32, i32
  }
  func.func @transform_4(%arg0: i32, %arg1: i32) -> (i32, i32) {
    %c0_i32 = arith.constant 0 : i32
    %c0_i32_0 = arith.constant 0 : i32
    %c0_i32_1 = arith.constant 0 : i32
    return %c0_i32, %c0_i32_0 : i32, i32
  }
  func.func @transform_5(%arg0: i32, %arg1: i32) -> (i32, i32) {
    %c0_i32 = arith.constant 0 : i32
    %c0_i32_0 = arith.constant 0 : i32
    %c0_i32_1 = arith.constant 0 : i32
    return %c0_i32, %c0_i32_0 : i32, i32
  }
  func.func @transform_6(%arg0: i32, %arg1: i32) -> (i32, i32) {
    %c0_i32 = arith.constant 0 : i32
    %c0_i32_0 = arith.constant 0 : i32
    %c0_i32_1 = arith.constant 0 : i32
    return %c0_i32, %c0_i32_0 : i32, i32
  }
  func.func @transform_7(%arg0: i32, %arg1: i32) -> (i32, i32) {
    %c0_i32 = arith.constant 0 : i32
    %c0_i32_0 = arith.constant 0 : i32
    return %arg0, %c0_i32 : i32, i32
  }
}

</mosaic_0001>

<llo_original>
// kernel: tpu_custom_call.1
$region0: #{tpu_custom_call.1}
  #allocation0 [shape = 'u32[]', space=smem, size = 0x4, offset = 0x4, fixed_abs, tag = 'smem constant byte address 0x4 - core index']
  #allocation1 [shape = 'u32[144,128]{1,0:T(1,128)}', space=vmem, size = 0x12000, scoped, tag = 'internal scratch']
  #allocation2 [shape = 'f32[128,512]{1,0:T(8,128)}', space=vmem, size = 0x40000, scoped, tag = 'scratch operand']
  %s0 = inlined_call_operand.hbm [shape: bf16[128,1024], index: 0, kind: input, shape index: {}]
  %s1 = inlined_call_operand.hbm [shape: bf16[1024,512], index: 1, kind: input, shape index: {}]
  %s2 = inlined_call_operand.vmem [shape: f32[1,512], index: 2, kind: input, shape index: {}]
  %s3 = inlined_call_operand.hbm [shape: bf16[512,512], index: 3, kind: input, shape index: {}]
  %s4 = inlined_call_operand.vmem [shape: f32[1,512], index: 4, kind: input, shape index: {}]
  %s5 = inlined_call_operand.hbm [shape: bf16[512,128], index: 5, kind: input, shape index: {}]
  %s6 = inlined_call_operand.vmem [shape: f32[1,128], index: 6, kind: input, shape index: {}]
  %s7 = inlined_call_operand.hbm [shape: f32[128,128], index: 7, kind: output, shape index: {}]
  %s8 = sld [smem:[#allocation0]]
  $region62: #{tpu_custom_call.1} parent=0
    _
  %s10 = ssub.s32 1, %s8
  %s11 = scalar_select 0, %s10, %s8
  $region1: #{tpu_custom_call.1} parent=0
    #allocation3 [shape = 'u8[262144]{0}', space=vmem, size = 0x40000, scoped, tag = 'input window, operand 0, single buffered']
    #allocation4 [shape = 's32[1]{0}', space=sflag, size = 0x4, scoped, tag = 'scoped memory for tpu_custom_call.1']
    #allocation5 [shape = 's32[1]{0}', space=sflag, size = 0x4, scoped, tag = 'scoped memory for tpu_custom_call.1']
    #allocation6 [shape = 'u8[1048576]{0}', space=vmem, size = 0x100000, scoped, tag = 'input window, operand 1, single buffered']
    #allocation7 [shape = 's32[1]{0}', space=sflag, size = 0x4, scoped, tag = 'scoped memory for tpu_custom_call.1']
    #allocation8 [shape = 'u8[524288]{0}', space=vmem, size = 0x80000, scoped, tag = 'input window, operand 3, single buffered']
    #allocation9 [shape = 'u8[131072]{0}', space=vmem, size = 0x20000, scoped, tag = 'input window, operand 5, single buffered']
    #allocation10 [shape = 's32[1]{0}', space=sflag, size = 0x4, scoped, tag = 'scoped memory for tpu_custom_call.1']
    #allocation11 [shape = 'u8[65536]{0}', space=vmem, size = 0x10000, scoped, tag = 'output window, operand 0, single buffered']
    %12 = vsyncpa [#allocation4], 0
    %13 = vsyncpa [#allocation7], 0
    %14 = vsyncpa [#allocation10], 0
    %15 = vsyncpa [#allocation5], 0
    // Predicated region
    $region2: #{tpu_custom_call.1} parent=1 // pred_check
      _
    $region3: #{tpu_custom_call.1} parent=1 // pred_check_branch
      %17 = sbr.rel (0) target = $region5
    $region4: #{tpu_custom_call.1} parent=1 // pred_region
      %s19 = ssub.s32 8192, 8192
      %20 = vsyncadd [#allocation4], %s19
      %s21 = sshll.u32 [#allocation3], 4
      %s22 = int_to_ptr.vmem [resolvable:$true] %s21
      %27 = dma.hbm_to_vmem [thread:$0]  %s0, 8192, %s22, [#allocation4], 512, 512, 32
    $region5: #{tpu_custom_call.1} parent=1 // pred_fallthru
      _
    // Predicated region
    $region6: #{tpu_custom_call.1} parent=1 // pred_check
      _
    $region7: #{tpu_custom_call.1} parent=1 // pred_check_branch
      %29 = sbr.rel (0) target = $region9
    $region8: #{tpu_custom_call.1} parent=1 // pred_region
      %s31 = ssub.s32 32768, 32768
      %32 = vsyncadd [#allocation7], %s31
      %s33 = sshll.u32 [#allocation6], 4
      %s34 = int_to_ptr.vmem [resolvable:$true] %s33
      %39 = dma.hbm_to_vmem [thread:$0]  %s1, 32768, %s34, [#allocation7], 256, 256, 16
    $region9: #{tpu_custom_call.1} parent=1 // pred_fallthru
      _
    // Predicated region
    $region10: #{tpu_custom_call.1} parent=1 // pred_check
      _
    $region11: #{tpu_custom_call.1} parent=1 // pred_check_branch
      %41 = sbr.rel (0) target = $region13
    $region12: #{tpu_custom_call.1} parent=1 // pred_region
      _
    $region13: #{tpu_custom_call.1} parent=1 // pred_fallthru
      _
    // Predicated region
    $region14: #{tpu_custom_call.1} parent=1 // pred_check
      _
    $region15: #{tpu_custom_call.1} parent=1 // pred_check_branch
      %43 = sbr.rel (0) target = $region17
    $region16: #{tpu_custom_call.1} parent=1 // pred_region
      %s45 = ssub.s32 16384, 16384
      %46 = vsyncadd [#allocation7], %s45
      %s47 = sshll.u32 [#allocation8], 4
      %s48 = int_to_ptr.vmem [resolvable:$true] %s47
      %53 = dma.hbm_to_vmem [thread:$0]  %s3, 16384, %s48, [#allocation7], 256, 256, 16
    $region17: #{tpu_custom_call.1} parent=1 // pred_fallthru
      _
    // Predicated region
    $region18: #{tpu_custom_call.1} parent=1 // pred_check
      _
    $region19: #{tpu_custom_call.1} parent=1 // pred_check_branch
      %55 = sbr.rel (0) target = $region21
    $region20: #{tpu_custom_call.1} parent=1 // pred_region
      _
    $region21: #{tpu_custom_call.1} parent=1 // pred_fallthru
      _
    // Predicated region
    $region22: #{tpu_custom_call.1} parent=1 // pred_check
      _
    $region23: #{tpu_custom_call.1} parent=1 // pred_check_branch
      %57 = sbr.rel (0) target = $region25
    $region24: #{tpu_custom_call.1} parent=1 // pred_region
      %s59 = ssub.s32 4096, 4096
      %60 = vsyncadd [#allocation10], %s59
      %s61 = sshll.u32 [#allocation9], 4
      %s62 = int_to_ptr.vmem [resolvable:$true] %s61
      %67 = dma.hbm_to_vmem [thread:$0]  %s5, 4096, %s62, [#allocation10], 64, 64, 4
    $region25: #{tpu_custom_call.1} parent=1 // pred_fallthru
      _
    // Predicated region
    $region26: #{tpu_custom_call.1} parent=1 // pred_check
      _
    $region27: #{tpu_custom_call.1} parent=1 // pred_check_branch
      %69 = sbr.rel (0) target = $region29
    $region28: #{tpu_custom_call.1} parent=1 // pred_region
      _
    $region29: #{tpu_custom_call.1} parent=1 // pred_fallthru
      _
    // Predicated region
    $region30: #{tpu_custom_call.1} parent=1 // pred_check
      _
    $region31: #{tpu_custom_call.1} parent=1 // pred_check_branch
      %71 = sbr.rel (0) target = $region33
    $region32: #{tpu_custom_call.1} parent=1 // pred_region
      %72 = dma.done [#allocation4], 8192
    $region33: #{tpu_custom_call.1} parent=1 // pred_fallthru
      _
    // Predicated region
    $region34: #{tpu_custom_call.1} parent=1 // pred_check
      _
    $region35: #{tpu_custom_call.1} parent=1 // pred_check_branch
      %74 = sbr.rel (0) target = $region37
    $region36: #{tpu_custom_call.1} parent=1 // pred_region
      %75 = dma.done [#allocation7], 32768
    $region37: #{tpu_custom_call.1} parent=1 // pred_fallthru
      _
    // Predicated region
    $region38: #{tpu_custom_call.1} parent=1 // pred_check
      _
    $region39: #{tpu_custom_call.1} parent=1 // pred_check_branch
      %77 = sbr.rel (0) target = $region41
    $region40: #{tpu_custom_call.1} parent=1 // pred_region
      %78 = dma.done [#allocation7], 16384
    $region41: #{tpu_custom_call.1} parent=1 // pred_fallthru
      _
    // Predicated region
    $region42: #{tpu_custom_call.1} parent=1 // pred_check
      _
    $region43: #{tpu_custom_call.1} parent=1 // pred_check_branch
      %80 = sbr.rel (0) target = $region45
    $region44: #{tpu_custom_call.1} parent=1 // pred_region
      %81 = dma.done [#allocation10], 4096
    $region45: #{tpu_custom_call.1} parent=1 // pred_fallthru
      _
    %p83 = scmp.eq.s32.totalorder 0, 0
    // Predicated region
    $region46: #{tpu_custom_call.1} parent=1 // pred_check
      %p84 = pneg %p83
    $region47: #{tpu_custom_call.1} parent=1 // pred_check_branch
      %86 = sbr.rel (%p84) target = $region49
    $region48: #{tpu_custom_call.1} parent=1 // pred_region
      %87 = vst [vmem:[#allocation2] sm:$0xff] 0.0
      %88 = vst [vmem:[#allocation2 + $0x8] sm:$0xff] 0.0
      %89 = vst [vmem:[#allocation2 + $0x10] sm:$0xff] 0.0
      %90 = vst [vmem:[#allocation2 + $0x18] sm:$0xff] 0.0
      %91 = vst [vmem:[#allocation2 + $0x20] sm:$0xff] 0.0
      %92 = vst [vmem:[#allocation2 + $0x28] sm:$0xff] 0.0
      %93 = vst [vmem:[#allocation2 + $0x30] sm:$0xff] 0.0
      %94 = vst [vmem:[#allocation2 + $0x38] sm:$0xff] 0.0
      %95 = vst [vmem:[#allocation2 + $0x40] sm:$0xff] 0.0
      %96 = vst [vmem:[#allocation2 + $0x48] sm:$0xff] 0.0
      %97 = vst [vmem:[#allocation2 + $0x50] sm:$0xff] 0.0
      %98 = vst [vmem:[#allocation2 + $0x58] sm:$0xff] 0.0
      %99 = vst [vmem:[#allocation2 + $0x60] sm:$0xff] 0.0
      %100 = vst [vmem:[#allocation2 + $0x68] sm:$0xff] 0.0
      %101 = vst [vmem:[#allocation2 + $0x70] sm:$0xff] 0.0
      %102 = vst [vmem:[#allocation2 + $0x78] sm:$0xff] 0.0
      %103 = vst [vmem:[#allocation2 + $0x80] sm:$0xff] 0.0
      %104 = vst [vmem:[#allocation2 + $0x88] sm:$0xff] 0.0
      %105 = vst [vmem:[#allocation2 + $0x90] sm:$0xff] 0.0
      %106 = vst [vmem:[#allocation2 + $0x98] sm:$0xff] 0.0
      %107 = vst [vmem:[#allocation2 + $0xa0] sm:$0xff] 0.0
      %108 = vst [vmem:[#allocation2 + $0xa8] sm:$0xff] 0.0
      %109 = vst [vmem:[#allocation2 + $0xb0] sm:$0xff] 0.0
      %110 = vst [vmem:[#allocation2 + $0xb8] sm:$0xff] 0.0
      %111 = vst [vmem:[#allocation2 + $0xc0] sm:$0xff] 0.0
      %112 = vst [vmem:[#allocation2 + $0xc8] sm:$0xff] 0.0
      %113 = vst [vmem:[#allocation2 + $0xd0] sm:$0xff] 0.0
      %114 = vst [vmem:[#allocation2 + $0xd8] sm:$0xff] 0.0
      %115 = vst [vmem:[#allocation2 + $0xe0] sm:$0xff] 0.0
      %116 = vst [vmem:[#allocation2 + $0xe8] sm:$0xff] 0.0
      %117 = vst [vmem:[#allocation2 + $0xf0] sm:$0xff] 0.0
      %118 = vst [vmem:[#allocation2 + $0xf8] sm:$0xff] 0.0
      %119 = vst [vmem:[#allocation2 + $0x100] sm:$0xff] 0.0
      %120 = vst [vmem:[#allocation2 + $0x108] sm:$0xff] 0.0
      %121 = vst [vmem:[#allocation2 + $0x110] sm:$0xff] 0.0
      %122 = vst [vmem:[#allocation2 + $0x118] sm:$0xff] 0.0
      %123 = vst [vmem:[#allocation2 + $0x120] sm:$0xff] 0.0
      %124 = vst [vmem:[#allocation2 + $0x128] sm:$0xff] 0.0
      %125 = vst [vmem:[#allocation2 + $0x130] sm:$0xff] 0.0
      %126 = vst [vmem:[#allocation2 + $0x138] sm:$0xff] 0.0
      %127 = vst [vmem:[#allocation2 + $0x140] sm:$0xff] 0.0
      %128 = vst [vmem:[#allocation2 + $0x148] sm:$0xff] 0.0
      %129 = vst [vmem:[#allocation2 + $0x150] sm:$0xff] 0.0
      %130 = vst [vmem:[#allocation2 + $0x158] sm:$0xff] 0.0
      %131 = vst [vmem:[#allocation2 + $0x160] sm:$0xff] 0.0
      %132 = vst [vmem:[#allocation2 + $0x168] sm:$0xff] 0.0
      %133 = vst [vmem:[#allocation2 + $0x170] sm:$0xff] 0.0
      %134 = vst [vmem:[#allocation2 + $0x178] sm:$0xff] 0.0
      %135 = vst [vmem:[#allocation2 + $0x180] sm:$0xff] 0.0
      %136 = vst [vmem:[#allocation2 + $0x188] sm:$0xff] 0.0
      %137 = vst [vmem:[#allocation2 + $0x190] sm:$0xff] 0.0
      %138 = vst [vmem:[#allocation2 + $0x198] sm:$0xff] 0.0
      %139 = vst [vmem:[#allocation2 + $0x1a0] sm:$0xff] 0.0
      %140 = vst [vmem:[#allocation2 + $0x1a8] sm:$0xff] 0.0
      %141 = vst [vmem:[#allocation2 + $0x1b0] sm:$0xff] 0.0
      %142 = vst [vmem:[#allocation2 + $0x1b8] sm:$0xff] 0.0
      %143 = vst [vmem:[#allocation2 + $0x1c0] sm:$0xff] 0.0
      %144 = vst [vmem:[#allocation2 + $0x1c8] sm:$0xff] 0.0
      %145 = vst [vmem:[#allocation2 + $0x1d0] sm:$0xff] 0.0
      %146 = vst [vmem:[#allocation2 + $0x1d8] sm:$0xff] 0.0
      %147 = vst [vmem:[#allocation2 + $0x1e0] sm:$0xff] 0.0
      %148 = vst [vmem:[#allocation2 + $0x1e8] sm:$0xff] 0.0
      %149 = vst [vmem:[#allocation2 + $0x1f0] sm:$0xff] 0.0
      %150 = vst [vmem:[#allocation2 + $0x1f8] sm:$0xff] 0.0
    $region49: #{tpu_custom_call.1} parent=1 // pred_fallthru
      _
    %v151 = vld [vmem:[#allocation2] sm:$0xff]
    %v152 = vld [vmem:[#allocation2 + $0x8] sm:$0xff]
    %v153 = vld [vmem:[#allocation2 + $0x10] sm:$0xff]
    %v154 = vld [vmem:[#allocation2 + $0x18] sm:$0xff]
    %v155 = vld [vmem:[#allocation2 + $0x20] sm:$0xff]
    %v156 = vld [vmem:[#allocation2 + $0x28] sm:$0xff]
    %v157 = vld [vmem:[#allocation2 + $0x30] sm:$0xff]
    %v158 = vld [vmem:[#allocation2 + $0x38] sm:$0xff]
    %v159 = vld [vmem:[#allocation2 + $0x40] sm:$0xff]
    %v160 = vld [vmem:[#allocation2 + $0x48] sm:$0xff]
    %v161 = vld [vmem:[#allocation2 + $0x50] sm:$0xff]
    %v162 = vld [vmem:[#allocation2 + $0x58] sm:$0xff]
    %v163 = vld [vmem:[#allocation2 + $0x60] sm:$0xff]
    %v164 = vld [vmem:[#allocation2 + $0x68] sm:$0xff]
    %v165 = vld [vmem:[#allocation2 + $0x70] sm:$0xff]
    %v166 = vld [vmem:[#allocation2 + $0x78] sm:$0xff]
    %v167 = vld [vmem:[#allocation2 + $0x80] sm:$0xff]
    %v168 = vld [vmem:[#allocation2 + $0x88] sm:$0xff]
    %v169 = vld [vmem:[#allocation2 + $0x90] sm:$0xff]
    %v170 = vld [vmem:[#allocation2 + $0x98] sm:$0xff]
    %v171 = vld [vmem:[#allocation2 + $0xa0] sm:$0xff]
    %v172 = vld [vmem:[#allocation2 + $0xa8] sm:$0xff]
    %v173 = vld [vmem:[#allocation2 + $0xb0] sm:$0xff]
    %v174 = vld [vmem:[#allocation2 + $0xb8] sm:$0xff]
    %v175 = vld [vmem:[#allocation2 + $0xc0] sm:$0xff]
    %v176 = vld [vmem:[#allocation2 + $0xc8] sm:$0xff]
    %v177 = vld [vmem:[#allocation2 + $0xd0] sm:$0xff]
    %v178 = vld [vmem:[#allocation2 + $0xd8] sm:$0xff]
    %v179 = vld [vmem:[#allocation2 + $0xe0] sm:$0xff]
    %v180 = vld [vmem:[#allocation2 + $0xe8] sm:$0xff]
    %v181 = vld [vmem:[#allocation2 + $0xf0] sm:$0xff]
    %v182 = vld [vmem:[#allocation2 + $0xf8] sm:$0xff]
    %v183 = vld [vmem:[#allocation2 + $0x100] sm:$0xff]
    %v184 = vld [vmem:[#allocation2 + $0x108] sm:$0xff]
    %v185 = vld [vmem:[#allocation2 + $0x110] sm:$0xff]
    %v186 = vld [vmem:[#allocation2 + $0x118] sm:$0xff]
    %v187 = vld [vmem:[#allocation2 + $0x120] sm:$0xff]
    %v188 = vld [vmem:[#allocation2 + $0x128] sm:$0xff]
    %v189 = vld [vmem:[#allocation2 + $0x130] sm:$0xff]
    %v190 = vld [vmem:[#allocation2 + $0x138] sm:$0xff]
    %v191 = vld [vmem:[#allocation2 + $0x140] sm:$0xff]
    %v192 = vld [vmem:[#allocation2 + $0x148] sm:$0xff]
    %v193 = vld [vmem:[#allocation2 + $0x150] sm:$0xff]
    %v194 = vld [vmem:[#allocation2 + $0x158] sm:$0xff]
    %v195 = vld [vmem:[#allocation2 + $0x160] sm:$0xff]
    %v196 = vld [vmem:[#allocation2 + $0x168] sm:$0xff]
    %v197 = vld [vmem:[#allocation2 + $0x170] sm:$0xff]
    %v198 = vld [vmem:[#allocation2 + $0x178] sm:$0xff]
    %v199 = vld [vmem:[#allocation2 + $0x180] sm:$0xff]
    %v200 = vld [vmem:[#allocation2 + $0x188] sm:$0xff]
    %v201 = vld [vmem:[#allocation2 + $0x190] sm:$0xff]
    %v202 = vld [vmem:[#allocation2 + $0x198] sm:$0xff]
    %v203 = vld [vmem:[#allocation2 + $0x1a0] sm:$0xff]
    %v204 = vld [vmem:[#allocation2 + $0x1a8] sm:$0xff]
    %v205 = vld [vmem:[#allocation2 + $0x1b0] sm:$0xff]
    %v206 = vld [vmem:[#allocation2 + $0x1b8] sm:$0xff]
    %v207 = vld [vmem:[#allocation2 + $0x1c0] sm:$0xff]
    %v208 = vld [vmem:[#allocation2 + $0x1c8] sm:$0xff]
    %v209 = vld [vmem:[#allocation2 + $0x1d0] sm:$0xff]
    %v210 = vld [vmem:[#allocation2 + $0x1d8] sm:$0xff]
    %v211 = vld [vmem:[#allocation2 + $0x1e0] sm:$0xff]
    %v212 = vld [vmem:[#allocation2 + $0x1e8] sm:$0xff]
    %v213 = vld [vmem:[#allocation2 + $0x1f0] sm:$0xff]
    %v214 = vld [vmem:[#allocation2 + $0x1f8] sm:$0xff]
    %v215 = vld [vmem:[#allocation3] sm:$0xff]
    %v216 = vld [vmem:[#allocation3 + $0x8] sm:$0xff]
    %v217 = vld [vmem:[#allocation3 + $0x10] sm:$0xff]
    %v218 = vld [vmem:[#allocation3 + $0x18] sm:$0xff]
    %v219 = vld [vmem:[#allocation3 + $0x20] sm:$0xff]
    %v220 = vld [vmem:[#allocation3 + $0x28] sm:$0xff]
    %v221 = vld [vmem:[#allocation3 + $0x30] sm:$0xff]
    %v222 = vld [vmem:[#allocation3 + $0x38] sm:$0xff]
    %v223 = vld [vmem:[#allocation3 + $0x40] sm:$0xff]
    %v224 = vld [vmem:[#allocation3 + $0x48] sm:$0xff]
    %v225 = vld [vmem:[#allocation3 + $0x50] sm:$0xff]
    %v226 = vld [vmem:[#allocation3 + $0x58] sm:$0xff]
    %v227 = vld [vmem:[#allocation3 + $0x60] sm:$0xff]
    %v228 = vld [vmem:[#allocation3 + $0x68] sm:$0xff]
    %v229 = vld [vmem:[#allocation3 + $0x70] sm:$0xff]
    %v230 = vld [vmem:[#allocation3 + $0x78] sm:$0xff]
    %v231 = vld [vmem:[#allocation3 + $0x80] sm:$0xff]
    %v232 = vld [vmem:[#allocation3 + $0x88] sm:$0xff]
    %v233 = vld [vmem:[#allocation3 + $0x90] sm:$0xff]
    %v234 = vld [vmem:[#allocation3 + $0x98] sm:$0xff]
    %v235 = vld [vmem:[#allocation3 + $0xa0] sm:$0xff]
    %v236 = vld [vmem:[#allocation3 + $0xa8] sm:$0xff]
    %v237 = vld [vmem:[#allocation3 + $0xb0] sm:$0xff]
    %v238 = vld [vmem:[#allocation3 + $0xb8] sm:$0xff]
    %v239 = vld [vmem:[#allocation3 + $0xc0] sm:$0xff]
    %v240 = vld [vmem:[#allocation3 + $0xc8] sm:$0xff]
    %v241 = vld [vmem:[#allocation3 + $0xd0] sm:$0xff]
    %v242 = vld [vmem:[#allocation3 + $0xd8] sm:$0xff]
    %v243 = vld [vmem:[#allocation3 + $0xe0] sm:$0xff]
    %v244 = vld [vmem:[#allocation3 + $0xe8] sm:$0xff]
    %v245 = vld [vmem:[#allocation3 + $0xf0] sm:$0xff]
    %v246 = vld [vmem:[#allocation3 + $0xf8] sm:$0xff]
    %v247 = vld [vmem:[#allocation3 + $0x100] sm:$0xff]
    %v248 = vld [vmem:[#allocation3 + $0x108] sm:$0xff]
    %v249 = vld [vmem:[#allocation3 + $0x110] sm:$0xff]
    %v250 = vld [vmem:[#allocation3 + $0x118] sm:$0xff]
    %v251 = vld [vmem:[#allocation3 + $0x120] sm:$0xff]
    %v252 = vld [vmem:[#allocation3 + $0x128] sm:$0xff]
    %v253 = vld [vmem:[#allocation3 + $0x130] sm:$0xff]
    %v254 = vld [vmem:[#allocation3 + $0x138] sm:$0xff]
    %v255 = vld [vmem:[#allocation3 + $0x140] sm:$0xff]
    %v256 = vld [vmem:[#allocation3 + $0x148] sm:$0xff]
    %v257 = vld [vmem:[#allocation3 + $0x150] sm:$0xff]
    %v258 = vld [vmem:[#allocation3 + $0x158] sm:$0xff]
    %v259 = vld [vmem:[#allocation3 + $0x160] sm:$0xff]
    %v260 = vld [vmem:[#allocation3 + $0x168] sm:$0xff]
    %v261 = vld [vmem:[#allocation3 + $0x170] sm:$0xff]
    %v262 = vld [vmem:[#allocation3 + $0x178] sm:$0xff]
    %v263 = vld [vmem:[#allocation3 + $0x180] sm:$0xff]
    %v264 = vld [vmem:[#allocation3 + $0x188] sm:$0xff]
    %v265 = vld [vmem:[#allocation3 + $0x190] sm:$0xff]
    %v266 = vld [vmem:[#allocation3 + $0x198] sm:$0xff]
    %v267 = vld [vmem:[#allocation3 + $0x1a0] sm:$0xff]
    %v268 = vld [vmem:[#allocation3 + $0x1a8] sm:$0xff]
    %v269 = vld [vmem:[#allocation3 + $0x1b0] sm:$0xff]
    %v270 = vld [vmem:[#allocation3 + $0x1b8] sm:$0xff]
    %v271 = vld [vmem:[#allocation3 + $0x1c0] sm:$0xff]
    %v272 = vld [vmem:[#allocation3 + $0x1c8] sm:$0xff]
    %v273 = vld [vmem:[#allocation3 + $0x1d0] sm:$0xff]
    %v274 = vld [vmem:[#allocation3 + $0x1d8] sm:$0xff]
    %v275 = vld [vmem:[#allocation3 + $0x1e0] sm:$0xff]
    %v276 = vld [vmem:[#allocation3 + $0x1e8] sm:$0xff]
    %v277 = vld [vmem:[#allocation3 + $0x1f0] sm:$0xff]
    %v278 = vld [vmem:[#allocation3 + $0x1f8] sm:$0xff]
    %v279 = vld [vmem:[#allocation6] sm:$0xff]
    %v280 = vld [vmem:[#allocation6 + $0x8] sm:$0xff]
    %v281 = vld [vmem:[#allocation6 + $0x10] sm:$0xff]
    %v282 = vld [vmem:[#allocation6 + $0x18] sm:$0xff]
    %v283 = vld [vmem:[#allocation6 + $0x20] sm:$0xff]
    %v284 = vld [vmem:[#allocation6 + $0x28] sm:$0xff]
    %v285 = vld [vmem:[#allocation6 + $0x30] sm:$0xff]
    %v286 = vld [vmem:[#allocation6 + $0x38] sm:$0xff]
    %v287 = vld [vmem:[#allocation6 + $0x40] sm:$0xff]
    %v288 = vld [vmem:[#allocation6 + $0x48] sm:$0xff]
    %v289 = vld [vmem:[#allocation6 + $0x50] sm:$0xff]
    %v290 = vld [vmem:[#allocation6 + $0x58] sm:$0xff]
    %v291 = vld [vmem:[#allocation6 + $0x60] sm:$0xff]
    %v292 = vld [vmem:[#allocation6 + $0x68] sm:$0xff]
    %v293 = vld [vmem:[#allocation6 + $0x70] sm:$0xff]
    %v294 = vld [vmem:[#allocation6 + $0x78] sm:$0xff]
    %v295 = vld [vmem:[#allocation6 + $0x80] sm:$0xff]
    %v296 = vld [vmem:[#allocation6 + $0x88] sm:$0xff]
    %v297 = vld [vmem:[#allocation6 + $0x90] sm:$0xff]
    %v298 = vld [vmem:[#allocation6 + $0x98] sm:$0xff]
    %v299 = vld [vmem:[#allocation6 + $0xa0] sm:$0xff]
    %v300 = vld [vmem:[#allocation6 + $0xa8] sm:$0xff]
    %v301 = vld [vmem:[#allocation6 + $0xb0] sm:$0xff]
    %v302 = vld [vmem:[#allocation6 + $0xb8] sm:$0xff]
    %v303 = vld [vmem:[#allocation6 + $0xc0] sm:$0xff]
    %v304 = vld [vmem:[#allocation6 + $0xc8] sm:$0xff]
    %v305 = vld [vmem:[#allocation6 + $0xd0] sm:$0xff]
    %v306 = vld [vmem:[#allocation6 + $0xd8] sm:$0xff]
    %v307 = vld [vmem:[#allocation6 + $0xe0] sm:$0xff]
    %v308 = vld [vmem:[#allocation6 + $0xe8] sm:$0xff]
    %v309 = vld [vmem:[#allocation6 + $0xf0] sm:$0xff]
    %v310 = vld [vmem:[#allocation6 + $0xf8] sm:$0xff]
    %v311 = vld [vmem:[#allocation6 + $0x100] sm:$0xff]
    %v312 = vld [vmem:[#allocation6 + $0x108] sm:$0xff]
    %v313 = vld [vmem:[#allocation6 + $0x110] sm:$0xff]
    %v314 = vld [vmem:[#allocation6 + $0x118] sm:$0xff]
    %v315 = vld [vmem:[#allocation6 + $0x120] sm:$0xff]
    %v316 = vld [vmem:[#allocation6 + $0x128] sm:$0xff]
    %v317 = vld [vmem:[#allocation6 + $0x130] sm:$0xff]
    %v318 = vld [vmem:[#allocation6 + $0x138] sm:$0xff]
    %v319 = vld [vmem:[#allocation6 + $0x140] sm:$0xff]
    %v320 = vld [vmem:[#allocation6 + $0x148] sm:$0xff]
    %v321 = vld [vmem:[#allocation6 + $0x150] sm:$0xff]
    %v322 = vld [vmem:[#allocation6 + $0x158] sm:$0xff]
    %v323 = vld [vmem:[#allocation6 + $0x160] sm:$0xff]
    %v324 = vld [vmem:[#allocation6 + $0x168] sm:$0xff]
    %v325 = vld [vmem:[#allocation6 + $0x170] sm:$0xff]
    %v326 = vld [vmem:[#allocation6 + $0x178] sm:$0xff]
    %v327 = vld [vmem:[#allocation6 + $0x180] sm:$0xff]
    %v328 = vld [vmem:[#allocation6 + $0x188] sm:$0xff]
    %v329 = vld [vmem:[#allocation6 + $0x190] sm:$0xff]
    %v330 = vld [vmem:[#allocation6 + $0x198] sm:$0xff]
    %v331 = vld [vmem:[#allocation6 + $0x1a0] sm:$0xff]
    %v332 = vld [vmem:[#allocation6 + $0x1a8] sm:$0xff]
    %v333 = vld [vmem:[#allocation6 + $0x1b0] sm:$0xff]
    %v334 = vld [vmem:[#allocation6 + $0x1b8] sm:$0xff]
    %v335 = vld [vmem:[#allocation6 + $0x1c0] sm:$0xff]
    %v336 = vld [vmem:[#allocation6 + $0x1c8] sm:$0xff]
    %v337 = vld [vmem:[#allocation6 + $0x1d0] sm:$0xff]
    %v338 = vld [vmem:[#allocation6 + $0x1d8] sm:$0xff]
    %v339 = vld [vmem:[#allocation6 + $0x1e0] sm:$0xff]
    %v340 = vld [vmem:[#allocation6 + $0x1e8] sm:$0xff]
    %v341 = vld [vmem:[#allocation6 + $0x1f0] sm:$0xff]
    %v342 = vld [vmem:[#allocation6 + $0x1f8] sm:$0xff]
    %v343 = vld [vmem:[#allocation6 + $0x200] sm:$0xff]
    %v344 = vld [vmem:[#allocation6 + $0x208] sm:$0xff]
    %v345 = vld [vmem:[#allocation6 + $0x210] sm:$0xff]
    %v346 = vld [vmem:[#allocation6 + $0x218] sm:$0xff]
    %v347 = vld [vmem:[#allocation6 + $0x220] sm:$0xff]
    %v348 = vld [vmem:[#allocation6 + $0x228] sm:$0xff]
    %v349 = vld [vmem:[#allocation6 + $0x230] sm:$0xff]
    %v350 = vld [vmem:[#allocation6 + $0x238] sm:$0xff]
    %v351 = vld [vmem:[#allocation6 + $0x240] sm:$0xff]
    %v352 = vld [vmem:[#allocation6 + $0x248] sm:$0xff]
    %v353 = vld [vmem:[#allocation6 + $0x250] sm:$0xff]
    %v354 = vld [vmem:[#allocation6 + $0x258] sm:$0xff]
    %v355 = vld [vmem:[#allocation6 + $0x260] sm:$0xff]
    %v356 = vld [vmem:[#allocation6 + $0x268] sm:$0xff]
    %v357 = vld [vmem:[#allocation6 + $0x270] sm:$0xff]
    %v358 = vld [vmem:[#allocation6 + $0x278] sm:$0xff]
    %v359 = vld [vmem:[#allocation6 + $0x280] sm:$0xff]
    %v360 = vld [vmem:[#allocation6 + $0x288] sm:$0xff]
    %v361 = vld [vmem:[#allocation6 + $0x290] sm:$0xff]
    %v362 = vld [vmem:[#allocation6 + $0x298] sm:$0xff]
    %v363 = vld [vmem:[#allocation6 + $0x2a0] sm:$0xff]
    %v364 = vld [vmem:[#allocation6 + $0x2a8] sm:$0xff]
    %v365 = vld [vmem:[#allocation6 + $0x2b0] sm:$0xff]
    %v366 = vld [vmem:[#allocation6 + $0x2b8] sm:$0xff]
    %v367 = vld [vmem:[#allocation6 + $0x2c0] sm:$0xff]
    %v368 = vld [vmem:[#allocation6 + $0x2c8] sm:$0xff]
    %v369 = vld [vmem:[#allocation6 + $0x2d0] sm:$0xff]
    %v370 = vld [vmem:[#allocation6 + $0x2d8] sm:$0xff]
    %v371 = vld [vmem:[#allocation6 + $0x2e0] sm:$0xff]
    %v372 = vld [vmem:[#allocation6 + $0x2e8] sm:$0xff]
    %v373 = vld [vmem:[#allocation6 + $0x2f0] sm:$0xff]
    %v374 = vld [vmem:[#allocation6 + $0x2f8] sm:$0xff]
    %v375 = vld [vmem:[#allocation6 + $0x300] sm:$0xff]
    %v376 = vld [vmem:[#allocation6 + $0x308] sm:$0xff]
    %v377 = vld [vmem:[#allocation6 + $0x310] sm:$0xff]
    %v378 = vld [vmem:[#allocation6 + $0x318] sm:$0xff]
    %v379 = vld [vmem:[#allocation6 + $0x320] sm:$0xff]
    %v380 = vld [vmem:[#allocation6 + $0x328] sm:$0xff]
    %v381 = vld [vmem:[#allocation6 + $0x330] sm:$0xff]
    %v382 = vld [vmem:[#allocation6 + $0x338] sm:$0xff]
    %v383 = vld [vmem:[#allocation6 + $0x340] sm:$0xff]
    %v384 = vld [vmem:[#allocation6 + $0x348] sm:$0xff]
    %v385 = vld [vmem:[#allocation6 + $0x350] sm:$0xff]
    %v386 = vld [vmem:[#allocation6 + $0x358] sm:$0xff]
    %v387 = vld [vmem:[#allocation6 + $0x360] sm:$0xff]
    %v388 = vld [vmem:[#allocation6 + $0x368] sm:$0xff]
    %v389 = vld [vmem:[#allocation6 + $0x370] sm:$0xff]
    %v390 = vld [vmem:[#allocation6 + $0x378] sm:$0xff]
    %v391 = vld [vmem:[#allocation6 + $0x380] sm:$0xff]
    %v392 = vld [vmem:[#allocation6 + $0x388] sm:$0xff]
    %v393 = vld [vmem:[#allocation6 + $0x390] sm:$0xff]
    %v394 = vld [vmem:[#allocation6 + $0x398] sm:$0xff]
    %v395 = vld [vmem:[#allocation6 + $0x3a0] sm:$0xff]
    %v396 = vld [vmem:[#allocation6 + $0x3a8] sm:$0xff]
    %v397 = vld [vmem:[#allocation6 + $0x3b0] sm:$0xff]
    %v398 = vld [vmem:[#allocation6 + $0x3b8] sm:$0xff]
    %v399 = vld [vmem:[#allocation6 + $0x3c0] sm:$0xff]
    %v400 = vld [vmem:[#allocation6 + $0x3c8] sm:$0xff]
    %v401 = vld [vmem:[#allocation6 + $0x3d0] sm:$0xff]
    %v402 = vld [vmem:[#allocation6 + $0x3d8] sm:$0xff]
    %v403 = vld [vmem:[#allocation6 + $0x3e0] sm:$0xff]
    %v404 = vld [vmem:[#allocation6 + $0x3e8] sm:$0xff]
    %v405 = vld [vmem:[#allocation6 + $0x3f0] sm:$0xff]
    %v406 = vld [vmem:[#allocation6 + $0x3f8] sm:$0xff]
    %v407 = vld [vmem:[#allocation6 + $0x400] sm:$0xff]
    %v408 = vld [vmem:[#allocation6 + $0x408] sm:$0xff]
    %v409 = vld [vmem:[#allocation6 + $0x410] sm:$0xff]
    %v410 = vld [vmem:[#allocation6 + $0x418] sm:$0xff]
    %v411 = vld [vmem:[#allocation6 + $0x420] sm:$0xff]
    %v412 = vld [vmem:[#allocation6 + $0x428] sm:$0xff]
    %v413 = vld [vmem:[#allocation6 + $0x430] sm:$0xff]
    %v414 = vld [vmem:[#allocation6 + $0x438] sm:$0xff]
    %v415 = vld [vmem:[#allocation6 + $0x440] sm:$0xff]
    %v416 = vld [vmem:[#allocation6 + $0x448] sm:$0xff]
    %v417 = vld [vmem:[#allocation6 + $0x450] sm:$0xff]
    %v418 = vld [vmem:[#allocation6 + $0x458] sm:$0xff]
    %v419 = vld [vmem:[#allocation6 + $0x460] sm:$0xff]
    %v420 = vld [vmem:[#allocation6 + $0x468] sm:$0xff]
    %v421 = vld [vmem:[#allocation6 + $0x470] sm:$0xff]
    %v422 = vld [vmem:[#allocation6 + $0x478] sm:$0xff]
    %v423 = vld [vmem:[#allocation6 + $0x480] sm:$0xff]
    %v424 = vld [vmem:[#allocation6 + $0x488] sm:$0xff]
    %v425 = vld [vmem:[#allocation6 + $0x490] sm:$0xff]
    %v426 = vld [vmem:[#allocation6 + $0x498] sm:$0xff]
    %v427 = vld [vmem:[#allocation6 + $0x4a0] sm:$0xff]
    %v428 = vld [vmem:[#allocation6 + $0x4a8] sm:$0xff]
    %v429 = vld [vmem:[#allocation6 + $0x4b0] sm:$0xff]
    %v430 = vld [vmem:[#allocation6 + $0x4b8] sm:$0xff]
    %v431 = vld [vmem:[#allocation6 + $0x4c0] sm:$0xff]
    %v432 = vld [vmem:[#allocation6 + $0x4c8] sm:$0xff]
    %v433 = vld [vmem:[#allocation6 + $0x4d0] sm:$0xff]
    %v434 = vld [vmem:[#allocation6 + $0x4d8] sm:$0xff]
    %v435 = vld [vmem:[#allocation6 + $0x4e0] sm:$0xff]
    %v436 = vld [vmem:[#allocation6 + $0x4e8] sm:$0xff]
    %v437 = vld [vmem:[#allocation6 + $0x4f0] sm:$0xff]
    %v438 = vld [vmem:[#allocation6 + $0x4f8] sm:$0xff]
    %v439 = vld [vmem:[#allocation6 + $0x500] sm:$0xff]
    %v440 = vld [vmem:[#allocation6 + $0x508] sm:$0xff]
    %v441 = vld [vmem:[#allocation6 + $0x510] sm:$0xff]
    %v442 = vld [vmem:[#allocation6 + $0x518] sm:$0xff]
    %v443 = vld [vmem:[#allocation6 + $0x520] sm:$0xff]
    %v444 = vld [vmem:[#allocation6 + $0x528] sm:$0xff]
    %v445 = vld [vmem:[#allocation6 + $0x530] sm:$0xff]
    %v446 = vld [vmem:[#allocation6 + $0x538] sm:$0xff]
    %v447 = vld [vmem:[#allocation6 + $0x540] sm:$0xff]
    %v448 = vld [vmem:[#allocation6 + $0x548] sm:$0xff]
    %v449 = vld [vmem:[#allocation6 + $0x550] sm:$0xff]
    %v450 = vld [vmem:[#allocation6 + $0x558] sm:$0xff]
    %v451 = vld [vmem:[#allocation6 + $0x560] sm:$0xff]
    %v452 = vld [vmem:[#allocation6 + $0x568] sm:$0xff]
    %v453 = vld [vmem:[#allocation6 + $0x570] sm:$0xff]
    %v454 = vld [vmem:[#allocation6 + $0x578] sm:$0xff]
    %v455 = vld [vmem:[#allocation6 + $0x580] sm:$0xff]
    %v456 = vld [vmem:[#allocation6 + $0x588] sm:$0xff]
    %v457 = vld [vmem:[#allocation6 + $0x590] sm:$0xff]
    %v458 = vld [vmem:[#allocation6 + $0x598] sm:$0xff]
    %v459 = vld [vmem:[#allocation6 + $0x5a0] sm:$0xff]
    %v460 = vld [vmem:[#allocation6 + $0x5a8] sm:$0xff]
    %v461 = vld [vmem:[#allocation6 + $0x5b0] sm:$0xff]
    %v462 = vld [vmem:[#allocation6 + $0x5b8] sm:$0xff]
    %v463 = vld [vmem:[#allocation6 + $0x5c0] sm:$0xff]
    %v464 = vld [vmem:[#allocation6 + $0x5c8] sm:$0xff]
    %v465 = vld [vmem:[#allocation6 + $0x5d0] sm:$0xff]
    %v466 = vld [vmem:[#allocation6 + $0x5d8] sm:$0xff]
    %v467 = vld [vmem:[#allocation6 + $0x5e0] sm:$0xff]
    %v468 = vld [vmem:[#allocation6 + $0x5e8] sm:$0xff]
    %v469 = vld [vmem:[#allocation6 + $0x5f0] sm:$0xff]
    %v470 = vld [vmem:[#allocation6 + $0x5f8] sm:$0xff]
    %v471 = vld [vmem:[#allocation6 + $0x600] sm:$0xff]
    %v472 = vld [vmem:[#allocation6 + $0x608] sm:$0xff]
    %v473 = vld [vmem:[#allocation6 + $0x610] sm:$0xff]
    %v474 = vld [vmem:[#allocation6 + $0x618] sm:$0xff]
    %v475 = vld [vmem:[#allocation6 + $0x620] sm:$0xff]
    %v476 = vld [vmem:[#allocation6 + $0x628] sm:$0xff]
    %v477 = vld [vmem:[#allocation6 + $0x630] sm:$0xff]
    %v478 = vld [vmem:[#allocation6 + $0x638] sm:$0xff]
    %v479 = vld [vmem:[#allocation6 + $0x640] sm:$0xff]
    %v480 = vld [vmem:[#allocation6 + $0x648] sm:$0xff]
    %v481 = vld [vmem:[#allocation6 + $0x650] sm:$0xff]
    %v482 = vld [vmem:[#allocation6 + $0x658] sm:$0xff]
    %v483 = vld [vmem:[#allocation6 + $0x660] sm:$0xff]
    %v484 = vld [vmem:[#allocation6 + $0x668] sm:$0xff]
    %v485 = vld [vmem:[#allocation6 + $0x670] sm:$0xff]
    %v486 = vld [vmem:[#allocation6 + $0x678] sm:$0xff]
    %v487 = vld [vmem:[#allocation6 + $0x680] sm:$0xff]
    %v488 = vld [vmem:[#allocation6 + $0x688] sm:$0xff]
    %v489 = vld [vmem:[#allocation6 + $0x690] sm:$0xff]
    %v490 = vld [vmem:[#allocation6 + $0x698] sm:$0xff]
    %v491 = vld [vmem:[#allocation6 + $0x6a0] sm:$0xff]
    %v492 = vld [vmem:[#allocation6 + $0x6a8] sm:$0xff]
    %v493 = vld [vmem:[#allocation6 + $0x6b0] sm:$0xff]
    %v494 = vld [vmem:[#allocation6 + $0x6b8] sm:$0xff]
    %v495 = vld [vmem:[#allocation6 + $0x6c0] sm:$0xff]
    %v496 = vld [vmem:[#allocation6 + $0x6c8] sm:$0xff]
    %v497 = vld [vmem:[#allocation6 + $0x6d0] sm:$0xff]
    %v498 = vld [vmem:[#allocation6 + $0x6d8] sm:$0xff]
    %v499 = vld [vmem:[#allocation6 + $0x6e0] sm:$0xff]
    %v500 = vld [vmem:[#allocation6 + $0x6e8] sm:$0xff]
    %v501 = vld [vmem:[#allocation6 + $0x6f0] sm:$0xff]
    %v502 = vld [vmem:[#allocation6 + $0x6f8] sm:$0xff]
    %v503 = vld [vmem:[#allocation6 + $0x700] sm:$0xff]
    %v504 = vld [vmem:[#allocation6 + $0x708] sm:$0xff]
    %v505 = vld [vmem:[#allocation6 + $0x710] sm:$0xff]
    %v506 = vld [vmem:[#allocation6 + $0x718] sm:$0xff]
    %v507 = vld [vmem:[#allocation6 + $0x720] sm:$0xff]
    %v508 = vld [vmem:[#allocation6 + $0x728] sm:$0xff]
    %v509 = vld [vmem:[#allocation6 + $0x730] sm:$0xff]
    %v510 = vld [vmem:[#allocation6 + $0x738] sm:$0xff]
    %v511 = vld [vmem:[#allocation6 + $0x740] sm:$0xff]
    %v512 = vld [vmem:[#allocation6 + $0x748] sm:$0xff]
    %v513 = vld [vmem:[#allocation6 + $0x750] sm:$0xff]
    %v514 = vld [vmem:[#allocation6 + $0x758] sm:$0xff]
    %v515 = vld [vmem:[#allocation6 + $0x760] sm:$0xff]
    %v516 = vld [vmem:[#allocation6 + $0x768] sm:$0xff]
    %v517 = vld [vmem:[#allocation6 + $0x770] sm:$0xff]
    %v518 = vld [vmem:[#allocation6 + $0x778] sm:$0xff]
    %v519 = vld [vmem:[#allocation6 + $0x780] sm:$0xff]
    %v520 = vld [vmem:[#allocation6 + $0x788] sm:$0xff]
    %v521 = vld [vmem:[#allocation6 + $0x790] sm:$0xff]
    %v522 = vld [vmem:[#allocation6 + $0x798] sm:$0xff]
    %v523 = vld [vmem:[#allocation6 + $0x7a0] sm:$0xff]
    %v524 = vld [vmem:[#allocation6 + $0x7a8] sm:$0xff]
    %v525 = vld [vmem:[#allocation6 + $0x7b0] sm:$0xff]
    %v526 = vld [vmem:[#allocation6 + $0x7b8] sm:$0xff]
    %v527 = vld [vmem:[#allocation6 + $0x7c0] sm:$0xff]
    %v528 = vld [vmem:[#allocation6 + $0x7c8] sm:$0xff]
    %v529 = vld [vmem:[#allocation6 + $0x7d0] sm:$0xff]
    %v530 = vld [vmem:[#allocation6 + $0x7d8] sm:$0xff]
    %v531 = vld [vmem:[#allocation6 + $0x7e0] sm:$0xff]
    %v532 = vld [vmem:[#allocation6 + $0x7e8] sm:$0xff]
    %v533 = vld [vmem:[#allocation6 + $0x7f0] sm:$0xff]
    %v534 = vld [vmem:[#allocation6 + $0x7f8] sm:$0xff]
    %v599 = vunpack.c.l.b16 %v215
    %v600 = vunpack.c.h.b16 %v215
    %v601 = vunpack.c.l.b16 %v216
    %v602 = vunpack.c.h.b16 %v216
    %v603 = vunpack.c.l.b16 %v217
    %v604 = vunpack.c.h.b16 %v217
    %v605 = vunpack.c.l.b16 %v218
    %v606 = vunpack.c.h.b16 %v218
    %v607 = vunpack.c.l.b16 %v219
    %v608 = vunpack.c.h.b16 %v219
    %v609 = vunpack.c.l.b16 %v220
    %v610 = vunpack.c.h.b16 %v220
    %v611 = vunpack.c.l.b16 %v221
    %v612 = vunpack.c.h.b16 %v221
    %v613 = vunpack.c.l.b16 %v222
    %v614 = vunpack.c.h.b16 %v222
    %v615 = vunpack.c.l.b16 %v223
    %v616 = vunpack.c.h.b16 %v223
    %v617 = vunpack.c.l.b16 %v224
    %v618 = vunpack.c.h.b16 %v224
    %v619 = vunpack.c.l.b16 %v225
    %v620 = vunpack.c.h.b16 %v225
    %v621 = vunpack.c.l.b16 %v226
    %v622 = vunpack.c.h.b16 %v226
    %v623 = vunpack.c.l.b16 %v227
    %v624 = vunpack.c.h.b16 %v227
    %v625 = vunpack.c.l.b16 %v228
    %v626 = vunpack.c.h.b16 %v228
    %v627 = vunpack.c.l.b16 %v229
    %v628 = vunpack.c.h.b16 %v229
    %v629 = vunpack.c.l.b16 %v230
    %v630 = vunpack.c.h.b16 %v230
    %v631 = vunpack.c.l.b16 %v231
    %v632 = vunpack.c.h.b16 %v231
    %v633 = vunpack.c.l.b16 %v232
    %v634 = vunpack.c.h.b16 %v232
    %v635 = vunpack.c.l.b16 %v233
    %v636 = vunpack.c.h.b16 %v233
    %v637 = vunpack.c.l.b16 %v234
    %v638 = vunpack.c.h.b16 %v234
    %v639 = vunpack.c.l.b16 %v235
    %v640 = vunpack.c.h.b16 %v235
    %v641 = vunpack.c.l.b16 %v236
    %v642 = vunpack.c.h.b16 %v236
    %v643 = vunpack.c.l.b16 %v237
    %v644 = vunpack.c.h.b16 %v237
    %v645 = vunpack.c.l.b16 %v238
    %v646 = vunpack.c.h.b16 %v238
    %v647 = vunpack.c.l.b16 %v239
    %v648 = vunpack.c.h.b16 %v239
    %v649 = vunpack.c.l.b16 %v240
    %v650 = vunpack.c.h.b16 %v240
    %v651 = vunpack.c.l.b16 %v241
    %v652 = vunpack.c.h.b16 %v241
    %v653 = vunpack.c.l.b16 %v242
    %v654 = vunpack.c.h.b16 %v242
    %v655 = vunpack.c.l.b16 %v243
    %v656 = vunpack.c.h.b16 %v243
    %v657 = vunpack.c.l.b16 %v244
    %v658 = vunpack.c.h.b16 %v244
    %v659 = vunpack.c.l.b16 %v245
    %v660 = vunpack.c.h.b16 %v245
    %v661 = vunpack.c.l.b16 %v246
    %v662 = vunpack.c.h.b16 %v246
    %v663 = vunpack.c.l.b16 %v247
    %v664 = vunpack.c.h.b16 %v247
    %v665 = vunpack.c.l.b16 %v248
    %v666 = vunpack.c.h.b16 %v248
    %v667 = vunpack.c.l.b16 %v249
    %v668 = vunpack.c.h.b16 %v249
    %v669 = vunpack.c.l.b16 %v250
    %v670 = vunpack.c.h.b16 %v250
    %v671 = vunpack.c.l.b16 %v251
    %v672 = vunpack.c.h.b16 %v251
    %v673 = vunpack.c.l.b16 %v252
    %v674 = vunpack.c.h.b16 %v252
    %v675 = vunpack.c.l.b16 %v253
    %v676 = vunpack.c.h.b16 %v253
    %v677 = vunpack.c.l.b16 %v254
    %v678 = vunpack.c.h.b16 %v254
    %v679 = vunpack.c.l.b16 %v255
    %v680 = vunpack.c.h.b16 %v255
    %v681 = vunpack.c.l.b16 %v256
    %v682 = vunpack.c.h.b16 %v256
    %v683 = vunpack.c.l.b16 %v257
    %v684 = vunpack.c.h.b16 %v257
    %v685 = vunpack.c.l.b16 %v258
    %v686 = vunpack.c.h.b16 %v258
    %v687 = vunpack.c.l.b16 %v259
    %v688 = vunpack.c.h.b16 %v259
    %v689 = vunpack.c.l.b16 %v260
    %v690 = vunpack.c.h.b16 %v260
    %v691 = vunpack.c.l.b16 %v261
    %v692 = vunpack.c.h.b16 %v261
    %v693 = vunpack.c.l.b16 %v262
    %v694 = vunpack.c.h.b16 %v262
    %v695 = vunpack.c.l.b16 %v263
    %v696 = vunpack.c.h.b16 %v263
    %v697 = vunpack.c.l.b16 %v264
    %v698 = vunpack.c.h.b16 %v264
    %v699 = vunpack.c.l.b16 %v265
    %v700 = vunpack.c.h.b16 %v265
    %v701 = vunpack.c.l.b16 %v266
    %v702 = vunpack.c.h.b16 %v266
    %v703 = vunpack.c.l.b16 %v267
    %v704 = vunpack.c.h.b16 %v267
    %v705 = vunpack.c.l.b16 %v268
    %v706 = vunpack.c.h.b16 %v268
    %v707 = vunpack.c.l.b16 %v269
    %v708 = vunpack.c.h.b16 %v269
    %v709 = vunpack.c.l.b16 %v270
    %v710 = vunpack.c.h.b16 %v270
    %v711 = vunpack.c.l.b16 %v271
    %v712 = vunpack.c.h.b16 %v271
    %v713 = vunpack.c.l.b16 %v272
    %v714 = vunpack.c.h.b16 %v272
    %v715 = vunpack.c.l.b16 %v273
    %v716 = vunpack.c.h.b16 %v273
    %v717 = vunpack.c.l.b16 %v274
    %v718 = vunpack.c.h.b16 %v274
    %v719 = vunpack.c.l.b16 %v275
    %v720 = vunpack.c.h.b16 %v275
    %v721 = vunpack.c.l.b16 %v276
    %v722 = vunpack.c.h.b16 %v276
    %v723 = vunpack.c.l.b16 %v277
    %v724 = vunpack.c.h.b16 %v277
    %v725 = vunpack.c.l.b16 %v278
    %v726 = vunpack.c.h.b16 %v278
    %v727 = vpack.c.b16 %v607, %v599
    %v728 = vpack.c.b16 %v608, %v600
    %v729 = vpack.c.b16 %v609, %v601
    %v730 = vpack.c.b16 %v610, %v602
    %v731 = vpack.c.b16 %v611, %v603
    %v732 = vpack.c.b16 %v612, %v604
    %v733 = vpack.c.b16 %v613, %v605
    %v734 = vpack.c.b16 %v614, %v606
    %v735 = vpack.c.b16 %v623, %v615
    %v736 = vpack.c.b16 %v624, %v616
    %v737 = vpack.c.b16 %v625, %v617
    %v738 = vpack.c.b16 %v626, %v618
    %v739 = vpack.c.b16 %v627, %v619
    %v740 = vpack.c.b16 %v628, %v620
    %v741 = vpack.c.b16 %v629, %v621
    %v742 = vpack.c.b16 %v630, %v622
    %v743 = vpack.c.b16 %v639, %v631
    %v744 = vpack.c.b16 %v640, %v632
    %v745 = vpack.c.b16 %v641, %v633
    %v746 = vpack.c.b16 %v642, %v634
    %v747 = vpack.c.b16 %v643, %v635
    %v748 = vpack.c.b16 %v644, %v636
    %v749 = vpack.c.b16 %v645, %v637
    %v750 = vpack.c.b16 %v646, %v638
    %v751 = vpack.c.b16 %v655, %v647
    %v752 = vpack.c.b16 %v656, %v648
    %v753 = vpack.c.b16 %v657, %v649
    %v754 = vpack.c.b16 %v658, %v650
    %v755 = vpack.c.b16 %v659, %v651
    %v756 = vpack.c.b16 %v660, %v652
    %v757 = vpack.c.b16 %v661, %v653
    %v758 = vpack.c.b16 %v662, %v654
    %v759 = vpack.c.b16 %v671, %v663
    %v760 = vpack.c.b16 %v672, %v664
    %v761 = vpack.c.b16 %v673, %v665
    %v762 = vpack.c.b16 %v674, %v666
    %v763 = vpack.c.b16 %v675, %v667
    %v764 = vpack.c.b16 %v676, %v668
    %v765 = vpack.c.b16 %v677, %v669
    %v766 = vpack.c.b16 %v678, %v670
    %v767 = vpack.c.b16 %v687, %v679
    %v768 = vpack.c.b16 %v688, %v680
    %v769 = vpack.c.b16 %v689, %v681
    %v770 = vpack.c.b16 %v690, %v682
    %v771 = vpack.c.b16 %v691, %v683
    %v772 = vpack.c.b16 %v692, %v684
    %v773 = vpack.c.b16 %v693, %v685
    %v774 = vpack.c.b16 %v694, %v686
    %v775 = vpack.c.b16 %v703, %v695
    %v776 = vpack.c.b16 %v704, %v696
    %v777 = vpack.c.b16 %v705, %v697
    %v778 = vpack.c.b16 %v706, %v698
    %v779 = vpack.c.b16 %v707, %v699
    %v780 = vpack.c.b16 %v708, %v700
    %v781 = vpack.c.b16 %v709, %v701
    %v782 = vpack.c.b16 %v710, %v702
    %v783 = vpack.c.b16 %v719, %v711
    %v784 = vpack.c.b16 %v720, %v712
    %v785 = vpack.c.b16 %v721, %v713
    %v786 = vpack.c.b16 %v722, %v714
    %v787 = vpack.c.b16 %v723, %v715
    %v788 = vpack.c.b16 %v724, %v716
    %v789 = vpack.c.b16 %v725, %v717
    %v790 = vpack.c.b16 %v726, %v718
    %v1111 = vunpack.c.l.b16 %v279
    %v1112 = vunpack.c.h.b16 %v279
    %v1113 = vunpack.c.l.b16 %v280
    %v1114 = vunpack.c.h.b16 %v280
    %v1115 = vunpack.c.l.b16 %v281
    %v1116 = vunpack.c.h.b16 %v281
    %v1117 = vunpack.c.l.b16 %v282
    %v1118 = vunpack.c.h.b16 %v282
    %v1119 = vunpack.c.l.b16 %v283
    %v1120 = vunpack.c.h.b16 %v283
    %v1121 = vunpack.c.l.b16 %v284
    %v1122 = vunpack.c.h.b16 %v284
    %v1123 = vunpack.c.l.b16 %v285
    %v1124 = vunpack.c.h.b16 %v285
    %v1125 = vunpack.c.l.b16 %v286
    %v1126 = vunpack.c.h.b16 %v286
    %v1127 = vunpack.c.l.b16 %v287
    %v1128 = vunpack.c.h.b16 %v287
    %v1129 = vunpack.c.l.b16 %v288
    %v1130 = vunpack.c.h.b16 %v288
    %v1131 = vunpack.c.l.b16 %v289
    %v1132 = vunpack.c.h.b16 %v289
    %v1133 = vunpack.c.l.b16 %v290
    %v1134 = vunpack.c.h.b16 %v290
    %v1135 = vunpack.c.l.b16 %v291
    %v1136 = vunpack.c.h.b16 %v291
    %v1137 = vunpack.c.l.b16 %v292
    %v1138 = vunpack.c.h.b16 %v292
    %v1139 = vunpack.c.l.b16 %v293
    %v1140 = vunpack.c.h.b16 %v293
    %v1141 = vunpack.c.l.b16 %v294
    %v1142 = vunpack.c.h.b16 %v294
    %v1143 = vunpack.c.l.b16 %v295
    %v1144 = vunpack.c.h.b16 %v295
    %v1145 = vunpack.c.l.b16 %v296
    %v1146 = vunpack.c.h.b16 %v296
    %v1147 = vunpack.c.l.b16 %v297
    %v1148 = vunpack.c.h.b16 %v297
    %v1149 = vunpack.c.l.b16 %v298
    %v1150 = vunpack.c.h.b16 %v298
    %v1151 = vunpack.c.l.b16 %v299
    %v1152 = vunpack.c.h.b16 %v299
    %v1153 = vunpack.c.l.b16 %v300
    %v1154 = vunpack.c.h.b16 %v300
    %v1155 = vunpack.c.l.b16 %v301
    %v1156 = vunpack.c.h.b16 %v301
    %v1157 = vunpack.c.l.b16 %v302
    %v1158 = vunpack.c.h.b16 %v302
    %v1159 = vunpack.c.l.b16 %v303
    %v1160 = vunpack.c.h.b16 %v303
    %v1161 = vunpack.c.l.b16 %v304
    %v1162 = vunpack.c.h.b16 %v304
    %v1163 = vunpack.c.l.b16 %v305
    %v1164 = vunpack.c.h.b16 %v305
    %v1165 = vunpack.c.l.b16 %v306
    %v1166 = vunpack.c.h.b16 %v306
    %v1167 = vunpack.c.l.b16 %v307
    %v1168 = vunpack.c.h.b16 %v307
    %v1169 = vunpack.c.l.b16 %v308
    %v1170 = vunpack.c.h.b16 %v308
    %v1171 = vunpack.c.l.b16 %v309
    %v1172 = vunpack.c.h.b16 %v309
    %v1173 = vunpack.c.l.b16 %v310
    %v1174 = vunpack.c.h.b16 %v310
    %v1175 = vunpack.c.l.b16 %v311
    %v1176 = vunpack.c.h.b16 %v311
    %v1177 = vunpack.c.l.b16 %v312
    %v1178 = vunpack.c.h.b16 %v312
    %v1179 = vunpack.c.l.b16 %v313
    %v1180 = vunpack.c.h.b16 %v313
    %v1181 = vunpack.c.l.b16 %v314
    %v1182 = vunpack.c.h.b16 %v314
    %v1183 = vunpack.c.l.b16 %v315
    %v1184 = vunpack.c.h.b16 %v315
    %v1185 = vunpack.c.l.b16 %v316
    %v1186 = vunpack.c.h.b16 %v316
    %v1187 = vunpack.c.l.b16 %v317
    %v1188 = vunpack.c.h.b16 %v317
    %v1189 = vunpack.c.l.b16 %v318
    %v1190 = vunpack.c.h.b16 %v318
    %v1191 = vunpack.c.l.b16 %v319
    %v1192 = vunpack.c.h.b16 %v319
    %v1193 = vunpack.c.l.b16 %v320
    %v1194 = vunpack.c.h.b16 %v320
    %v1195 = vunpack.c.l.b16 %v321
    %v1196 = vunpack.c.h.b16 %v321
    %v1197 = vunpack.c.l.b16 %v322
    %v1198 = vunpack.c.h.b16 %v322
    %v1199 = vunpack.c.l.b16 %v323
    %v1200 = vunpack.c.h.b16 %v323
    %v1201 = vunpack.c.l.b16 %v324
    %v1202 = vunpack.c.h.b16 %v324
    %v1203 = vunpack.c.l.b16 %v325
    %v1204 = vunpack.c.h.b16 %v325
    %v1205 = vunpack.c.l.b16 %v326
    %v1206 = vunpack.c.h.b16 %v326
    %v1207 = vunpack.c.l.b16 %v327
    %v1208 = vunpack.c.h.b16 %v327
    %v1209 = vunpack.c.l.b16 %v328
    %v1210 = vunpack.c.h.b16 %v328
    %v1211 = vunpack.c.l.b16 %v329
    %v1212 = vunpack.c.h.b16 %v329
    %v1213 = vunpack.c.l.b16 %v330
    %v1214 = vunpack.c.h.b16 %v330
    %v1215 = vunpack.c.l.b16 %v331
    %v1216 = vunpack.c.h.b16 %v331
    %v1217 = vunpack.c.l.b16 %v332
    %v1218 = vunpack.c.h.b16 %v332
    %v1219 = vunpack.c.l.b16 %v333
    %v1220 = vunpack.c.h.b16 %v333
    %v1221 = vunpack.c.l.b16 %v334
    %v1222 = vunpack.c.h.b16 %v334
    %v1223 = vunpack.c.l.b16 %v335
    %v1224 = vunpack.c.h.b16 %v335
    %v1225 = vunpack.c.l.b16 %v336
    %v1226 = vunpack.c.h.b16 %v336
    %v1227 = vunpack.c.l.b16 %v337
    %v1228 = vunpack.c.h.b16 %v337
    %v1229 = vunpack.c.l.b16 %v338
    %v1230 = vunpack.c.h.b16 %v338
    %v1231 = vunpack.c.l.b16 %v339
    %v1232 = vunpack.c.h.b16 %v339
    %v1233 = vunpack.c.l.b16 %v340
    %v1234 = vunpack.c.h.b16 %v340
    %v1235 = vunpack.c.l.b16 %v341
    %v1236 = vunpack.c.h.b16 %v341
    %v1237 = vunpack.c.l.b16 %v342
    %v1238 = vunpack.c.h.b16 %v342
    %v1239 = vunpack.c.l.b16 %v343
    %v1240 = vunpack.c.h.b16 %v343
    %v1241 = vunpack.c.l.b16 %v344
    %v1242 = vunpack.c.h.b16 %v344
    %v1243 = vunpack.c.l.b16 %v345
    %v1244 = vunpack.c.h.b16 %v345
    %v1245 = vunpack.c.l.b16 %v346
    %v1246 = vunpack.c.h.b16 %v346
    %v1247 = vunpack.c.l.b16 %v347
    %v1248 = vunpack.c.h.b16 %v347
    %v1249 = vunpack.c.l.b16 %v348
    %v1250 = vunpack.c.h.b16 %v348
    %v1251 = vunpack.c.l.b16 %v349
    %v1252 = vunpack.c.h.b16 %v349
    %v1253 = vunpack.c.l.b16 %v350
    %v1254 = vunpack.c.h.b16 %v350
    %v1255 = vunpack.c.l.b16 %v351
    %v1256 = vunpack.c.h.b16 %v351
    %v1257 = vunpack.c.l.b16 %v352
    %v1258 = vunpack.c.h.b16 %v352
    %v1259 = vunpack.c.l.b16 %v353
    %v1260 = vunpack.c.h.b16 %v353
    %v1261 = vunpack.c.l.b16 %v354
    %v1262 = vunpack.c.h.b16 %v354
    %v1263 = vunpack.c.l.b16 %v355
    %v1264 = vunpack.c.h.b16 %v355
    %v1265 = vunpack.c.l.b16 %v356
    %v1266 = vunpack.c.h.b16 %v356
    %v1267 = vunpack.c.l.b16 %v357
    %v1268 = vunpack.c.h.b16 %v357
    %v1269 = vunpack.c.l.b16 %v358
    %v1270 = vunpack.c.h.b16 %v358
    %v1271 = vunpack.c.l.b16 %v359
    %v1272 = vunpack.c.h.b16 %v359
    %v1273 = vunpack.c.l.b16 %v360
    %v1274 = vunpack.c.h.b16 %v360
    %v1275 = vunpack.c.l.b16 %v361
    %v1276 = vunpack.c.h.b16 %v361
    %v1277 = vunpack.c.l.b16 %v362
    %v1278 = vunpack.c.h.b16 %v362
    %v1279 = vunpack.c.l.b16 %v363
    %v1280 = vunpack.c.h.b16 %v363
    %v1281 = vunpack.c.l.b16 %v364
    %v1282 = vunpack.c.h.b16 %v364
    %v1283 = vunpack.c.l.b16 %v365
    %v1284 = vunpack.c.h.b16 %v365
    %v1285 = vunpack.c.l.b16 %v366
    %v1286 = vunpack.c.h.b16 %v366
    %v1287 = vunpack.c.l.b16 %v367
    %v1288 = vunpack.c.h.b16 %v367
    %v1289 = vunpack.c.l.b16 %v368
    %v1290 = vunpack.c.h.b16 %v368
    %v1291 = vunpack.c.l.b16 %v369
    %v1292 = vunpack.c.h.b16 %v369
    %v1293 = vunpack.c.l.b16 %v370
    %v1294 = vunpack.c.h.b16 %v370
    %v1295 = vunpack.c.l.b16 %v371
    %v1296 = vunpack.c.h.b16 %v371
    %v1297 = vunpack.c.l.b16 %v372
    %v1298 = vunpack.c.h.b16 %v372
    %v1299 = vunpack.c.l.b16 %v373
    %v1300 = vunpack.c.h.b16 %v373
    %v1301 = vunpack.c.l.b16 %v374
    %v1302 = vunpack.c.h.b16 %v374
    %v1303 = vunpack.c.l.b16 %v375
    %v1304 = vunpack.c.h.b16 %v375
    %v1305 = vunpack.c.l.b16 %v376
    %v1306 = vunpack.c.h.b16 %v376
    %v1307 = vunpack.c.l.b16 %v377
    %v1308 = vunpack.c.h.b16 %v377
    %v1309 = vunpack.c.l.b16 %v378
    %v1310 = vunpack.c.h.b16 %v378
    %v1311 = vunpack.c.l.b16 %v379
    %v1312 = vunpack.c.h.b16 %v379
    %v1313 = vunpack.c.l.b16 %v380
    %v1314 = vunpack.c.h.b16 %v380
    %v1315 = vunpack.c.l.b16 %v381
    %v1316 = vunpack.c.h.b16 %v381
    %v1317 = vunpack.c.l.b16 %v382
    %v1318 = vunpack.c.h.b16 %v382
    %v1319 = vunpack.c.l.b16 %v383
    %v1320 = vunpack.c.h.b16 %v383
    %v1321 = vunpack.c.l.b16 %v384
    %v1322 = vunpack.c.h.b16 %v384
    %v1323 = vunpack.c.l.b16 %v385
    %v1324 = vunpack.c.h.b16 %v385
    %v1325 = vunpack.c.l.b16 %v386
    %v1326 = vunpack.c.h.b16 %v386
    %v1327 = vunpack.c.l.b16 %v387
    %v1328 = vunpack.c.h.b16 %v387
    %v1329 = vunpack.c.l.b16 %v388
    %v1330 = vunpack.c.h.b16 %v388
    %v1331 = vunpack.c.l.b16 %v389
    %v1332 = vunpack.c.h.b16 %v389
    %v1333 = vunpack.c.l.b16 %v390
    %v1334 = vunpack.c.h.b16 %v390
    %v1335 = vunpack.c.l.b16 %v391
    %v1336 = vunpack.c.h.b16 %v391
    %v1337 = vunpack.c.l.b16 %v392
    %v1338 = vunpack.c.h.b16 %v392
    %v1339 = vunpack.c.l.b16 %v393
    %v1340 = vunpack.c.h.b16 %v393
    %v1341 = vunpack.c.l.b16 %v394
    %v1342 = vunpack.c.h.b16 %v394
    %v1343 = vunpack.c.l.b16 %v395
    %v1344 = vunpack.c.h.b16 %v395
    %v1345 = vunpack.c.l.b16 %v396
    %v1346 = vunpack.c.h.b16 %v396
    %v1347 = vunpack.c.l.b16 %v397
    %v1348 = vunpack.c.h.b16 %v397
    %v1349 = vunpack.c.l.b16 %v398
    %v1350 = vunpack.c.h.b16 %v398
    %v1351 = vunpack.c.l.b16 %v399
    %v1352 = vunpack.c.h.b16 %v399
    %v1353 = vunpack.c.l.b16 %v400
    %v1354 = vunpack.c.h.b16 %v400
    %v1355 = vunpack.c.l.b16 %v401
    %v1356 = vunpack.c.h.b16 %v401
    %v1357 = vunpack.c.l.b16 %v402
    %v1358 = vunpack.c.h.b16 %v402
    %v1359 = vunpack.c.l.b16 %v403
    %v1360 = vunpack.c.h.b16 %v403
    %v1361 = vunpack.c.l.b16 %v404
    %v1362 = vunpack.c.h.b16 %v404
    %v1363 = vunpack.c.l.b16 %v405
    %v1364 = vunpack.c.h.b16 %v405
    %v1365 = vunpack.c.l.b16 %v406
    %v1366 = vunpack.c.h.b16 %v406
    %v1367 = vunpack.c.l.b16 %v407
    %v1368 = vunpack.c.h.b16 %v407
    %v1369 = vunpack.c.l.b16 %v408
    %v1370 = vunpack.c.h.b16 %v408
    %v1371 = vunpack.c.l.b16 %v409
    %v1372 = vunpack.c.h.b16 %v409
    %v1373 = vunpack.c.l.b16 %v410
    %v1374 = vunpack.c.h.b16 %v410
    %v1375 = vunpack.c.l.b16 %v411
    %v1376 = vunpack.c.h.b16 %v411
    %v1377 = vunpack.c.l.b16 %v412
    %v1378 = vunpack.c.h.b16 %v412
    %v1379 = vunpack.c.l.b16 %v413
    %v1380 = vunpack.c.h.b16 %v413
    %v1381 = vunpack.c.l.b16 %v414
    %v1382 = vunpack.c.h.b16 %v414
    %v1383 = vunpack.c.l.b16 %v415
    %v1384 = vunpack.c.h.b16 %v415
    %v1385 = vunpack.c.l.b16 %v416
    %v1386 = vunpack.c.h.b16 %v416
    %v1387 = vunpack.c.l.b16 %v417
    %v1388 = vunpack.c.h.b16 %v417
    %v1389 = vunpack.c.l.b16 %v418
    %v1390 = vunpack.c.h.b16 %v418
    %v1391 = vunpack.c.l.b16 %v419
    %v1392 = vunpack.c.h.b16 %v419
    %v1393 = vunpack.c.l.b16 %v420
    %v1394 = vunpack.c.h.b16 %v420
    %v1395 = vunpack.c.l.b16 %v421
    %v1396 = vunpack.c.h.b16 %v421
    %v1397 = vunpack.c.l.b16 %v422
    %v1398 = vunpack.c.h.b16 %v422
    %v1399 = vunpack.c.l.b16 %v423
    %v1400 = vunpack.c.h.b16 %v423
    %v1401 = vunpack.c.l.b16 %v424
    %v1402 = vunpack.c.h.b16 %v424
    %v1403 = vunpack.c.l.b16 %v425
    %v1404 = vunpack.c.h.b16 %v425
    %v1405 = vunpack.c.l.b16 %v426
    %v1406 = vunpack.c.h.b16 %v426
    %v1407 = vunpack.c.l.b16 %v427
    %v1408 = vunpack.c.h.b16 %v427
    %v1409 = vunpack.c.l.b16 %v428
    %v1410 = vunpack.c.h.b16 %v428
    %v1411 = vunpack.c.l.b16 %v429
    %v1412 = vunpack.c.h.b16 %v429
    %v1413 = vunpack.c.l.b16 %v430
    %v1414 = vunpack.c.h.b16 %v430
    %v1415 = vunpack.c.l.b16 %v431
    %v1416 = vunpack.c.h.b16 %v431
    %v1417 = vunpack.c.l.b16 %v432
    %v1418 = vunpack.c.h.b16 %v432
    %v1419 = vunpack.c.l.b16 %v433
    %v1420 = vunpack.c.h.b16 %v433
    %v1421 = vunpack.c.l.b16 %v434
    %v1422 = vunpack.c.h.b16 %v434
    %v1423 = vunpack.c.l.b16 %v435
    %v1424 = vunpack.c.h.b16 %v435
    %v1425 = vunpack.c.l.b16 %v436
    %v1426 = vunpack.c.h.b16 %v436
    %v1427 = vunpack.c.l.b16 %v437
    %v1428 = vunpack.c.h.b16 %v437
    %v1429 = vunpack.c.l.b16 %v438
    %v1430 = vunpack.c.h.b16 %v438
    %v1431 = vunpack.c.l.b16 %v439
    %v1432 = vunpack.c.h.b16 %v439
    %v1433 = vunpack.c.l.b16 %v440
    %v1434 = vunpack.c.h.b16 %v440
    %v1435 = vunpack.c.l.b16 %v441
    %v1436 = vunpack.c.h.b16 %v441
    %v1437 = vunpack.c.l.b16 %v442
    %v1438 = vunpack.c.h.b16 %v442
    %v1439 = vunpack.c.l.b16 %v443
    %v1440 = vunpack.c.h.b16 %v443
    %v1441 = vunpack.c.l.b16 %v444
    %v1442 = vunpack.c.h.b16 %v444
    %v1443 = vunpack.c.l.b16 %v445
    %v1444 = vunpack.c.h.b16 %v445
    %v1445 = vunpack.c.l.b16 %v446
    %v1446 = vunpack.c.h.b16 %v446
    %v1447 = vunpack.c.l.b16 %v447
    %v1448 = vunpack.c.h.b16 %v447
    %v1449 = vunpack.c.l.b16 %v448
    %v1450 = vunpack.c.h.b16 %v448
    %v1451 = vunpack.c.l.b16 %v449
    %v1452 = vunpack.c.h.b16 %v449
    %v1453 = vunpack.c.l.b16 %v450
    %v1454 = vunpack.c.h.b16 %v450
    %v1455 = vunpack.c.l.b16 %v451
    %v1456 = vunpack.c.h.b16 %v451
    %v1457 = vunpack.c.l.b16 %v452
    %v1458 = vunpack.c.h.b16 %v452
    %v1459 = vunpack.c.l.b16 %v453
    %v1460 = vunpack.c.h.b16 %v453
    %v1461 = vunpack.c.l.b16 %v454
    %v1462 = vunpack.c.h.b16 %v454
    %v1463 = vunpack.c.l.b16 %v455
    %v1464 = vunpack.c.h.b16 %v455
    %v1465 = vunpack.c.l.b16 %v456
    %v1466 = vunpack.c.h.b16 %v456
    %v1467 = vunpack.c.l.b16 %v457
    %v1468 = vunpack.c.h.b16 %v457
    %v1469 = vunpack.c.l.b16 %v458
    %v1470 = vunpack.c.h.b16 %v458
    %v1471 = vunpack.c.l.b16 %v459
    %v1472 = vunpack.c.h.b16 %v459
    %v1473 = vunpack.c.l.b16 %v460
    %v1474 = vunpack.c.h.b16 %v460
    %v1475 = vunpack.c.l.b16 %v461
    %v1476 = vunpack.c.h.b16 %v461
    %v1477 = vunpack.c.l.b16 %v462
    %v1478 = vunpack.c.h.b16 %v462
    %v1479 = vunpack.c.l.b16 %v463
    %v1480 = vunpack.c.h.b16 %v463
    %v1481 = vunpack.c.l.b16 %v464
    %v1482 = vunpack.c.h.b16 %v464
    %v1483 = vunpack.c.l.b16 %v465
    %v1484 = vunpack.c.h.b16 %v465
    %v1485 = vunpack.c.l.b16 %v466
    %v1486 = vunpack.c.h.b16 %v466
    %v1487 = vunpack.c.l.b16 %v467
    %v1488 = vunpack.c.h.b16 %v467
    %v1489 = vunpack.c.l.b16 %v468
    %v1490 = vunpack.c.h.b16 %v468
    %v1491 = vunpack.c.l.b16 %v469
    %v1492 = vunpack.c.h.b16 %v469
    %v1493 = vunpack.c.l.b16 %v470
    %v1494 = vunpack.c.h.b16 %v470
    %v1495 = vunpack.c.l.b16 %v471
    %v1496 = vunpack.c.h.b16 %v471
    %v1497 = vunpack.c.l.b16 %v472
    %v1498 = vunpack.c.h.b16 %v472
    %v1499 = vunpack.c.l.b16 %v473
    %v1500 = vunpack.c.h.b16 %v473
    %v1501 = vunpack.c.l.b16 %v474
    %v1502 = vunpack.c.h.b16 %v474
    %v1503 = vunpack.c.l.b16 %v475
    %v1504 = vunpack.c.h.b16 %v475
    %v1505 = vunpack.c.l.b16 %v476
    %v1506 = vunpack.c.h.b16 %v476
    %v1507 = vunpack.c.l.b16 %v477
    %v1508 = vunpack.c.h.b16 %v477
    %v1509 = vunpack.c.l.b16 %v478
    %v1510 = vunpack.c.h.b16 %v478
    %v1511 = vunpack.c.l.b16 %v479
    %v1512 = vunpack.c.h.b16 %v479
    %v1513 = vunpack.c.l.b16 %v480
    %v1514 = vunpack.c.h.b16 %v480
    %v1515 = vunpack.c.l.b16 %v481
    %v1516 = vunpack.c.h.b16 %v481
    %v1517 = vunpack.c.l.b16 %v482
    %v1518 = vunpack.c.h.b16 %v482
    %v1519 = vunpack.c.l.b16 %v483
    %v1520 = vunpack.c.h.b16 %v483
    %v1521 = vunpack.c.l.b16 %v484
    %v1522 = vunpack.c.h.b16 %v484
    %v1523 = vunpack.c.l.b16 %v485
    %v1524 = vunpack.c.h.b16 %v485
    %v1525 = vunpack.c.l.b16 %v486
    %v1526 = vunpack.c.h.b16 %v486
    %v1527 = vunpack.c.l.b16 %v487
    %v1528 = vunpack.c.h.b16 %v487
    %v1529 = vunpack.c.l.b16 %v488
    %v1530 = vunpack.c.h.b16 %v488
    %v1531 = vunpack.c.l.b16 %v489
    %v1532 = vunpack.c.h.b16 %v489
    %v1533 = vunpack.c.l.b16 %v490
    %v1534 = vunpack.c.h.b16 %v490
    %v1535 = vunpack.c.l.b16 %v491
    %v1536 = vunpack.c.h.b16 %v491
    %v1537 = vunpack.c.l.b16 %v492
    %v1538 = vunpack.c.h.b16 %v492
    %v1539 = vunpack.c.l.b16 %v493
    %v1540 = vunpack.c.h.b16 %v493
    %v1541 = vunpack.c.l.b16 %v494
    %v1542 = vunpack.c.h.b16 %v494
    %v1543 = vunpack.c.l.b16 %v495
    %v1544 = vunpack.c.h.b16 %v495
    %v1545 = vunpack.c.l.b16 %v496
    %v1546 = vunpack.c.h.b16 %v496
    %v1547 = vunpack.c.l.b16 %v497
    %v1548 = vunpack.c.h.b16 %v497
    %v1549 = vunpack.c.l.b16 %v498
    %v1550 = vunpack.c.h.b16 %v498
    %v1551 = vunpack.c.l.b16 %v499
    %v1552 = vunpack.c.h.b16 %v499
    %v1553 = vunpack.c.l.b16 %v500
    %v1554 = vunpack.c.h.b16 %v500
    %v1555 = vunpack.c.l.b16 %v501
    %v1556 = vunpack.c.h.b16 %v501
    %v1557 = vunpack.c.l.b16 %v502
    %v1558 = vunpack.c.h.b16 %v502
    %v1559 = vunpack.c.l.b16 %v503
    %v1560 = vunpack.c.h.b16 %v503
    %v1561 = vunpack.c.l.b16 %v504
    %v1562 = vunpack.c.h.b16 %v504
    %v1563 = vunpack.c.l.b16 %v505
    %v1564 = vunpack.c.h.b16 %v505
    %v1565 = vunpack.c.l.b16 %v506
    %v1566 = vunpack.c.h.b16 %v506
    %v1567 = vunpack.c.l.b16 %v507
    %v1568 = vunpack.c.h.b16 %v507
    %v1569 = vunpack.c.l.b16 %v508
    %v1570 = vunpack.c.h.b16 %v508
    %v1571 = vunpack.c.l.b16 %v509
    %v1572 = vunpack.c.h.b16 %v509
    %v1573 = vunpack.c.l.b16 %v510
    %v1574 = vunpack.c.h.b16 %v510
    %v1575 = vunpack.c.l.b16 %v511
    %v1576 = vunpack.c.h.b16 %v511
    %v1577 = vunpack.c.l.b16 %v512
    %v1578 = vunpack.c.h.b16 %v512
    %v1579 = vunpack.c.l.b16 %v513
    %v1580 = vunpack.c.h.b16 %v513
    %v1581 = vunpack.c.l.b16 %v514
    %v1582 = vunpack.c.h.b16 %v514
    %v1583 = vunpack.c.l.b16 %v515
    %v1584 = vunpack.c.h.b16 %v515
    %v1585 = vunpack.c.l.b16 %v516
    %v1586 = vunpack.c.h.b16 %v516
    %v1587 = vunpack.c.l.b16 %v517
    %v1588 = vunpack.c.h.b16 %v517
    %v1589 = vunpack.c.l.b16 %v518
    %v1590 = vunpack.c.h.b16 %v518
    %v1591 = vunpack.c.l.b16 %v519
    %v1592 = vunpack.c.h.b16 %v519
    %v1593 = vunpack.c.l.b16 %v520
    %v1594 = vunpack.c.h.b16 %v520
    %v1595 = vunpack.c.l.b16 %v521
    %v1596 = vunpack.c.h.b16 %v521
    %v1597 = vunpack.c.l.b16 %v522
    %v1598 = vunpack.c.h.b16 %v522
    %v1599 = vunpack.c.l.b16 %v523
    %v1600 = vunpack.c.h.b16 %v523
    %v1601 = vunpack.c.l.b16 %v524
    %v1602 = vunpack.c.h.b16 %v524
    %v1603 = vunpack.c.l.b16 %v525
    %v1604 = vunpack.c.h.b16 %v525
    %v1605 = vunpack.c.l.b16 %v526
    %v1606 = vunpack.c.h.b16 %v526
    %v1607 = vunpack.c.l.b16 %v527
    %v1608 = vunpack.c.h.b16 %v527
    %v1609 = vunpack.c.l.b16 %v528
    %v1610 = vunpack.c.h.b16 %v528
    %v1611 = vunpack.c.l.b16 %v529
    %v1612 = vunpack.c.h.b16 %v529
    %v1613 = vunpack.c.l.b16 %v530
    %v1614 = vunpack.c.h.b16 %v530
    %v1615 = vunpack.c.l.b16 %v531
    %v1616 = vunpack.c.h.b16 %v531
    %v1617 = vunpack.c.l.b16 %v532
    %v1618 = vunpack.c.h.b16 %v532
    %v1619 = vunpack.c.l.b16 %v533
    %v1620 = vunpack.c.h.b16 %v533
    %v1621 = vunpack.c.l.b16 %v534
    %v1622 = vunpack.c.h.b16 %v534
    %v1623 = vpack.c.b16 %v1115, %v1111
    %v1624 = vpack.c.b16 %v1116, %v1112
    %v1625 = vpack.c.b16 %v1117, %v1113
    %v1626 = vpack.c.b16 %v1118, %v1114
    %v1627 = vpack.c.b16 %v1123, %v1119
    %v1628 = vpack.c.b16 %v1124, %v1120
    %v1629 = vpack.c.b16 %v1125, %v1121
    %v1630 = vpack.c.b16 %v1126, %v1122
    %v1631 = vpack.c.b16 %v1131, %v1127
    %v1632 = vpack.c.b16 %v1132, %v1128
    %v1633 = vpack.c.b16 %v1133, %v1129
    %v1634 = vpack.c.b16 %v1134, %v1130
    %v1635 = vpack.c.b16 %v1139, %v1135
    %v1636 = vpack.c.b16 %v1140, %v1136
    %v1637 = vpack.c.b16 %v1141, %v1137
    %v1638 = vpack.c.b16 %v1142, %v1138
    %v1639 = vpack.c.b16 %v1147, %v1143
    %v1640 = vpack.c.b16 %v1148, %v1144
    %v1641 = vpack.c.b16 %v1149, %v1145
    %v1642 = vpack.c.b16 %v1150, %v1146
    %v1643 = vpack.c.b16 %v1155, %v1151
    %v1644 = vpack.c.b16 %v1156, %v1152
    %v1645 = vpack.c.b16 %v1157, %v1153
    %v1646 = vpack.c.b16 %v1158, %v1154
    %v1647 = vpack.c.b16 %v1163, %v1159
    %v1648 = vpack.c.b16 %v1164, %v1160
    %v1649 = vpack.c.b16 %v1165, %v1161
    %v1650 = vpack.c.b16 %v1166, %v1162
    %v1651 = vpack.c.b16 %v1171, %v1167
    %v1652 = vpack.c.b16 %v1172, %v1168
    %v1653 = vpack.c.b16 %v1173, %v1169
    %v1654 = vpack.c.b16 %v1174, %v1170
    %v1655 = vpack.c.b16 %v1179, %v1175
    %v1656 = vpack.c.b16 %v1180, %v1176
    %v1657 = vpack.c.b16 %v1181, %v1177
    %v1658 = vpack.c.b16 %v1182, %v1178
    %v1659 = vpack.c.b16 %v1187, %v1183
    %v1660 = vpack.c.b16 %v1188, %v1184
    %v1661 = vpack.c.b16 %v1189, %v1185
    %v1662 = vpack.c.b16 %v1190, %v1186
    %v1663 = vpack.c.b16 %v1195, %v1191
    %v1664 = vpack.c.b16 %v1196, %v1192
    %v1665 = vpack.c.b16 %v1197, %v1193
    %v1666 = vpack.c.b16 %v1198, %v1194
    %v1667 = vpack.c.b16 %v1203, %v1199
    %v1668 = vpack.c.b16 %v1204, %v1200
    %v1669 = vpack.c.b16 %v1205, %v1201
    %v1670 = vpack.c.b16 %v1206, %v1202
    %v1671 = vpack.c.b16 %v1211, %v1207
    %v1672 = vpack.c.b16 %v1212, %v1208
    %v1673 = vpack.c.b16 %v1213, %v1209
    %v1674 = vpack.c.b16 %v1214, %v1210
    %v1675 = vpack.c.b16 %v1219, %v1215
    %v1676 = vpack.c.b16 %v1220, %v1216
    %v1677 = vpack.c.b16 %v1221, %v1217
    %v1678 = vpack.c.b16 %v1222, %v1218
    %v1679 = vpack.c.b16 %v1227, %v1223
    %v1680 = vpack.c.b16 %v1228, %v1224
    %v1681 = vpack.c.b16 %v1229, %v1225
    %v1682 = vpack.c.b16 %v1230, %v1226
    %v1683 = vpack.c.b16 %v1235, %v1231
    %v1684 = vpack.c.b16 %v1236, %v1232
    %v1685 = vpack.c.b16 %v1237, %v1233
    %v1686 = vpack.c.b16 %v1238, %v1234
    %v1687 = vpack.c.b16 %v1243, %v1239
    %v1688 = vpack.c.b16 %v1244, %v1240
    %v1689 = vpack.c.b16 %v1245, %v1241
    %v1690 = vpack.c.b16 %v1246, %v1242
    %v1691 = vpack.c.b16 %v1251, %v1247
    %v1692 = vpack.c.b16 %v1252, %v1248
    %v1693 = vpack.c.b16 %v1253, %v1249
    %v1694 = vpack.c.b16 %v1254, %v1250
    %v1695 = vpack.c.b16 %v1259, %v1255
    %v1696 = vpack.c.b16 %v1260, %v1256
    %v1697 = vpack.c.b16 %v1261, %v1257
    %v1698 = vpack.c.b16 %v1262, %v1258
    %v1699 = vpack.c.b16 %v1267, %v1263
    %v1700 = vpack.c.b16 %v1268, %v1264
    %v1701 = vpack.c.b16 %v1269, %v1265
    %v1702 = vpack.c.b16 %v1270, %v1266
    %v1703 = vpack.c.b16 %v1275, %v1271
    %v1704 = vpack.c.b16 %v1276, %v1272
    %v1705 = vpack.c.b16 %v1277, %v1273
    %v1706 = vpack.c.b16 %v1278, %v1274
    %v1707 = vpack.c.b16 %v1283, %v1279
    %v1708 = vpack.c.b16 %v1284, %v1280
    %v1709 = vpack.c.b16 %v1285, %v1281
    %v1710 = vpack.c.b16 %v1286, %v1282
    %v1711 = vpack.c.b16 %v1291, %v1287
    %v1712 = vpack.c.b16 %v1292, %v1288
    %v1713 = vpack.c.b16 %v1293, %v1289
    %v1714 = vpack.c.b16 %v1294, %v1290
    %v1715 = vpack.c.b16 %v1299, %v1295
    %v1716 = vpack.c.b16 %v1300, %v1296
    %v1717 = vpack.c.b16 %v1301, %v1297
    %v1718 = vpack.c.b16 %v1302, %v1298
    %v1719 = vpack.c.b16 %v1307, %v1303
    %v1720 = vpack.c.b16 %v1308, %v1304
    %v1721 = vpack.c.b16 %v1309, %v1305
    %v1722 = vpack.c.b16 %v1310, %v1306
    %v1723 = vpack.c.b16 %v1315, %v1311
    %v1724 = vpack.c.b16 %v1316, %v1312
    %v1725 = vpack.c.b16 %v1317, %v1313
    %v1726 = vpack.c.b16 %v1318, %v1314
    %v1727 = vpack.c.b16 %v1323, %v1319
    %v1728 = vpack.c.b16 %v1324, %v1320
    %v1729 = vpack.c.b16 %v1325, %v1321
    %v1730 = vpack.c.b16 %v1326, %v1322
    %v1731 = vpack.c.b16 %v1331, %v1327
    %v1732 = vpack.c.b16 %v1332, %v1328
    %v1733 = vpack.c.b16 %v1333, %v1329
    %v1734 = vpack.c.b16 %v1334, %v1330
    %v1735 = vpack.c.b16 %v1339, %v1335
    %v1736 = vpack.c.b16 %v1340, %v1336
    %v1737 = vpack.c.b16 %v1341, %v1337
    %v1738 = vpack.c.b16 %v1342, %v1338
    %v1739 = vpack.c.b16 %v1347, %v1343
    %v1740 = vpack.c.b16 %v1348, %v1344
    %v1741 = vpack.c.b16 %v1349, %v1345
    %v1742 = vpack.c.b16 %v1350, %v1346
    %v1743 = vpack.c.b16 %v1355, %v1351
    %v1744 = vpack.c.b16 %v1356, %v1352
    %v1745 = vpack.c.b16 %v1357, %v1353
    %v1746 = vpack.c.b16 %v1358, %v1354
    %v1747 = vpack.c.b16 %v1363, %v1359
    %v1748 = vpack.c.b16 %v1364, %v1360
    %v1749 = vpack.c.b16 %v1365, %v1361
    %v1750 = vpack.c.b16 %v1366, %v1362
    %v1751 = vpack.c.b16 %v1371, %v1367
    %v1752 = vpack.c.b16 %v1372, %v1368
    %v1753 = vpack.c.b16 %v1373, %v1369
    %v1754 = vpack.c.b16 %v1374, %v1370
    %v1755 = vpack.c.b16 %v1379, %v1375
    %v1756 = vpack.c.b16 %v1380, %v1376
    %v1757 = vpack.c.b16 %v1381, %v1377
    %v1758 = vpack.c.b16 %v1382, %v1378
    %v1759 = vpack.c.b16 %v1387, %v1383
    %v1760 = vpack.c.b16 %v1388, %v1384
    %v1761 = vpack.c.b16 %v1389, %v1385
    %v1762 = vpack.c.b16 %v1390, %v1386
    %v1763 = vpack.c.b16 %v1395, %v1391
    %v1764 = vpack.c.b16 %v1396, %v1392
    %v1765 = vpack.c.b16 %v1397, %v1393
    %v1766 = vpack.c.b16 %v1398, %v1394
    %v1767 = vpack.c.b16 %v1403, %v1399
    %v1768 = vpack.c.b16 %v1404, %v1400
    %v1769 = vpack.c.b16 %v1405, %v1401
    %v1770 = vpack.c.b16 %v1406, %v1402
    %v1771 = vpack.c.b16 %v1411, %v1407
    %v1772 = vpack.c.b16 %v1412, %v1408
    %v1773 = vpack.c.b16 %v1413, %v1409
    %v1774 = vpack.c.b16 %v1414, %v1410
    %v1775 = vpack.c.b16 %v1419, %v1415
    %v1776 = vpack.c.b16 %v1420, %v1416
    %v1777 = vpack.c.b16 %v1421, %v1417
    %v1778 = vpack.c.b16 %v1422, %v1418
    %v1779 = vpack.c.b16 %v1427, %v1423
    %v1780 = vpack.c.b16 %v1428, %v1424
    %v1781 = vpack.c.b16 %v1429, %v1425
    %v1782 = vpack.c.b16 %v1430, %v1426
    %v1783 = vpack.c.b16 %v1435, %v1431
    %v1784 = vpack.c.b16 %v1436, %v1432
    %v1785 = vpack.c.b16 %v1437, %v1433
    %v1786 = vpack.c.b16 %v1438, %v1434
    %v1787 = vpack.c.b16 %v1443, %v1439
    %v1788 = vpack.c.b16 %v1444, %v1440
    %v1789 = vpack.c.b16 %v1445, %v1441
    %v1790 = vpack.c.b16 %v1446, %v1442
    %v1791 = vpack.c.b16 %v1451, %v1447
    %v1792 = vpack.c.b16 %v1452, %v1448
    %v1793 = vpack.c.b16 %v1453, %v1449
    %v1794 = vpack.c.b16 %v1454, %v1450
    %v1795 = vpack.c.b16 %v1459, %v1455
    %v1796 = vpack.c.b16 %v1460, %v1456
    %v1797 = vpack.c.b16 %v1461, %v1457
    %v1798 = vpack.c.b16 %v1462, %v1458
    %v1799 = vpack.c.b16 %v1467, %v1463
    %v1800 = vpack.c.b16 %v1468, %v1464
    %v1801 = vpack.c.b16 %v1469, %v1465
    %v1802 = vpack.c.b16 %v1470, %v1466
    %v1803 = vpack.c.b16 %v1475, %v1471
    %v1804 = vpack.c.b16 %v1476, %v1472
    %v1805 = vpack.c.b16 %v1477, %v1473
    %v1806 = vpack.c.b16 %v1478, %v1474
    %v1807 = vpack.c.b16 %v1483, %v1479
    %v1808 = vpack.c.b16 %v1484, %v1480
    %v1809 = vpack.c.b16 %v1485, %v1481
    %v1810 = vpack.c.b16 %v1486, %v1482
    %v1811 = vpack.c.b16 %v1491, %v1487
    %v1812 = vpack.c.b16 %v1492, %v1488
    %v1813 = vpack.c.b16 %v1493, %v1489
    %v1814 = vpack.c.b16 %v1494, %v1490
    %v1815 = vpack.c.b16 %v1499, %v1495
    %v1816 = vpack.c.b16 %v1500, %v1496
    %v1817 = vpack.c.b16 %v1501, %v1497
    %v1818 = vpack.c.b16 %v1502, %v1498
    %v1819 = vpack.c.b16 %v1507, %v1503
    %v1820 = vpack.c.b16 %v1508, %v1504
    %v1821 = vpack.c.b16 %v1509, %v1505
    %v1822 = vpack.c.b16 %v1510, %v1506
    %v1823 = vpack.c.b16 %v1515, %v1511
    %v1824 = vpack.c.b16 %v1516, %v1512
    %v1825 = vpack.c.b16 %v1517, %v1513
    %v1826 = vpack.c.b16 %v1518, %v1514
    %v1827 = vpack.c.b16 %v1523, %v1519
    %v1828 = vpack.c.b16 %v1524, %v1520
    %v1829 = vpack.c.b16 %v1525, %v1521
    %v1830 = vpack.c.b16 %v1526, %v1522
    %v1831 = vpack.c.b16 %v1531, %v1527
    %v1832 = vpack.c.b16 %v1532, %v1528
    %v1833 = vpack.c.b16 %v1533, %v1529
    %v1834 = vpack.c.b16 %v1534, %v1530
    %v1835 = vpack.c.b16 %v1539, %v1535
    %v1836 = vpack.c.b16 %v1540, %v1536
    %v1837 = vpack.c.b16 %v1541, %v1537
    %v1838 = vpack.c.b16 %v1542, %v1538
    %v1839 = vpack.c.b16 %v1547, %v1543
    %v1840 = vpack.c.b16 %v1548, %v1544
    %v1841 = vpack.c.b16 %v1549, %v1545
    %v1842 = vpack.c.b16 %v1550, %v1546
    %v1843 = vpack.c.b16 %v1555, %v1551
    %v1844 = vpack.c.b16 %v1556, %v1552
    %v1845 = vpack.c.b16 %v1557, %v1553
    %v1846 = vpack.c.b16 %v1558, %v1554
    %v1847 = vpack.c.b16 %v1563, %v1559
    %v1848 = vpack.c.b16 %v1564, %v1560
    %v1849 = vpack.c.b16 %v1565, %v1561
    %v1850 = vpack.c.b16 %v1566, %v1562
    %v1851 = vpack.c.b16 %v1571, %v1567
    %v1852 = vpack.c.b16 %v1572, %v1568
    %v1853 = vpack.c.b16 %v1573, %v1569
    %v1854 = vpack.c.b16 %v1574, %v1570
    %v1855 = vpack.c.b16 %v1579, %v1575
    %v1856 = vpack.c.b16 %v1580, %v1576
    %v1857 = vpack.c.b16 %v1581, %v1577
    %v1858 = vpack.c.b16 %v1582, %v1578
    %v1859 = vpack.c.b16 %v1587, %v1583
    %v1860 = vpack.c.b16 %v1588, %v1584
    %v1861 = vpack.c.b16 %v1589, %v1585
    %v1862 = vpack.c.b16 %v1590, %v1586
    %v1863 = vpack.c.b16 %v1595, %v1591
    %v1864 = vpack.c.b16 %v1596, %v1592
    %v1865 = vpack.c.b16 %v1597, %v1593
    %v1866 = vpack.c.b16 %v1598, %v1594
    %v1867 = vpack.c.b16 %v1603, %v1599
    %v1868 = vpack.c.b16 %v1604, %v1600
    %v1869 = vpack.c.b16 %v1605, %v1601
    %v1870 = vpack.c.b16 %v1606, %v1602
    %v1871 = vpack.c.b16 %v1611, %v1607
    %v1872 = vpack.c.b16 %v1612, %v1608
    %v1873 = vpack.c.b16 %v1613, %v1609
    %v1874 = vpack.c.b16 %v1614, %v1610
    %v1875 = vpack.c.b16 %v1619, %v1615
    %v1876 = vpack.c.b16 %v1620, %v1616
    %v1877 = vpack.c.b16 %v1621, %v1617
    %v1878 = vpack.c.b16 %v1622, %v1618
    %2135 = vmatprep.subr.bf16.mxu0 %v1624
    %2136 = vmatpush1.bf16.msra.mxu0 %v1623
    %2137 = vmatprep.subr.bf16.mxu0 %v1628
    %2138 = vmatpush1.bf16.msra.mxu0 %v1627
    %2139 = vmatprep.subr.bf16.mxu0 %v1632
    %2140 = vmatpush1.bf16.msra.mxu0 %v1631
    %2141 = vmatprep.subr.bf16.mxu0 %v1636
    %2142 = vmatpush1.bf16.msra.mxu0 %v1635
    %2143 = vmatprep.subr.bf16.mxu0 %v1640
    %2144 = vmatpush1.bf16.msra.mxu0 %v1639
    %2145 = vmatprep.subr.bf16.mxu0 %v1644
    %2146 = vmatpush1.bf16.msra.mxu0 %v1643
    %2147 = vmatprep.subr.bf16.mxu0 %v1648
    %2148 = vmatpush1.bf16.msra.mxu0 %v1647
    %2149 = vmatprep.subr.bf16.mxu0 %v1652
    %2150 = vmatpush1.bf16.msra.mxu0 %v1651
    %2151 = vmatprep.subr.bf16.mxu0 %v1656
    %2152 = vmatpush1.bf16.msra.mxu0 %v1655
    %2153 = vmatprep.subr.bf16.mxu0 %v1660
    %2154 = vmatpush1.bf16.msra.mxu0 %v1659
    %2155 = vmatprep.subr.bf16.mxu0 %v1664
    %2156 = vmatpush1.bf16.msra.mxu0 %v1663
    %2157 = vmatprep.subr.bf16.mxu0 %v1668
    %2158 = vmatpush1.bf16.msra.mxu0 %v1667
    %2159 = vmatprep.subr.bf16.mxu0 %v1672
    %2160 = vmatpush1.bf16.msra.mxu0 %v1671
    %2161 = vmatprep.subr.bf16.mxu0 %v1676
    %2162 = vmatpush1.bf16.msra.mxu0 %v1675
    %2163 = vmatprep.subr.bf16.mxu0 %v1680
    %2164 = vmatpush1.bf16.msra.mxu0 %v1679
    %2165 = vmatprep.subr.bf16.mxu0 %v1684
    %2166 = vmatpush1.bf16.msra.mxu0 %v1683
    %2167 = vmatprep.mubr.bf16.mxu0 %v728
    %2168 = vmatmul.mubr.bf16.gmra.mrb[0].mxu0 %v727
    %v2169 = vpop.f32.mrb[0].mxu0
    %v2170 = vadd.f32 0.0, %v2169
    %v2171 = vpop.f32.mrb[0].mxu0
    %v2172 = vadd.f32 0.0, %v2171
    %v2173 = vpop.f32.mrb[0].mxu0
    %v2174 = vadd.f32 0.0, %v2173
    %v2175 = vpop.f32.mrb[0].mxu0
    %v2176 = vadd.f32 0.0, %v2175
    %2177 = vmatprep.mubr.bf16.mxu0 %v736
    %2178 = vmatmul.mubr.bf16.gmra.mrb[0].mxu0 %v735
    %v2179 = vpop.f32.mrb[0].mxu0
    %v2180 = vadd.f32 0.0, %v2179
    %v2181 = vpop.f32.mrb[0].mxu0
    %v2182 = vadd.f32 0.0, %v2181
    %v2183 = vpop.f32.mrb[0].mxu0
    %v2184 = vadd.f32 0.0, %v2183
    %v2185 = vpop.f32.mrb[0].mxu0
    %v2186 = vadd.f32 0.0, %v2185
    %2187 = vmatprep.mubr.bf16.mxu0 %v744
    %2188 = vmatmul.mubr.bf16.gmra.mrb[0].mxu0 %v743
    %v2189 = vpop.f32.mrb[0].mxu0
    %v2190 = vadd.f32 0.0, %v2189
    %v2191 = vpop.f32.mrb[0].mxu0
    %v2192 = vadd.f32 0.0, %v2191
    %v2193 = vpop.f32.mrb[0].mxu0
    %v2194 = vadd.f32 0.0, %v2193
    %v2195 = vpop.f32.mrb[0].mxu0
    %v2196 = vadd.f32 0.0, %v2195
    %2197 = vmatprep.mubr.bf16.mxu0 %v752
    %2198 = vmatmul.mubr.bf16.gmra.mrb[0].mxu0 %v751
    %v2199 = vpop.f32.mrb[0].mxu0
    %v2200 = vadd.f32 0.0, %v2199
    %v2201 = vpop.f32.mrb[0].mxu0
    %v2202 = vadd.f32 0.0, %v2201
    %v2203 = vpop.f32.mrb[0].mxu0
    %v2204 = vadd.f32 0.0, %v2203
    %v2205 = vpop.f32.mrb[0].mxu0
    %v2206 = vadd.f32 0.0, %v2205
    %2207 = vmatprep.mubr.bf16.mxu0 %v760
    %2208 = vmatmul.mubr.bf16.gmra.mrb[0].mxu0 %v759
    %v2209 = vpop.f32.mrb[0].mxu0
    %v2210 = vadd.f32 0.0, %v2209
    %v2211 = vpop.f32.mrb[0].mxu0
    %v2212 = vadd.f32 0.0, %v2211
    %v2213 = vpop.f32.mrb[0].mxu0
    %v2214 = vadd.f32 0.0, %v2213
    %v2215 = vpop.f32.mrb[0].mxu0
    %v2216 = vadd.f32 0.0, %v2215
    %2217 = vmatprep.mubr.bf16.mxu0 %v768
    %2218 = vmatmul.mubr.bf16.gmra.mrb[0].mxu0 %v767
    %v2219 = vpop.f32.mrb[0].mxu0
    %v2220 = vadd.f32 0.0, %v2219
    %v2221 = vpop.f32.mrb[0].mxu0
    %v2222 = vadd.f32 0.0, %v2221
    %v2223 = vpop.f32.mrb[0].mxu0
    %v2224 = vadd.f32 0.0, %v2223
    %v2225 = vpop.f32.mrb[0].mxu0
    %v2226 = vadd.f32 0.0, %v2225
    %2227 = vmatprep.mubr.bf16.mxu0 %v776
    %2228 = vmatmul.mubr.bf16.gmra.mrb[0].mxu0 %v775
    %v2229 = vpop.f32.mrb[0].mxu0
    %v2230 = vadd.f32 0.0, %v2229
    %v2231 = vpop.f32.mrb[0].mxu0
    %v2232 = vadd.f32 0.0, %v2231
    %v2233 = vpop.f32.mrb[0].mxu0
    %v2234 = vadd.f32 0.0, %v2233
    %v2235 = vpop.f32.mrb[0].mxu0
    %v2236 = vadd.f32 0.0, %v2235
    %2237 = vmatprep.mubr.bf16.mxu0 %v784
    %2238 = vmatmul.mubr.bf16.gmra.mrb[0].mxu0 %v783
    %v2239 = vpop.f32.mrb[0].mxu0
    %v2240 = vadd.f32 0.0, %v2239
    %v2241 = vpop.f32.mrb[0].mxu0
    %v2242 = vadd.f32 0.0, %v2241
    %v2243 = vpop.f32.mrb[0].mxu0
    %v2244 = vadd.f32 0.0, %v2243
    %v2245 = vpop.f32.mrb[0].mxu0
    %v2246 = vadd.f32 0.0, %v2245
    %2247 = vdwg.mxu0
    %2248 = vmatprep.subr.bf16.mxu0 %v1688
    %2249 = vmatpush1.bf16.msra.mxu0 %v1687
    %2250 = vmatprep.subr.bf16.mxu0 %v1692
    %2251 = vmatpush1.bf16.msra.mxu0 %v1691
    %2252 = vmatprep.subr.bf16.mxu0 %v1696
    %2253 = vmatpush1.bf16.msra.mxu0 %v1695
    %2254 = vmatprep.subr.bf16.mxu0 %v1700
    %2255 = vmatpush1.bf16.msra.mxu0 %v1699
    %2256 = vmatprep.subr.bf16.mxu0 %v1704
    %2257 = vmatpush1.bf16.msra.mxu0 %v1703
    %2258 = vmatprep.subr.bf16.mxu0 %v1708
    %2259 = vmatpush1.bf16.msra.mxu0 %v1707
    %2260 = vmatprep.subr.bf16.mxu0 %v1712
    %2261 = vmatpush1.bf16.msra.mxu0 %v1711
    %2262 = vmatprep.subr.bf16.mxu0 %v1716
    %2263 = vmatpush1.bf16.msra.mxu0 %v1715
    %2264 = vmatprep.subr.bf16.mxu0 %v1720
    %2265 = vmatpush1.bf16.msra.mxu0 %v1719
    %2266 = vmatprep.subr.bf16.mxu0 %v1724
    %2267 = vmatpush1.bf16.msra.mxu0 %v1723
    %2268 = vmatprep.subr.bf16.mxu0 %v1728
    %2269 = vmatpush1.bf16.msra.mxu0 %v1727
    %2270 = vmatprep.subr.bf16.mxu0 %v1732
    %2271 = vmatpush1.bf16.msra.mxu0 %v1731
    %2272 = vmatprep.subr.bf16.mxu0 %v1736
    %2273 = vmatpush1.bf16.msra.mxu0 %v1735
    %2274 = vmatprep.subr.bf16.mxu0 %v1740
    %2275 = vmatpush1.bf16.msra.mxu0 %v1739
    %2276 = vmatprep.subr.bf16.mxu0 %v1744
    %2277 = vmatpush1.bf16.msra.mxu0 %v1743
    %2278 = vmatprep.subr.bf16.mxu0 %v1748
    %2279 = vmatpush1.bf16.msra.mxu0 %v1747
    %2280 = vmatprep.mubr.bf16.mxu0 %v730
    %2281 = vmatmul.mubr.bf16.gmra.mrb[0].mxu0 %v729
    %v2282 = vpop.f32.mrb[0].mxu0
    %v2283 = vadd.f32 %v2170, %v2282
    %v2284 = vpop.f32.mrb[0].mxu0
    %v2285 = vadd.f32 %v2172, %v2284
    %v2286 = vpop.f32.mrb[0].mxu0
    %v2287 = vadd.f32 %v2174, %v2286
    %v2288 = vpop.f32.mrb[0].mxu0
    %v2289 = vadd.f32 %v2176, %v2288
    %2290 = vmatprep.mubr.bf16.mxu0 %v738
    %2291 = vmatmul.mubr.bf16.gmra.mrb[0].mxu0 %v737
    %v2292 = vpop.f32.mrb[0].mxu0
    %v2293 = vadd.f32 %v2180, %v2292
    %v2294 = vpop.f32.mrb[0].mxu0
    %v2295 = vadd.f32 %v2182, %v2294
    %v2296 = vpop.f32.mrb[0].mxu0
    %v2297 = vadd.f32 %v2184, %v2296
    %v2298 = vpop.f32.mrb[0].mxu0
    %v2299 = vadd.f32 %v2186, %v2298
    %2300 = vmatprep.mubr.bf16.mxu0 %v746
    %2301 = vmatmul.mubr.bf16.gmra.mrb[0].mxu0 %v745
    %v2302 = vpop.f32.mrb[0].mxu0
    %v2303 = vadd.f32 %v2190, %v2302
    %v2304 = vpop.f32.mrb[0].mxu0
    %v2305 = vadd.f32 %v2192, %v2304
    %v2306 = vpop.f32.mrb[0].mxu0
    %v2307 = vadd.f32 %v2194, %v2306
    %v2308 = vpop.f32.mrb[0].mxu0
    %v2309 = vadd.f32 %v2196, %v2308
    %2310 = vmatprep.mubr.bf16.mxu0 %v754
    %2311 = vmatmul.mubr.bf16.gmra.mrb[0].mxu0 %v753
    %v2312 = vpop.f32.mrb[0].mxu0
    %v2313 = vadd.f32 %v2200, %v2312
    %v2314 = vpop.f32.mrb[0].mxu0
    %v2315 = vadd.f32 %v2202, %v2314
    %v2316 = vpop.f32.mrb[0].mxu0
    %v2317 = vadd.f32 %v2204, %v2316
    %v2318 = vpop.f32.mrb[0].mxu0
    %v2319 = vadd.f32 %v2206, %v2318
    %2320 = vmatprep.mubr.bf16.mxu0 %v762
    %2321 = vmatmul.mubr.bf16.gmra.mrb[0].mxu0 %v761
    %v2322 = vpop.f32.mrb[0].mxu0
    %v2323 = vadd.f32 %v2210, %v2322
    %v2324 = vpop.f32.mrb[0].mxu0
    %v2325 = vadd.f32 %v2212, %v2324
    %v2326 = vpop.f32.mrb[0].mxu0
    %v2327 = vadd.f32 %v2214, %v2326
    %v2328 = vpop.f32.mrb[0].mxu0
    %v2329 = vadd.f32 %v2216, %v2328
    %2330 = vmatprep.mubr.bf16.mxu0 %v770
    %2331 = vmatmul.mubr.bf16.gmra.mrb[0].mxu0 %v769
    %v2332 = vpop.f32.mrb[0].mxu0
    %v2333 = vadd.f32 %v2220, %v2332
    %v2334 = vpop.f32.mrb[0].mxu0
    %v2335 = vadd.f32 %v2222, %v2334
    %v2336 = vpop.f32.mrb[0].mxu0
    %v2337 = vadd.f32 %v2224, %v2336
    %v2338 = vpop.f32.mrb[0].mxu0
    %v2339 = vadd.f32 %v2226, %v2338
    %2340 = vmatprep.mubr.bf16.mxu0 %v778
    %2341 = vmatmul.mubr.bf16.gmra.mrb[0].mxu0 %v777
    %v2342 = vpop.f32.mrb[0].mxu0
    %v2343 = vadd.f32 %v2230, %v2342
    %v2344 = vpop.f32.mrb[0].mxu0
    %v2345 = vadd.f32 %v2232, %v2344
    %v2346 = vpop.f32.mrb[0].mxu0
    %v2347 = vadd.f32 %v2234, %v2346
    %v2348 = vpop.f32.mrb[0].mxu0
    %v2349 = vadd.f32 %v2236, %v2348
    %2350 = vmatprep.mubr.bf16.mxu0 %v786
    %2351 = vmatmul.mubr.bf16.gmra.mrb[0].mxu0 %v785
    %v2352 = vpop.f32.mrb[0].mxu0
    %v2353 = vadd.f32 %v2240, %v2352
    %v2354 = vpop.f32.mrb[0].mxu0
    %v2355 = vadd.f32 %v2242, %v2354
    %v2356 = vpop.f32.mrb[0].mxu0
    %v2357 = vadd.f32 %v2244, %v2356
    %v2358 = vpop.f32.mrb[0].mxu0
    %v2359 = vadd.f32 %v2246, %v2358
    %2360 = vdwg.mxu0
    %2361 = vmatprep.subr.bf16.mxu0 %v1752
    %2362 = vmatpush1.bf16.msra.mxu0 %v1751
    %2363 = vmatprep.subr.bf16.mxu0 %v1756
    %2364 = vmatpush1.bf16.msra.mxu0 %v1755
    %2365 = vmatprep.subr.bf16.mxu0 %v1760
    %2366 = vmatpush1.bf16.msra.mxu0 %v1759
    %2367 = vmatprep.subr.bf16.mxu0 %v1764
    %2368 = vmatpush1.bf16.msra.mxu0 %v1763
    %2369 = vmatprep.subr.bf16.mxu0 %v1768
    %2370 = vmatpush1.bf16.msra.mxu0 %v1767
    %2371 = vmatprep.subr.bf16.mxu0 %v1772
    %2372 = vmatpush1.bf16.msra.mxu0 %v1771
    %2373 = vmatprep.subr.bf16.mxu0 %v1776
    %2374 = vmatpush1.bf16.msra.mxu0 %v1775
    %2375 = vmatprep.subr.bf16.mxu0 %v1780
    %2376 = vmatpush1.bf16.msra.mxu0 %v1779
    %2377 = vmatprep.subr.bf16.mxu0 %v1784
    %2378 = vmatpush1.bf16.msra.mxu0 %v1783
    %2379 = vmatprep.subr.bf16.mxu0 %v1788
    %2380 = vmatpush1.bf16.msra.mxu0 %v1787
    %2381 = vmatprep.subr.bf16.mxu0 %v1792
    %2382 = vmatpush1.bf16.msra.mxu0 %v1791
    %2383 = vmatprep.subr.bf16.mxu0 %v1796
    %2384 = vmatpush1.bf16.msra.mxu0 %v1795
    %2385 = vmatprep.subr.bf16.mxu0 %v1800
    %2386 = vmatpush1.bf16.msra.mxu0 %v1799
    %2387 = vmatprep.subr.bf16.mxu0 %v1804
    %2388 = vmatpush1.bf16.msra.mxu0 %v1803
    %2389 = vmatprep.subr.bf16.mxu0 %v1808
    %2390 = vmatpush1.bf16.msra.mxu0 %v1807
    %2391 = vmatprep.subr.bf16.mxu0 %v1812
    %2392 = vmatpush1.bf16.msra.mxu0 %v1811
    %2393 = vmatprep.mubr.bf16.mxu0 %v732
    %2394 = vmatmul.mubr.bf16.gmra.mrb[0].mxu0 %v731
    %v2395 = vpop.f32.mrb[0].mxu0
    %v2396 = vadd.f32 %v2283, %v2395
    %v2397 = vpop.f32.mrb[0].mxu0
    %v2398 = vadd.f32 %v2285, %v2397
    %v2399 = vpop.f32.mrb[0].mxu0
    %v2400 = vadd.f32 %v2287, %v2399
    %v2401 = vpop.f32.mrb[0].mxu0
    %v2402 = vadd.f32 %v2289, %v2401
    %2403 = vmatprep.mubr.bf16.mxu0 %v740
    %2404 = vmatmul.mubr.bf16.gmra.mrb[0].mxu0 %v739
    %v2405 = vpop.f32.mrb[0].mxu0
    %v2406 = vadd.f32 %v2293, %v2405
    %v2407 = vpop.f32.mrb[0].mxu0
    %v2408 = vadd.f32 %v2295, %v2407
    %v2409 = vpop.f32.mrb[0].mxu0
    %v2410 = vadd.f32 %v2297, %v2409
    %v2411 = vpop.f32.mrb[0].mxu0
    %v2412 = vadd.f32 %v2299, %v2411
    %2413 = vmatprep.mubr.bf16.mxu0 %v748
    %2414 = vmatmul.mubr.bf16.gmra.mrb[0].mxu0 %v747
    %v2415 = vpop.f32.mrb[0].mxu0
    %v2416 = vadd.f32 %v2303, %v2415
    %v2417 = vpop.f32.mrb[0].mxu0
    %v2418 = vadd.f32 %v2305, %v2417
    %v2419 = vpop.f32.mrb[0].mxu0
    %v2420 = vadd.f32 %v2307, %v2419
    %v2421 = vpop.f32.mrb[0].mxu0
    %v2422 = vadd.f32 %v2309, %v2421
    %2423 = vmatprep.mubr.bf16.mxu0 %v756
    %2424 = vmatmul.mubr.bf16.gmra.mrb[0].mxu0 %v755
    %v2425 = vpop.f32.mrb[0].mxu0
    %v2426 = vadd.f32 %v2313, %v2425
    %v2427 = vpop.f32.mrb[0].mxu0
    %v2428 = vadd.f32 %v2315, %v2427
    %v2429 = vpop.f32.mrb[0].mxu0
    %v2430 = vadd.f32 %v2317, %v2429
    %v2431 = vpop.f32.mrb[0].mxu0
    %v2432 = vadd.f32 %v2319, %v2431
    %2433 = vmatprep.mubr.bf16.mxu0 %v764
    %2434 = vmatmul.mubr.bf16.gmra.mrb[0].mxu0 %v763
    %v2435 = vpop.f32.mrb[0].mxu0
    %v2436 = vadd.f32 %v2323, %v2435
    %v2437 = vpop.f32.mrb[0].mxu0
    %v2438 = vadd.f32 %v2325, %v2437
    %v2439 = vpop.f32.mrb[0].mxu0
    %v2440 = vadd.f32 %v2327, %v2439
    %v2441 = vpop.f32.mrb[0].mxu0
    %v2442 = vadd.f32 %v2329, %v2441
    %2443 = vmatprep.mubr.bf16.mxu0 %v772
    %2444 = vmatmul.mubr.bf16.gmra.mrb[0].mxu0 %v771
    %v2445 = vpop.f32.mrb[0].mxu0
    %v2446 = vadd.f32 %v2333, %v2445
    %v2447 = vpop.f32.mrb[0].mxu0
    %v2448 = vadd.f32 %v2335, %v2447
    %v2449 = vpop.f32.mrb[0].mxu0
    %v2450 = vadd.f32 %v2337, %v2449
    %v2451 = vpop.f32.mrb[0].mxu0
    %v2452 = vadd.f32 %v2339, %v2451
    %2453 = vmatprep.mubr.bf16.mxu0 %v780
    %2454 = vmatmul.mubr.bf16.gmra.mrb[0].mxu0 %v779
    %v2455 = vpop.f32.mrb[0].mxu0
    %v2456 = vadd.f32 %v2343, %v2455
    %v2457 = vpop.f32.mrb[0].mxu0
    %v2458 = vadd.f32 %v2345, %v2457
    %v2459 = vpop.f32.mrb[0].mxu0
    %v2460 = vadd.f32 %v2347, %v2459
    %v2461 = vpop.f32.mrb[0].mxu0
    %v2462 = vadd.f32 %v2349, %v2461
    %2463 = vmatprep.mubr.bf16.mxu0 %v788
    %2464 = vmatmul.mubr.bf16.gmra.mrb[0].mxu0 %v787
    %v2465 = vpop.f32.mrb[0].mxu0
    %v2466 = vadd.f32 %v2353, %v2465
    %v2467 = vpop.f32.mrb[0].mxu0
    %v2468 = vadd.f32 %v2355, %v2467
    %v2469 = vpop.f32.mrb[0].mxu0
    %v2470 = vadd.f32 %v2357, %v2469
    %v2471 = vpop.f32.mrb[0].mxu0
    %v2472 = vadd.f32 %v2359, %v2471
    %2473 = vdwg.mxu0
    %2474 = vmatprep.subr.bf16.mxu0 %v1816
    %2475 = vmatpush1.bf16.msra.mxu0 %v1815
    %2476 = vmatprep.subr.bf16.mxu0 %v1820
    %2477 = vmatpush1.bf16.msra.mxu0 %v1819
    %2478 = vmatprep.subr.bf16.mxu0 %v1824
    %2479 = vmatpush1.bf16.msra.mxu0 %v1823
    %2480 = vmatprep.subr.bf16.mxu0 %v1828
    %2481 = vmatpush1.bf16.msra.mxu0 %v1827
    %2482 = vmatprep.subr.bf16.mxu0 %v1832
    %2483 = vmatpush1.bf16.msra.mxu0 %v1831
    %2484 = vmatprep.subr.bf16.mxu0 %v1836
    %2485 = vmatpush1.bf16.msra.mxu0 %v1835
    %2486 = vmatprep.subr.bf16.mxu0 %v1840
    %2487 = vmatpush1.bf16.msra.mxu0 %v1839
    %2488 = vmatprep.subr.bf16.mxu0 %v1844
    %2489 = vmatpush1.bf16.msra.mxu0 %v1843
    %2490 = vmatprep.subr.bf16.mxu0 %v1848
    %2491 = vmatpush1.bf16.msra.mxu0 %v1847
    %2492 = vmatprep.subr.bf16.mxu0 %v1852
    %2493 = vmatpush1.bf16.msra.mxu0 %v1851
    %2494 = vmatprep.subr.bf16.mxu0 %v1856
    %2495 = vmatpush1.bf16.msra.mxu0 %v1855
    %2496 = vmatprep.subr.bf16.mxu0 %v1860
    %2497 = vmatpush1.bf16.msra.mxu0 %v1859
    %2498 = vmatprep.subr.bf16.mxu0 %v1864
    %2499 = vmatpush1.bf16.msra.mxu0 %v1863
    %2500 = vmatprep.subr.bf16.mxu0 %v1868
    %2501 = vmatpush1.bf16.msra.mxu0 %v1867
    %2502 = vmatprep.subr.bf16.mxu0 %v1872
    %2503 = vmatpush1.bf16.msra.mxu0 %v1871
    %2504 = vmatprep.subr.bf16.mxu0 %v1876
    %2505 = vmatpush1.bf16.msra.mxu0 %v1875
    %2506 = vmatprep.mubr.bf16.mxu0 %v734
    %2507 = vmatmul.mubr.bf16.gmra.mrb[0].mxu0 %v733
    %v2508 = vpop.f32.mrb[0].mxu0
    %v2509 = vadd.f32 %v2396, %v2508
    %v2510 = vpop.f32.mrb[0].mxu0
    %v2511 = vadd.f32 %v2398, %v2510
    %v2512 = vpop.f32.mrb[0].mxu0
    %v2513 = vadd.f32 %v2400, %v2512
    %v2514 = vpop.f32.mrb[0].mxu0
    %v2515 = vadd.f32 %v2402, %v2514
    %2516 = vmatprep.mubr.bf16.mxu0 %v742
    %2517 = vmatmul.mubr.bf16.gmra.mrb[0].mxu0 %v741
    %v2518 = vpop.f32.mrb[0].mxu0
    %v2519 = vadd.f32 %v2406, %v2518
    %v2520 = vpop.f32.mrb[0].mxu0
    %v2521 = vadd.f32 %v2408, %v2520
    %v2522 = vpop.f32.mrb[0].mxu0
    %v2523 = vadd.f32 %v2410, %v2522
    %v2524 = vpop.f32.mrb[0].mxu0
    %v2525 = vadd.f32 %v2412, %v2524
    %2526 = vmatprep.mubr.bf16.mxu0 %v750
    %2527 = vmatmul.mubr.bf16.gmra.mrb[0].mxu0 %v749
    %v2528 = vpop.f32.mrb[0].mxu0
    %v2529 = vadd.f32 %v2416, %v2528
    %v2530 = vpop.f32.mrb[0].mxu0
    %v2531 = vadd.f32 %v2418, %v2530
    %v2532 = vpop.f32.mrb[0].mxu0
    %v2533 = vadd.f32 %v2420, %v2532
    %v2534 = vpop.f32.mrb[0].mxu0
    %v2535 = vadd.f32 %v2422, %v2534
    %2536 = vmatprep.mubr.bf16.mxu0 %v758
    %2537 = vmatmul.mubr.bf16.gmra.mrb[0].mxu0 %v757
    %v2538 = vpop.f32.mrb[0].mxu0
    %v2539 = vadd.f32 %v2426, %v2538
    %v2540 = vpop.f32.mrb[0].mxu0
    %v2541 = vadd.f32 %v2428, %v2540
    %v2542 = vpop.f32.mrb[0].mxu0
    %v2543 = vadd.f32 %v2430, %v2542
    %v2544 = vpop.f32.mrb[0].mxu0
    %v2545 = vadd.f32 %v2432, %v2544
    %2546 = vmatprep.mubr.bf16.mxu0 %v766
    %2547 = vmatmul.mubr.bf16.gmra.mrb[0].mxu0 %v765
    %v2548 = vpop.f32.mrb[0].mxu0
    %v2549 = vadd.f32 %v2436, %v2548
    %v2550 = vpop.f32.mrb[0].mxu0
    %v2551 = vadd.f32 %v2438, %v2550
    %v2552 = vpop.f32.mrb[0].mxu0
    %v2553 = vadd.f32 %v2440, %v2552
    %v2554 = vpop.f32.mrb[0].mxu0
    %v2555 = vadd.f32 %v2442, %v2554
    %2556 = vmatprep.mubr.bf16.mxu0 %v774
    %2557 = vmatmul.mubr.bf16.gmra.mrb[0].mxu0 %v773
    %v2558 = vpop.f32.mrb[0].mxu0
    %v2559 = vadd.f32 %v2446, %v2558
    %v2560 = vpop.f32.mrb[0].mxu0
    %v2561 = vadd.f32 %v2448, %v2560
    %v2562 = vpop.f32.mrb[0].mxu0
    %v2563 = vadd.f32 %v2450, %v2562
    %v2564 = vpop.f32.mrb[0].mxu0
    %v2565 = vadd.f32 %v2452, %v2564
    %2566 = vmatprep.mubr.bf16.mxu0 %v782
    %2567 = vmatmul.mubr.bf16.gmra.mrb[0].mxu0 %v781
    %v2568 = vpop.f32.mrb[0].mxu0
    %v2569 = vadd.f32 %v2456, %v2568
    %v2570 = vpop.f32.mrb[0].mxu0
    %v2571 = vadd.f32 %v2458, %v2570
    %v2572 = vpop.f32.mrb[0].mxu0
    %v2573 = vadd.f32 %v2460, %v2572
    %v2574 = vpop.f32.mrb[0].mxu0
    %v2575 = vadd.f32 %v2462, %v2574
    %2576 = vmatprep.mubr.bf16.mxu0 %v790
    %2577 = vmatmul.mubr.bf16.gmra.mrb[0].mxu0 %v789
    %v2578 = vpop.f32.mrb[0].mxu0
    %v2579 = vadd.f32 %v2466, %v2578
    %v2580 = vpop.f32.mrb[0].mxu0
    %v2581 = vadd.f32 %v2468, %v2580
    %v2582 = vpop.f32.mrb[0].mxu0
    %v2583 = vadd.f32 %v2470, %v2582
    %v2584 = vpop.f32.mrb[0].mxu0
    %v2585 = vadd.f32 %v2472, %v2584
    %2586 = vdwg.mxu0
    %2587 = vmatprep.subr.bf16.mxu0 %v1626
    %2588 = vmatpush1.bf16.msra.mxu0 %v1625
    %2589 = vmatprep.subr.bf16.mxu0 %v1630
    %2590 = vmatpush1.bf16.msra.mxu0 %v1629
    %2591 = vmatprep.subr.bf16.mxu0 %v1634
    %2592 = vmatpush1.bf16.msra.mxu0 %v1633
    %2593 = vmatprep.subr.bf16.mxu0 %v1638
    %2594 = vmatpush1.bf16.msra.mxu0 %v1637
    %2595 = vmatprep.subr.bf16.mxu0 %v1642
    %2596 = vmatpush1.bf16.msra.mxu0 %v1641
    %2597 = vmatprep.subr.bf16.mxu0 %v1646
    %2598 = vmatpush1.bf16.msra.mxu0 %v1645
    %2599 = vmatprep.subr.bf16.mxu0 %v1650
    %2600 = vmatpush1.bf16.msra.mxu0 %v1649
    %2601 = vmatprep.subr.bf16.mxu0 %v1654
    %2602 = vmatpush1.bf16.msra.mxu0 %v1653
    %2603 = vmatprep.subr.bf16.mxu0 %v1658
    %2604 = vmatpush1.bf16.msra.mxu0 %v1657
    %2605 = vmatprep.subr.bf16.mxu0 %v1662
    %2606 = vmatpush1.bf16.msra.mxu0 %v1661
    %2607 = vmatprep.subr.bf16.mxu0 %v1666
    %2608 = vmatpush1.bf16.msra.mxu0 %v1665
    %2609 = vmatprep.subr.bf16.mxu0 %v1670
    %2610 = vmatpush1.bf16.msra.mxu0 %v1669
    %2611 = vmatprep.subr.bf16.mxu0 %v1674
    %2612 = vmatpush1.bf16.msra.mxu0 %v1673
    %2613 = vmatprep.subr.bf16.mxu0 %v1678
    %2614 = vmatpush1.bf16.msra.mxu0 %v1677
    %2615 = vmatprep.subr.bf16.mxu0 %v1682
    %2616 = vmatpush1.bf16.msra.mxu0 %v1681
    %2617 = vmatprep.subr.bf16.mxu0 %v1686
    %2618 = vmatpush1.bf16.msra.mxu0 %v1685
    %2619 = vmatprep.mubr.bf16.mxu0 %v728
    %2620 = vmatmul.mubr.bf16.gmra.mrb[0].mxu0 %v727
    %v2621 = vpop.f32.mrb[0].mxu0
    %v2622 = vadd.f32 0.0, %v2621
    %v2623 = vpop.f32.mrb[0].mxu0
    %v2624 = vadd.f32 0.0, %v2623
    %v2625 = vpop.f32.mrb[0].mxu0
    %v2626 = vadd.f32 0.0, %v2625
    %v2627 = vpop.f32.mrb[0].mxu0
    %v2628 = vadd.f32 0.0, %v2627
    %2629 = vmatprep.mubr.bf16.mxu0 %v736
    %2630 = vmatmul.mubr.bf16.gmra.mrb[0].mxu0 %v735
    %v2631 = vpop.f32.mrb[0].mxu0
    %v2632 = vadd.f32 0.0, %v2631
    %v2633 = vpop.f32.mrb[0].mxu0
    %v2634 = vadd.f32 0.0, %v2633
    %v2635 = vpop.f32.mrb[0].mxu0
    %v2636 = vadd.f32 0.0, %v2635
    %v2637 = vpop.f32.mrb[0].mxu0
    %v2638 = vadd.f32 0.0, %v2637
    %2639 = vmatprep.mubr.bf16.mxu0 %v744
    %2640 = vmatmul.mubr.bf16.gmra.mrb[0].mxu0 %v743
    %v2641 = vpop.f32.mrb[0].mxu0
    %v2642 = vadd.f32 0.0, %v2641
    %v2643 = vpop.f32.mrb[0].mxu0
    %v2644 = vadd.f32 0.0, %v2643
    %v2645 = vpop.f32.mrb[0].mxu0
    %v2646 = vadd.f32 0.0, %v2645
    %v2647 = vpop.f32.mrb[0].mxu0
    %v2648 = vadd.f32 0.0, %v2647
    %2649 = vmatprep.mubr.bf16.mxu0 %v752
    %2650 = vmatmul.mubr.bf16.gmra.mrb[0].mxu0 %v751
    %v2651 = vpop.f32.mrb[0].mxu0
    %v2652 = vadd.f32 0.0, %v2651
    %v2653 = vpop.f32.mrb[0].mxu0
    %v2654 = vadd.f32 0.0, %v2653
    %v2655 = vpop.f32.mrb[0].mxu0
    %v2656 = vadd.f32 0.0, %v2655
    %v2657 = vpop.f32.mrb[0].mxu0
    %v2658 = vadd.f32 0.0, %v2657
    %2659 = vmatprep.mubr.bf16.mxu0 %v760
    %2660 = vmatmul.mubr.bf16.gmra.mrb[0].mxu0 %v759
    %v2661 = vpop.f32.mrb[0].mxu0
    %v2662 = vadd.f32 0.0, %v2661
    %v2663 = vpop.f32.mrb[0].mxu0
    %v2664 = vadd.f32 0.0, %v2663
    %v2665 = vpop.f32.mrb[0].mxu0
    %v2666 = vadd.f32 0.0, %v2665
    %v2667 = vpop.f32.mrb[0].mxu0
    %v2668 = vadd.f32 0.0, %v2667
    %2669 = vmatprep.mubr.bf16.mxu0 %v768
    %2670 = vmatmul.mubr.bf16.gmra.mrb[0].mxu0 %v767
    %v2671 = vpop.f32.mrb[0].mxu0
    %v2672 = vadd.f32 0.0, %v2671
    %v2673 = vpop.f32.mrb[0].mxu0
    %v2674 = vadd.f32 0.0, %v2673
    %v2675 = vpop.f32.mrb[0].mxu0
    %v2676 = vadd.f32 0.0, %v2675
    %v2677 = vpop.f32.mrb[0].mxu0
    %v2678 = vadd.f32 0.0, %v2677
    %2679 = vmatprep.mubr.bf16.mxu0 %v776
    %2680 = vmatmul.mubr.bf16.gmra.mrb[0].mxu0 %v775
    %v2681 = vpop.f32.mrb[0].mxu0
    %v2682 = vadd.f32 0.0, %v2681
    %v2683 = vpop.f32.mrb[0].mxu0
    %v2684 = vadd.f32 0.0, %v2683
    %v2685 = vpop.f32.mrb[0].mxu0
    %v2686 = vadd.f32 0.0, %v2685
    %v2687 = vpop.f32.mrb[0].mxu0
    %v2688 = vadd.f32 0.0, %v2687
    %2689 = vmatprep.mubr.bf16.mxu0 %v784
    %2690 = vmatmul.mubr.bf16.gmra.mrb[0].mxu0 %v783
    %v2691 = vpop.f32.mrb[0].mxu0
    %v2692 = vadd.f32 0.0, %v2691
    %v2693 = vpop.f32.mrb[0].mxu0
    %v2694 = vadd.f32 0.0, %v2693
    %v2695 = vpop.f32.mrb[0].mxu0
    %v2696 = vadd.f32 0.0, %v2695
    %v2697 = vpop.f32.mrb[0].mxu0
    %v2698 = vadd.f32 0.0, %v2697
    %2699 = vdwg.mxu0
    %2700 = vmatprep.subr.bf16.mxu0 %v1690
    %2701 = vmatpush1.bf16.msra.mxu0 %v1689
    %2702 = vmatprep.subr.bf16.mxu0 %v1694
    %2703 = vmatpush1.bf16.msra.mxu0 %v1693
    %2704 = vmatprep.subr.bf16.mxu0 %v1698
    %2705 = vmatpush1.bf16.msra.mxu0 %v1697
    %2706 = vmatprep.subr.bf16.mxu0 %v1702
    %2707 = vmatpush1.bf16.msra.mxu0 %v1701
    %2708 = vmatprep.subr.bf16.mxu0 %v1706
    %2709 = vmatpush1.bf16.msra.mxu0 %v1705
    %2710 = vmatprep.subr.bf16.mxu0 %v1710
    %2711 = vmatpush1.bf16.msra.mxu0 %v1709
    %2712 = vmatprep.subr.bf16.mxu0 %v1714
    %2713 = vmatpush1.bf16.msra.mxu0 %v1713
    %2714 = vmatprep.subr.bf16.mxu0 %v1718
    %2715 = vmatpush1.bf16.msra.mxu0 %v1717
    %2716 = vmatprep.subr.bf16.mxu0 %v1722
    %2717 = vmatpush1.bf16.msra.mxu0 %v1721
    %2718 = vmatprep.subr.bf16.mxu0 %v1726
    %2719 = vmatpush1.bf16.msra.mxu0 %v1725
    %2720 = vmatprep.subr.bf16.mxu0 %v1730
    %2721 = vmatpush1.bf16.msra.mxu0 %v1729
    %2722 = vmatprep.subr.bf16.mxu0 %v1734
    %2723 = vmatpush1.bf16.msra.mxu0 %v1733
    %2724 = vmatprep.subr.bf16.mxu0 %v1738
    %2725 = vmatpush1.bf16.msra.mxu0 %v1737
    %2726 = vmatprep.subr.bf16.mxu0 %v1742
    %2727 = vmatpush1.bf16.msra.mxu0 %v1741
    %2728 = vmatprep.subr.bf16.mxu0 %v1746
    %2729 = vmatpush1.bf16.msra.mxu0 %v1745
    %2730 = vmatprep.subr.bf16.mxu0 %v1750
    %2731 = vmatpush1.bf16.msra.mxu0 %v1749
    %2732 = vmatprep.mubr.bf16.mxu0 %v730
    %2733 = vmatmul.mubr.bf16.gmra.mrb[0].mxu0 %v729
    %v2734 = vpop.f32.mrb[0].mxu0
    %v2735 = vadd.f32 %v2622, %v2734
    %v2736 = vpop.f32.mrb[0].mxu0
    %v2737 = vadd.f32 %v2624, %v2736
    %v2738 = vpop.f32.mrb[0].mxu0
    %v2739 = vadd.f32 %v2626, %v2738
    %v2740 = vpop.f32.mrb[0].mxu0
    %v2741 = vadd.f32 %v2628, %v2740
    %2742 = vmatprep.mubr.bf16.mxu0 %v738
    %2743 = vmatmul.mubr.bf16.gmra.mrb[0].mxu0 %v737
    %v2744 = vpop.f32.mrb[0].mxu0
    %v2745 = vadd.f32 %v2632, %v2744
    %v2746 = vpop.f32.mrb[0].mxu0
    %v2747 = vadd.f32 %v2634, %v2746
    %v2748 = vpop.f32.mrb[0].mxu0
    %v2749 = vadd.f32 %v2636, %v2748
    %v2750 = vpop.f32.mrb[0].mxu0
    %v2751 = vadd.f32 %v2638, %v2750
    %2752 = vmatprep.mubr.bf16.mxu0 %v746
    %2753 = vmatmul.mubr.bf16.gmra.mrb[0].mxu0 %v745
    %v2754 = vpop.f32.mrb[0].mxu0
    %v2755 = vadd.f32 %v2642, %v2754
    %v2756 = vpop.f32.mrb[0].mxu0
    %v2757 = vadd.f32 %v2644, %v2756
    %v2758 = vpop.f32.mrb[0].mxu0
    %v2759 = vadd.f32 %v2646, %v2758
    %v2760 = vpop.f32.mrb[0].mxu0
    %v2761 = vadd.f32 %v2648, %v2760
    %2762 = vmatprep.mubr.bf16.mxu0 %v754
    %2763 = vmatmul.mubr.bf16.gmra.mrb[0].mxu0 %v753
    %v2764 = vpop.f32.mrb[0].mxu0
    %v2765 = vadd.f32 %v2652, %v2764
    %v2766 = vpop.f32.mrb[0].mxu0
    %v2767 = vadd.f32 %v2654, %v2766
    %v2768 = vpop.f32.mrb[0].mxu0
    %v2769 = vadd.f32 %v2656, %v2768
    %v2770 = vpop.f32.mrb[0].mxu0
    %v2771 = vadd.f32 %v2658, %v2770
    %2772 = vmatprep.mubr.bf16.mxu0 %v762
    %2773 = vmatmul.mubr.bf16.gmra.mrb[0].mxu0 %v761
    %v2774 = vpop.f32.mrb[0].mxu0
    %v2775 = vadd.f32 %v2662, %v2774
    %v2776 = vpop.f32.mrb[0].mxu0
    %v2777 = vadd.f32 %v2664, %v2776
    %v2778 = vpop.f32.mrb[0].mxu0
    %v2779 = vadd.f32 %v2666, %v2778
    %v2780 = vpop.f32.mrb[0].mxu0
    %v2781 = vadd.f32 %v2668, %v2780
    %2782 = vmatprep.mubr.bf16.mxu0 %v770
    %2783 = vmatmul.mubr.bf16.gmra.mrb[0].mxu0 %v769
    %v2784 = vpop.f32.mrb[0].mxu0
    %v2785 = vadd.f32 %v2672, %v2784
    %v2786 = vpop.f32.mrb[0].mxu0
    %v2787 = vadd.f32 %v2674, %v2786
    %v2788 = vpop.f32.mrb[0].mxu0
    %v2789 = vadd.f32 %v2676, %v2788
    %v2790 = vpop.f32.mrb[0].mxu0
    %v2791 = vadd.f32 %v2678, %v2790
    %2792 = vmatprep.mubr.bf16.mxu0 %v778
    %2793 = vmatmul.mubr.bf16.gmra.mrb[0].mxu0 %v777
    %v2794 = vpop.f32.mrb[0].mxu0
    %v2795 = vadd.f32 %v2682, %v2794
    %v2796 = vpop.f32.mrb[0].mxu0
    %v2797 = vadd.f32 %v2684, %v2796
    %v2798 = vpop.f32.mrb[0].mxu0
    %v2799 = vadd.f32 %v2686, %v2798
    %v2800 = vpop.f32.mrb[0].mxu0
    %v2801 = vadd.f32 %v2688, %v2800
    %2802 = vmatprep.mubr.bf16.mxu0 %v786
    %2803 = vmatmul.mubr.bf16.gmra.mrb[0].mxu0 %v785
    %v2804 = vpop.f32.mrb[0].mxu0
    %v2805 = vadd.f32 %v2692, %v2804
    %v2806 = vpop.f32.mrb[0].mxu0
    %v2807 = vadd.f32 %v2694, %v2806
    %v2808 = vpop.f32.mrb[0].mxu0
    %v2809 = vadd.f32 %v2696, %v2808
    %v2810 = vpop.f32.mrb[0].mxu0
    %v2811 = vadd.f32 %v2698, %v2810
    %2812 = vdwg.mxu0
    %2813 = vmatprep.subr.bf16.mxu0 %v1754
    %2814 = vmatpush1.bf16.msra.mxu0 %v1753
    %2815 = vmatprep.subr.bf16.mxu0 %v1758
    %2816 = vmatpush1.bf16.msra.mxu0 %v1757
    %2817 = vmatprep.subr.bf16.mxu0 %v1762
    %2818 = vmatpush1.bf16.msra.mxu0 %v1761
    %2819 = vmatprep.subr.bf16.mxu0 %v1766
    %2820 = vmatpush1.bf16.msra.mxu0 %v1765
    %2821 = vmatprep.subr.bf16.mxu0 %v1770
    %2822 = vmatpush1.bf16.msra.mxu0 %v1769
    %2823 = vmatprep.subr.bf16.mxu0 %v1774
    %2824 = vmatpush1.bf16.msra.mxu0 %v1773
    %2825 = vmatprep.subr.bf16.mxu0 %v1778
    %2826 = vmatpush1.bf16.msra.mxu0 %v1777
    %2827 = vmatprep.subr.bf16.mxu0 %v1782
    %2828 = vmatpush1.bf16.msra.mxu0 %v1781
    %2829 = vmatprep.subr.bf16.mxu0 %v1786
    %2830 = vmatpush1.bf16.msra.mxu0 %v1785
    %2831 = vmatprep.subr.bf16.mxu0 %v1790
    %2832 = vmatpush1.bf16.msra.mxu0 %v1789
    %2833 = vmatprep.subr.bf16.mxu0 %v1794
    %2834 = vmatpush1.bf16.msra.mxu0 %v1793
    %2835 = vmatprep.subr.bf16.mxu0 %v1798
    %2836 = vmatpush1.bf16.msra.mxu0 %v1797
    %2837 = vmatprep.subr.bf16.mxu0 %v1802
    %2838 = vmatpush1.bf16.msra.mxu0 %v1801
    %2839 = vmatprep.subr.bf16.mxu0 %v1806
    %2840 = vmatpush1.bf16.msra.mxu0 %v1805
    %2841 = vmatprep.subr.bf16.mxu0 %v1810
    %2842 = vmatpush1.bf16.msra.mxu0 %v1809
    %2843 = vmatprep.subr.bf16.mxu0 %v1814
    %2844 = vmatpush1.bf16.msra.mxu0 %v1813
    %2845 = vmatprep.mubr.bf16.mxu0 %v732
    %2846 = vmatmul.mubr.bf16.gmra.mrb[0].mxu0 %v731
    %v2847 = vpop.f32.mrb[0].mxu0
    %v2848 = vadd.f32 %v2735, %v2847
    %v2849 = vpop.f32.mrb[0].mxu0
    %v2850 = vadd.f32 %v2737, %v2849
    %v2851 = vpop.f32.mrb[0].mxu0
    %v2852 = vadd.f32 %v2739, %v2851
    %v2853 = vpop.f32.mrb[0].mxu0
    %v2854 = vadd.f32 %v2741, %v2853
    %2855 = vmatprep.mubr.bf16.mxu0 %v740
    %2856 = vmatmul.mubr.bf16.gmra.mrb[0].mxu0 %v739
    %v2857 = vpop.f32.mrb[0].mxu0
    %v2858 = vadd.f32 %v2745, %v2857
    %v2859 = vpop.f32.mrb[0].mxu0
    %v2860 = vadd.f32 %v2747, %v2859
    %v2861 = vpop.f32.mrb[0].mxu0
    %v2862 = vadd.f32 %v2749, %v2861
    %v2863 = vpop.f32.mrb[0].mxu0
    %v2864 = vadd.f32 %v2751, %v2863
    %2865 = vmatprep.mubr.bf16.mxu0 %v748
    %2866 = vmatmul.mubr.bf16.gmra.mrb[0].mxu0 %v747
    %v2867 = vpop.f32.mrb[0].mxu0
    %v2868 = vadd.f32 %v2755, %v2867
    %v2869 = vpop.f32.mrb[0].mxu0
    %v2870 = vadd.f32 %v2757, %v2869
    %v2871 = vpop.f32.mrb[0].mxu0
    %v2872 = vadd.f32 %v2759, %v2871
    %v2873 = vpop.f32.mrb[0].mxu0
    %v2874 = vadd.f32 %v2761, %v2873
    %2875 = vmatprep.mubr.bf16.mxu0 %v756
    %2876 = vmatmul.mubr.bf16.gmra.mrb[0].mxu0 %v755
    %v2877 = vpop.f32.mrb[0].mxu0
    %v2878 = vadd.f32 %v2765, %v2877
    %v2879 = vpop.f32.mrb[0].mxu0
    %v2880 = vadd.f32 %v2767, %v2879
    %v2881 = vpop.f32.mrb[0].mxu0
    %v2882 = vadd.f32 %v2769, %v2881
    %v2883 = vpop.f32.mrb[0].mxu0
    %v2884 = vadd.f32 %v2771, %v2883
    %2885 = vmatprep.mubr.bf16.mxu0 %v764
    %2886 = vmatmul.mubr.bf16.gmra.mrb[0].mxu0 %v763
    %v2887 = vpop.f32.mrb[0].mxu0
    %v2888 = vadd.f32 %v2775, %v2887
    %v2889 = vpop.f32.mrb[0].mxu0
    %v2890 = vadd.f32 %v2777, %v2889
    %v2891 = vpop.f32.mrb[0].mxu0
    %v2892 = vadd.f32 %v2779, %v2891
    %v2893 = vpop.f32.mrb[0].mxu0
    %v2894 = vadd.f32 %v2781, %v2893
    %2895 = vmatprep.mubr.bf16.mxu0 %v772
    %2896 = vmatmul.mubr.bf16.gmra.mrb[0].mxu0 %v771
    %v2897 = vpop.f32.mrb[0].mxu0
    %v2898 = vadd.f32 %v2785, %v2897
    %v2899 = vpop.f32.mrb[0].mxu0
    %v2900 = vadd.f32 %v2787, %v2899
    %v2901 = vpop.f32.mrb[0].mxu0
    %v2902 = vadd.f32 %v2789, %v2901
    %v2903 = vpop.f32.mrb[0].mxu0
    %v2904 = vadd.f32 %v2791, %v2903
    %2905 = vmatprep.mubr.bf16.mxu0 %v780
    %2906 = vmatmul.mubr.bf16.gmra.mrb[0].mxu0 %v779
    %v2907 = vpop.f32.mrb[0].mxu0
    %v2908 = vadd.f32 %v2795, %v2907
    %v2909 = vpop.f32.mrb[0].mxu0
    %v2910 = vadd.f32 %v2797, %v2909
    %v2911 = vpop.f32.mrb[0].mxu0
    %v2912 = vadd.f32 %v2799, %v2911
    %v2913 = vpop.f32.mrb[0].mxu0
    %v2914 = vadd.f32 %v2801, %v2913
    %2915 = vmatprep.mubr.bf16.mxu0 %v788
    %2916 = vmatmul.mubr.bf16.gmra.mrb[0].mxu0 %v787
    %v2917 = vpop.f32.mrb[0].mxu0
    %v2918 = vadd.f32 %v2805, %v2917
    %v2919 = vpop.f32.mrb[0].mxu0
    %v2920 = vadd.f32 %v2807, %v2919
    %v2921 = vpop.f32.mrb[0].mxu0
    %v2922 = vadd.f32 %v2809, %v2921
    %v2923 = vpop.f32.mrb[0].mxu0
    %v2924 = vadd.f32 %v2811, %v2923
    %2925 = vdwg.mxu0
    %2926 = vmatprep.subr.bf16.mxu0 %v1818
    %2927 = vmatpush1.bf16.msra.mxu0 %v1817
    %2928 = vmatprep.subr.bf16.mxu0 %v1822
    %2929 = vmatpush1.bf16.msra.mxu0 %v1821
    %2930 = vmatprep.subr.bf16.mxu0 %v1826
    %2931 = vmatpush1.bf16.msra.mxu0 %v1825
    %2932 = vmatprep.subr.bf16.mxu0 %v1830
    %2933 = vmatpush1.bf16.msra.mxu0 %v1829
    %2934 = vmatprep.subr.bf16.mxu0 %v1834
    %2935 = vmatpush1.bf16.msra.mxu0 %v1833
    %2936 = vmatprep.subr.bf16.mxu0 %v1838
    %2937 = vmatpush1.bf16.msra.mxu0 %v1837
    %2938 = vmatprep.subr.bf16.mxu0 %v1842
    %2939 = vmatpush1.bf16.msra.mxu0 %v1841
    %2940 = vmatprep.subr.bf16.mxu0 %v1846
    %2941 = vmatpush1.bf16.msra.mxu0 %v1845
    %2942 = vmatprep.subr.bf16.mxu0 %v1850
    %2943 = vmatpush1.bf16.msra.mxu0 %v1849
    %2944 = vmatprep.subr.bf16.mxu0 %v1854
    %2945 = vmatpush1.bf16.msra.mxu0 %v1853
    %2946 = vmatprep.subr.bf16.mxu0 %v1858
    %2947 = vmatpush1.bf16.msra.mxu0 %v1857
    %2948 = vmatprep.subr.bf16.mxu0 %v1862
    %2949 = vmatpush1.bf16.msra.mxu0 %v1861
    %2950 = vmatprep.subr.bf16.mxu0 %v1866
    %2951 = vmatpush1.bf16.msra.mxu0 %v1865
    %2952 = vmatprep.subr.bf16.mxu0 %v1870
    %2953 = vmatpush1.bf16.msra.mxu0 %v1869
    %2954 = vmatprep.subr.bf16.mxu0 %v1874
    %2955 = vmatpush1.bf16.msra.mxu0 %v1873
    %2956 = vmatprep.subr.bf16.mxu0 %v1878
    %2957 = vmatpush1.bf16.msra.mxu0 %v1877
    %2958 = vmatprep.mubr.bf16.mxu0 %v734
    %2959 = vmatmul.mubr.bf16.gmra.mrb[0].mxu0 %v733
    %v2960 = vpop.f32.mrb[0].mxu0
    %v2961 = vadd.f32 %v2848, %v2960
    %v2962 = vpop.f32.mrb[0].mxu0
    %v2963 = vadd.f32 %v2850, %v2962
    %v2964 = vpop.f32.mrb[0].mxu0
    %v2965 = vadd.f32 %v2852, %v2964
    %v2966 = vpop.f32.mrb[0].mxu0
    %v2967 = vadd.f32 %v2854, %v2966
    %2968 = vmatprep.mubr.bf16.mxu0 %v742
    %2969 = vmatmul.mubr.bf16.gmra.mrb[0].mxu0 %v741
    %v2970 = vpop.f32.mrb[0].mxu0
    %v2971 = vadd.f32 %v2858, %v2970
    %v2972 = vpop.f32.mrb[0].mxu0
    %v2973 = vadd.f32 %v2860, %v2972
    %v2974 = vpop.f32.mrb[0].mxu0
    %v2975 = vadd.f32 %v2862, %v2974
    %v2976 = vpop.f32.mrb[0].mxu0
    %v2977 = vadd.f32 %v2864, %v2976
    %2978 = vmatprep.mubr.bf16.mxu0 %v750
    %2979 = vmatmul.mubr.bf16.gmra.mrb[0].mxu0 %v749
    %v2980 = vpop.f32.mrb[0].mxu0
    %v2981 = vadd.f32 %v2868, %v2980
    %v2982 = vpop.f32.mrb[0].mxu0
    %v2983 = vadd.f32 %v2870, %v2982
    %v2984 = vpop.f32.mrb[0].mxu0
    %v2985 = vadd.f32 %v2872, %v2984
    %v2986 = vpop.f32.mrb[0].mxu0
    %v2987 = vadd.f32 %v2874, %v2986
    %2988 = vmatprep.mubr.bf16.mxu0 %v758
    %2989 = vmatmul.mubr.bf16.gmra.mrb[0].mxu0 %v757
    %v2990 = vpop.f32.mrb[0].mxu0
    %v2991 = vadd.f32 %v2878, %v2990
    %v2992 = vpop.f32.mrb[0].mxu0
    %v2993 = vadd.f32 %v2880, %v2992
    %v2994 = vpop.f32.mrb[0].mxu0
    %v2995 = vadd.f32 %v2882, %v2994
    %v2996 = vpop.f32.mrb[0].mxu0
    %v2997 = vadd.f32 %v2884, %v2996
    %2998 = vmatprep.mubr.bf16.mxu0 %v766
    %2999 = vmatmul.mubr.bf16.gmra.mrb[0].mxu0 %v765
    %v3000 = vpop.f32.mrb[0].mxu0
    %v3001 = vadd.f32 %v2888, %v3000
    %v3002 = vpop.f32.mrb[0].mxu0
    %v3003 = vadd.f32 %v2890, %v3002
    %v3004 = vpop.f32.mrb[0].mxu0
    %v3005 = vadd.f32 %v2892, %v3004
    %v3006 = vpop.f32.mrb[0].mxu0
    %v3007 = vadd.f32 %v2894, %v3006
    %3008 = vmatprep.mubr.bf16.mxu0 %v774
    %3009 = vmatmul.mubr.bf16.gmra.mrb[0].mxu0 %v773
    %v3010 = vpop.f32.mrb[0].mxu0
    %v3011 = vadd.f32 %v2898, %v3010
    %v3012 = vpop.f32.mrb[0].mxu0
    %v3013 = vadd.f32 %v2900, %v3012
    %v3014 = vpop.f32.mrb[0].mxu0
    %v3015 = vadd.f32 %v2902, %v3014
    %v3016 = vpop.f32.mrb[0].mxu0
    %v3017 = vadd.f32 %v2904, %v3016
    %3018 = vmatprep.mubr.bf16.mxu0 %v782
    %3019 = vmatmul.mubr.bf16.gmra.mrb[0].mxu0 %v781
    %v3020 = vpop.f32.mrb[0].mxu0
    %v3021 = vadd.f32 %v2908, %v3020
    %v3022 = vpop.f32.mrb[0].mxu0
    %v3023 = vadd.f32 %v2910, %v3022
    %v3024 = vpop.f32.mrb[0].mxu0
    %v3025 = vadd.f32 %v2912, %v3024
    %v3026 = vpop.f32.mrb[0].mxu0
    %v3027 = vadd.f32 %v2914, %v3026
    %3028 = vmatprep.mubr.bf16.mxu0 %v790
    %3029 = vmatmul.mubr.bf16.gmra.mrb[0].mxu0 %v789
    %v3030 = vpop.f32.mrb[0].mxu0
    %v3031 = vadd.f32 %v2918, %v3030
    %v3032 = vpop.f32.mrb[0].mxu0
    %v3033 = vadd.f32 %v2920, %v3032
    %v3034 = vpop.f32.mrb[0].mxu0
    %v3035 = vadd.f32 %v2922, %v3034
    %v3036 = vpop.f32.mrb[0].mxu0
    %v3037 = vadd.f32 %v2924, %v3036
    %3038 = vdwg.mxu0
    %v3039 = vadd.f32 %v151, %v2509
    %v3040 = vadd.f32 %v152, %v2511
    %v3041 = vadd.f32 %v153, %v2961
    %v3042 = vadd.f32 %v154, %v2963
    %v3043 = vadd.f32 %v155, %v2513
    %v3044 = vadd.f32 %v156, %v2515
    %v3045 = vadd.f32 %v157, %v2965
    %v3046 = vadd.f32 %v158, %v2967
    %v3047 = vadd.f32 %v159, %v2519
    %v3048 = vadd.f32 %v160, %v2521
    %v3049 = vadd.f32 %v161, %v2971
    %v3050 = vadd.f32 %v162, %v2973
    %v3051 = vadd.f32 %v163, %v2523
    %v3052 = vadd.f32 %v164, %v2525
    %v3053 = vadd.f32 %v165, %v2975
    %v3054 = vadd.f32 %v166, %v2977
    %v3055 = vadd.f32 %v167, %v2529
    %v3056 = vadd.f32 %v168, %v2531
    %v3057 = vadd.f32 %v169, %v2981
    %v3058 = vadd.f32 %v170, %v2983
    %v3059 = vadd.f32 %v171, %v2533
    %v3060 = vadd.f32 %v172, %v2535
    %v3061 = vadd.f32 %v173, %v2985
    %v3062 = vadd.f32 %v174, %v2987
    %v3063 = vadd.f32 %v175, %v2539
    %v3064 = vadd.f32 %v176, %v2541
    %v3065 = vadd.f32 %v177, %v2991
    %v3066 = vadd.f32 %v178, %v2993
    %v3067 = vadd.f32 %v179, %v2543
    %v3068 = vadd.f32 %v180, %v2545
    %v3069 = vadd.f32 %v181, %v2995
    %v3070 = vadd.f32 %v182, %v2997
    %v3071 = vadd.f32 %v183, %v2549
    %v3072 = vadd.f32 %v184, %v2551
    %v3073 = vadd.f32 %v185, %v3001
    %v3074 = vadd.f32 %v186, %v3003
    %v3075 = vadd.f32 %v187, %v2553
    %v3076 = vadd.f32 %v188, %v2555
    %v3077 = vadd.f32 %v189, %v3005
    %v3078 = vadd.f32 %v190, %v3007
    %v3079 = vadd.f32 %v191, %v2559
    %v3080 = vadd.f32 %v192, %v2561
    %v3081 = vadd.f32 %v193, %v3011
    %v3082 = vadd.f32 %v194, %v3013
    %v3083 = vadd.f32 %v195, %v2563
    %v3084 = vadd.f32 %v196, %v2565
    %v3085 = vadd.f32 %v197, %v3015
    %v3086 = vadd.f32 %v198, %v3017
    %v3087 = vadd.f32 %v199, %v2569
    %v3088 = vadd.f32 %v200, %v2571
    %v3089 = vadd.f32 %v201, %v3021
    %v3090 = vadd.f32 %v202, %v3023
    %v3091 = vadd.f32 %v203, %v2573
    %v3092 = vadd.f32 %v204, %v2575
    %v3093 = vadd.f32 %v205, %v3025
    %v3094 = vadd.f32 %v206, %v3027
    %v3095 = vadd.f32 %v207, %v2579
    %v3096 = vadd.f32 %v208, %v2581
    %v3097 = vadd.f32 %v209, %v3031
    %v3098 = vadd.f32 %v210, %v3033
    %v3099 = vadd.f32 %v211, %v2583
    %v3100 = vadd.f32 %v212, %v2585
    %v3101 = vadd.f32 %v213, %v3035
    %v3102 = vadd.f32 %v214, %v3037
    %3103 = vst [vmem:[#allocation2] sm:$0xff] %v3039
    %3104 = vst [vmem:[#allocation2 + $0x8] sm:$0xff] %v3040
    %3105 = vst [vmem:[#allocation2 + $0x10] sm:$0xff] %v3041
    %3106 = vst [vmem:[#allocation2 + $0x18] sm:$0xff] %v3042
    %3107 = vst [vmem:[#allocation2 + $0x20] sm:$0xff] %v3043
    %3108 = vst [vmem:[#allocation2 + $0x28] sm:$0xff] %v3044
    %3109 = vst [vmem:[#allocation2 + $0x30] sm:$0xff] %v3045
    %3110 = vst [vmem:[#allocation2 + $0x38] sm:$0xff] %v3046
    %3111 = vst [vmem:[#allocation2 + $0x40] sm:$0xff] %v3047
    %3112 = vst [vmem:[#allocation2 + $0x48] sm:$0xff] %v3048
    %3113 = vst [vmem:[#allocation2 + $0x50] sm:$0xff] %v3049
    %3114 = vst [vmem:[#allocation2 + $0x58] sm:$0xff] %v3050
    %3115 = vst [vmem:[#allocation2 + $0x60] sm:$0xff] %v3051
    %3116 = vst [vmem:[#allocation2 + $0x68] sm:$0xff] %v3052
    %3117 = vst [vmem:[#allocation2 + $0x70] sm:$0xff] %v3053
    %3118 = vst [vmem:[#allocation2 + $0x78] sm:$0xff] %v3054
    %3119 = vst [vmem:[#allocation2 + $0x80] sm:$0xff] %v3055
    %3120 = vst [vmem:[#allocation2 + $0x88] sm:$0xff] %v3056
    %3121 = vst [vmem:[#allocation2 + $0x90] sm:$0xff] %v3057
    %3122 = vst [vmem:[#allocation2 + $0x98] sm:$0xff] %v3058
    %3123 = vst [vmem:[#allocation2 + $0xa0] sm:$0xff] %v3059
    %3124 = vst [vmem:[#allocation2 + $0xa8] sm:$0xff] %v3060
    %3125 = vst [vmem:[#allocation2 + $0xb0] sm:$0xff] %v3061
    %3126 = vst [vmem:[#allocation2 + $0xb8] sm:$0xff] %v3062
    %3127 = vst [vmem:[#allocation2 + $0xc0] sm:$0xff] %v3063
    %3128 = vst [vmem:[#allocation2 + $0xc8] sm:$0xff] %v3064
    %3129 = vst [vmem:[#allocation2 + $0xd0] sm:$0xff] %v3065
    %3130 = vst [vmem:[#allocation2 + $0xd8] sm:$0xff] %v3066
    %3131 = vst [vmem:[#allocation2 + $0xe0] sm:$0xff] %v3067
    %3132 = vst [vmem:[#allocation2 + $0xe8] sm:$0xff] %v3068
    %3133 = vst [vmem:[#allocation2 + $0xf0] sm:$0xff] %v3069
    %3134 = vst [vmem:[#allocation2 + $0xf8] sm:$0xff] %v3070
    %3135 = vst [vmem:[#allocation2 + $0x100] sm:$0xff] %v3071
    %3136 = vst [vmem:[#allocation2 + $0x108] sm:$0xff] %v3072
    %3137 = vst [vmem:[#allocation2 + $0x110] sm:$0xff] %v3073
    %3138 = vst [vmem:[#allocation2 + $0x118] sm:$0xff] %v3074
    %3139 = vst [vmem:[#allocation2 + $0x120] sm:$0xff] %v3075
    %3140 = vst [vmem:[#allocation2 + $0x128] sm:$0xff] %v3076
    %3141 = vst [vmem:[#allocation2 + $0x130] sm:$0xff] %v3077
    %3142 = vst [vmem:[#allocation2 + $0x138] sm:$0xff] %v3078
    %3143 = vst [vmem:[#allocation2 + $0x140] sm:$0xff] %v3079
    %3144 = vst [vmem:[#allocation2 + $0x148] sm:$0xff] %v3080
    %3145 = vst [vmem:[#allocation2 + $0x150] sm:$0xff] %v3081
    %3146 = vst [vmem:[#allocation2 + $0x158] sm:$0xff] %v3082
    %3147 = vst [vmem:[#allocation2 + $0x160] sm:$0xff] %v3083
    %3148 = vst [vmem:[#allocation2 + $0x168] sm:$0xff] %v3084
    %3149 = vst [vmem:[#allocation2 + $0x170] sm:$0xff] %v3085
    %3150 = vst [vmem:[#allocation2 + $0x178] sm:$0xff] %v3086
    %3151 = vst [vmem:[#allocation2 + $0x180] sm:$0xff] %v3087
    %3152 = vst [vmem:[#allocation2 + $0x188] sm:$0xff] %v3088
    %3153 = vst [vmem:[#allocation2 + $0x190] sm:$0xff] %v3089
    %3154 = vst [vmem:[#allocation2 + $0x198] sm:$0xff] %v3090
    %3155 = vst [vmem:[#allocation2 + $0x1a0] sm:$0xff] %v3091
    %3156 = vst [vmem:[#allocation2 + $0x1a8] sm:$0xff] %v3092
    %3157 = vst [vmem:[#allocation2 + $0x1b0] sm:$0xff] %v3093
    %3158 = vst [vmem:[#allocation2 + $0x1b8] sm:$0xff] %v3094
    %3159 = vst [vmem:[#allocation2 + $0x1c0] sm:$0xff] %v3095
    %3160 = vst [vmem:[#allocation2 + $0x1c8] sm:$0xff] %v3096
    %3161 = vst [vmem:[#allocation2 + $0x1d0] sm:$0xff] %v3097
    %3162 = vst [vmem:[#allocation2 + $0x1d8] sm:$0xff] %v3098
    %3163 = vst [vmem:[#allocation2 + $0x1e0] sm:$0xff] %v3099
    %3164 = vst [vmem:[#allocation2 + $0x1e8] sm:$0xff] %v3100
    %3165 = vst [vmem:[#allocation2 + $0x1f0] sm:$0xff] %v3101
    %3166 = vst [vmem:[#allocation2 + $0x1f8] sm:$0xff] %v3102
    // Predicated region
    $region50: #{tpu_custom_call.1} parent=1 // pred_check
      %p3167 = pneg %p83
    $region51: #{tpu_custom_call.1} parent=1 // pred_check_branch
      %3169 = sbr.rel (%p3167) target = $region53
    $region52: #{tpu_custom_call.1} parent=1 // pred_region
      %v3170 = vld [vmem:[#allocation2] sm:$0xff]
      %v3171 = vld [vmem:[#allocation2 + $0x8] sm:$0xff]
      %v3172 = vld [vmem:[#allocation2 + $0x10] sm:$0xff]
      %v3173 = vld [vmem:[#allocation2 + $0x18] sm:$0xff]
      %v3174 = vld [vmem:[#allocation2 + $0x20] sm:$0xff]
      %v3175 = vld [vmem:[#allocation2 + $0x28] sm:$0xff]
      %v3176 = vld [vmem:[#allocation2 + $0x30] sm:$0xff]
      %v3177 = vld [vmem:[#allocation2 + $0x38] sm:$0xff]
      %v3178 = vld [vmem:[#allocation2 + $0x40] sm:$0xff]
      %v3179 = vld [vmem:[#allocation2 + $0x48] sm:$0xff]
      %v3180 = vld [vmem:[#allocation2 + $0x50] sm:$0xff]
      %v3181 = vld [vmem:[#allocation2 + $0x58] sm:$0xff]
      %v3182 = vld [vmem:[#allocation2 + $0x60] sm:$0xff]
      %v3183 = vld [vmem:[#allocation2 + $0x68] sm:$0xff]
      %v3184 = vld [vmem:[#allocation2 + $0x70] sm:$0xff]
      %v3185 = vld [vmem:[#allocation2 + $0x78] sm:$0xff]
      %v3186 = vld [vmem:[#allocation2 + $0x80] sm:$0xff]
      %v3187 = vld [vmem:[#allocation2 + $0x88] sm:$0xff]
      %v3188 = vld [vmem:[#allocation2 + $0x90] sm:$0xff]
      %v3189 = vld [vmem:[#allocation2 + $0x98] sm:$0xff]
      %v3190 = vld [vmem:[#allocation2 + $0xa0] sm:$0xff]
      %v3191 = vld [vmem:[#allocation2 + $0xa8] sm:$0xff]
      %v3192 = vld [vmem:[#allocation2 + $0xb0] sm:$0xff]
      %v3193 = vld [vmem:[#allocation2 + $0xb8] sm:$0xff]
      %v3194 = vld [vmem:[#allocation2 + $0xc0] sm:$0xff]
      %v3195 = vld [vmem:[#allocation2 + $0xc8] sm:$0xff]
      %v3196 = vld [vmem:[#allocation2 + $0xd0] sm:$0xff]
      %v3197 = vld [vmem:[#allocation2 + $0xd8] sm:$0xff]
      %v3198 = vld [vmem:[#allocation2 + $0xe0] sm:$0xff]
      %v3199 = vld [vmem:[#allocation2 + $0xe8] sm:$0xff]
      %v3200 = vld [vmem:[#allocation2 + $0xf0] sm:$0xff]
      %v3201 = vld [vmem:[#allocation2 + $0xf8] sm:$0xff]
      %v3202 = vld [vmem:[#allocation2 + $0x100] sm:$0xff]
      %v3203 = vld [vmem:[#allocation2 + $0x108] sm:$0xff]
      %v3204 = vld [vmem:[#allocation2 + $0x110] sm:$0xff]
      %v3205 = vld [vmem:[#allocation2 + $0x118] sm:$0xff]
      %v3206 = vld [vmem:[#allocation2 + $0x120] sm:$0xff]
      %v3207 = vld [vmem:[#allocation2 + $0x128] sm:$0xff]
      %v3208 = vld [vmem:[#allocation2 + $0x130] sm:$0xff]
      %v3209 = vld [vmem:[#allocation2 + $0x138] sm:$0xff]
      %v3210 = vld [vmem:[#allocation2 + $0x140] sm:$0xff]
      %v3211 = vld [vmem:[#allocation2 + $0x148] sm:$0xff]
      %v3212 = vld [vmem:[#allocation2 + $0x150] sm:$0xff]
      %v3213 = vld [vmem:[#allocation2 + $0x158] sm:$0xff]
      %v3214 = vld [vmem:[#allocation2 + $0x160] sm:$0xff]
      %v3215 = vld [vmem:[#allocation2 + $0x168] sm:$0xff]
      %v3216 = vld [vmem:[#allocation2 + $0x170] sm:$0xff]
      %v3217 = vld [vmem:[#allocation2 + $0x178] sm:$0xff]
      %v3218 = vld [vmem:[#allocation2 + $0x180] sm:$0xff]
      %v3219 = vld [vmem:[#allocation2 + $0x188] sm:$0xff]
      %v3220 = vld [vmem:[#allocation2 + $0x190] sm:$0xff]
      %v3221 = vld [vmem:[#allocation2 + $0x198] sm:$0xff]
      %v3222 = vld [vmem:[#allocation2 + $0x1a0] sm:$0xff]
      %v3223 = vld [vmem:[#allocation2 + $0x1a8] sm:$0xff]
      %v3224 = vld [vmem:[#allocation2 + $0x1b0] sm:$0xff]
      %v3225 = vld [vmem:[#allocation2 + $0x1b8] sm:$0xff]
      %v3226 = vld [vmem:[#allocation2 + $0x1c0] sm:$0xff]
      %v3227 = vld [vmem:[#allocation2 + $0x1c8] sm:$0xff]
      %v3228 = vld [vmem:[#allocation2 + $0x1d0] sm:$0xff]
      %v3229 = vld [vmem:[#allocation2 + $0x1d8] sm:$0xff]
      %v3230 = vld [vmem:[#allocation2 + $0x1e0] sm:$0xff]
      %v3231 = vld [vmem:[#allocation2 + $0x1e8] sm:$0xff]
      %v3232 = vld [vmem:[#allocation2 + $0x1f0] sm:$0xff]
      %v3233 = vld [vmem:[#allocation2 + $0x1f8] sm:$0xff]
      %v3234 = vld [vmem:[%s2] sm:$0xf]
      %v3236 = vlaneseq
      %v3237 = vshrl.u32 %v3236, 7
      %v3238 = vsub.s32 0, %v3237
      %v3239 = vrot.slane %v3234, %v3238
      %v3240 = vlaneseq
      %v3241 = vshrl.u32 %v3240, 7
      %v3242 = vsub.s32 1, %v3241
      %v3243 = vrot.slane %v3234, %v3242
      %v3244 = vlaneseq
      %v3245 = vshrl.u32 %v3244, 7
      %v3246 = vsub.s32 2, %v3245
      %v3247 = vrot.slane %v3234, %v3246
      %v3248 = vlaneseq
      %v3249 = vshrl.u32 %v3248, 7
      %v3250 = vsub.s32 3, %v3249
      %v3251 = vrot.slane %v3234, %v3250
      %v3256 = vadd.f32 %v3170, %v3239
      %v3257 = vadd.f32 %v3171, %v3243
      %v3258 = vadd.f32 %v3172, %v3247
      %v3259 = vadd.f32 %v3173, %v3251
      %v3260 = vadd.f32 %v3174, %v3239
      %v3261 = vadd.f32 %v3175, %v3243
      %v3262 = vadd.f32 %v3176, %v3247
      %v3263 = vadd.f32 %v3177, %v3251
      %v3264 = vadd.f32 %v3178, %v3239
      %v3265 = vadd.f32 %v3179, %v3243
      %v3266 = vadd.f32 %v3180, %v3247
      %v3267 = vadd.f32 %v3181, %v3251
      %v3268 = vadd.f32 %v3182, %v3239
      %v3269 = vadd.f32 %v3183, %v3243
      %v3270 = vadd.f32 %v3184, %v3247
      %v3271 = vadd.f32 %v3185, %v3251
      %v3272 = vadd.f32 %v3186, %v3239
      %v3273 = vadd.f32 %v3187, %v3243
      %v3274 = vadd.f32 %v3188, %v3247
      %v3275 = vadd.f32 %v3189, %v3251
      %v3276 = vadd.f32 %v3190, %v3239
      %v3277 = vadd.f32 %v3191, %v3243
      %v3278 = vadd.f32 %v3192, %v3247
      %v3279 = vadd.f32 %v3193, %v3251
      %v3280 = vadd.f32 %v3194, %v3239
      %v3281 = vadd.f32 %v3195, %v3243
      %v3282 = vadd.f32 %v3196, %v3247
      %v3283 = vadd.f32 %v3197, %v3251
      %v3284 = vadd.f32 %v3198, %v3239
      %v3285 = vadd.f32 %v3199, %v3243
      %v3286 = vadd.f32 %v3200, %v3247
      %v3287 = vadd.f32 %v3201, %v3251
      %v3288 = vadd.f32 %v3202, %v3239
      %v3289 = vadd.f32 %v3203, %v3243
      %v3290 = vadd.f32 %v3204, %v3247
      %v3291 = vadd.f32 %v3205, %v3251
      %v3292 = vadd.f32 %v3206, %v3239
      %v3293 = vadd.f32 %v3207, %v3243
      %v3294 = vadd.f32 %v3208, %v3247
      %v3295 = vadd.f32 %v3209, %v3251
      %v3296 = vadd.f32 %v3210, %v3239
      %v3297 = vadd.f32 %v3211, %v3243
      %v3298 = vadd.f32 %v3212, %v3247
      %v3299 = vadd.f32 %v3213, %v3251
      %v3300 = vadd.f32 %v3214, %v3239
      %v3301 = vadd.f32 %v3215, %v3243
      %v3302 = vadd.f32 %v3216, %v3247
      %v3303 = vadd.f32 %v3217, %v3251
      %v3304 = vadd.f32 %v3218, %v3239
      %v3305 = vadd.f32 %v3219, %v3243
      %v3306 = vadd.f32 %v3220, %v3247
      %v3307 = vadd.f32 %v3221, %v3251
      %v3308 = vadd.f32 %v3222, %v3239
      %v3309 = vadd.f32 %v3223, %v3243
      %v3310 = vadd.f32 %v3224, %v3247
      %v3311 = vadd.f32 %v3225, %v3251
      %v3312 = vadd.f32 %v3226, %v3239
      %v3313 = vadd.f32 %v3227, %v3243
      %v3314 = vadd.f32 %v3228, %v3247
      %v3315 = vadd.f32 %v3229, %v3251
      %v3316 = vadd.f32 %v3230, %v3239
      %v3317 = vadd.f32 %v3231, %v3243
      %v3318 = vadd.f32 %v3232, %v3247
      %v3319 = vadd.f32 %v3233, %v3251
      %v3320 = vmax.f32 %v3256, 0.0
      %v3321 = vmax.f32 %v3257, 0.0
      %v3322 = vmax.f32 %v3258, 0.0
      %v3323 = vmax.f32 %v3259, 0.0
      %v3324 = vmax.f32 %v3260, 0.0
      %v3325 = vmax.f32 %v3261, 0.0
      %v3326 = vmax.f32 %v3262, 0.0
      %v3327 = vmax.f32 %v3263, 0.0
      %v3328 = vmax.f32 %v3264, 0.0
      %v3329 = vmax.f32 %v3265, 0.0
      %v3330 = vmax.f32 %v3266, 0.0
      %v3331 = vmax.f32 %v3267, 0.0
      %v3332 = vmax.f32 %v3268, 0.0
      %v3333 = vmax.f32 %v3269, 0.0
      %v3334 = vmax.f32 %v3270, 0.0
      %v3335 = vmax.f32 %v3271, 0.0
      %v3336 = vmax.f32 %v3272, 0.0
      %v3337 = vmax.f32 %v3273, 0.0
      %v3338 = vmax.f32 %v3274, 0.0
      %v3339 = vmax.f32 %v3275, 0.0
      %v3340 = vmax.f32 %v3276, 0.0
      %v3341 = vmax.f32 %v3277, 0.0
      %v3342 = vmax.f32 %v3278, 0.0
      %v3343 = vmax.f32 %v3279, 0.0
      %v3344 = vmax.f32 %v3280, 0.0
      %v3345 = vmax.f32 %v3281, 0.0
      %v3346 = vmax.f32 %v3282, 0.0
      %v3347 = vmax.f32 %v3283, 0.0
      %v3348 = vmax.f32 %v3284, 0.0
      %v3349 = vmax.f32 %v3285, 0.0
      %v3350 = vmax.f32 %v3286, 0.0
      %v3351 = vmax.f32 %v3287, 0.0
      %v3352 = vmax.f32 %v3288, 0.0
      %v3353 = vmax.f32 %v3289, 0.0
      %v3354 = vmax.f32 %v3290, 0.0
      %v3355 = vmax.f32 %v3291, 0.0
      %v3356 = vmax.f32 %v3292, 0.0
      %v3357 = vmax.f32 %v3293, 0.0
      %v3358 = vmax.f32 %v3294, 0.0
      %v3359 = vmax.f32 %v3295, 0.0
      %v3360 = vmax.f32 %v3296, 0.0
      %v3361 = vmax.f32 %v3297, 0.0
      %v3362 = vmax.f32 %v3298, 0.0
      %v3363 = vmax.f32 %v3299, 0.0
      %v3364 = vmax.f32 %v3300, 0.0
      %v3365 = vmax.f32 %v3301, 0.0
      %v3366 = vmax.f32 %v3302, 0.0
      %v3367 = vmax.f32 %v3303, 0.0
      %v3368 = vmax.f32 %v3304, 0.0
      %v3369 = vmax.f32 %v3305, 0.0
      %v3370 = vmax.f32 %v3306, 0.0
      %v3371 = vmax.f32 %v3307, 0.0
      %v3372 = vmax.f32 %v3308, 0.0
      %v3373 = vmax.f32 %v3309, 0.0
      %v3374 = vmax.f32 %v3310, 0.0
      %v3375 = vmax.f32 %v3311, 0.0
      %v3376 = vmax.f32 %v3312, 0.0
      %v3377 = vmax.f32 %v3313, 0.0
      %v3378 = vmax.f32 %v3314, 0.0
      %v3379 = vmax.f32 %v3315, 0.0
      %v3380 = vmax.f32 %v3316, 0.0
      %v3381 = vmax.f32 %v3317, 0.0
      %v3382 = vmax.f32 %v3318, 0.0
      %v3383 = vmax.f32 %v3319, 0.0
      %v3384 = vpack.c.bf16 %v3324, %v3320
      %v3385 = vpack.c.bf16 %v3325, %v3321
      %v3386 = vpack.c.bf16 %v3326, %v3322
      %v3387 = vpack.c.bf16 %v3327, %v3323
      %v3388 = vpack.c.bf16 %v3332, %v3328
      %v3389 = vpack.c.bf16 %v3333, %v3329
      %v3390 = vpack.c.bf16 %v3334, %v3330
      %v3391 = vpack.c.bf16 %v3335, %v3331
      %v3392 = vpack.c.bf16 %v3340, %v3336
      %v3393 = vpack.c.bf16 %v3341, %v3337
      %v3394 = vpack.c.bf16 %v3342, %v3338
      %v3395 = vpack.c.bf16 %v3343, %v3339
      %v3396 = vpack.c.bf16 %v3348, %v3344
      %v3397 = vpack.c.bf16 %v3349, %v3345
      %v3398 = vpack.c.bf16 %v3350, %v3346
      %v3399 = vpack.c.bf16 %v3351, %v3347
      %v3400 = vpack.c.bf16 %v3356, %v3352
      %v3401 = vpack.c.bf16 %v3357, %v3353
      %v3402 = vpack.c.bf16 %v3358, %v3354
      %v3403 = vpack.c.bf16 %v3359, %v3355
      %v3404 = vpack.c.bf16 %v3364, %v3360
      %v3405 = vpack.c.bf16 %v3365, %v3361
      %v3406 = vpack.c.bf16 %v3366, %v3362
      %v3407 = vpack.c.bf16 %v3367, %v3363
      %v3408 = vpack.c.bf16 %v3372, %v3368
      %v3409 = vpack.c.bf16 %v3373, %v3369
      %v3410 = vpack.c.bf16 %v3374, %v3370
      %v3411 = vpack.c.bf16 %v3375, %v3371
      %v3412 = vpack.c.bf16 %v3380, %v3376
      %v3413 = vpack.c.bf16 %v3381, %v3377
      %v3414 = vpack.c.bf16 %v3382, %v3378
      %v3415 = vpack.c.bf16 %v3383, %v3379
      %v3416 = vld [vmem:[#allocation8] sm:$0xff]
      %v3417 = vld [vmem:[#allocation8 + $0x8] sm:$0xff]
      %v3418 = vld [vmem:[#allocation8 + $0x10] sm:$0xff]
      %v3419 = vld [vmem:[#allocation8 + $0x18] sm:$0xff]
      %v3420 = vld [vmem:[#allocation8 + $0x20] sm:$0xff]
      %v3421 = vld [vmem:[#allocation8 + $0x28] sm:$0xff]
      %v3422 = vld [vmem:[#allocation8 + $0x30] sm:$0xff]
      %v3423 = vld [vmem:[#allocation8 + $0x38] sm:$0xff]
      %v3424 = vld [vmem:[#allocation8 + $0x40] sm:$0xff]
      %v3425 = vld [vmem:[#allocation8 + $0x48] sm:$0xff]
      %v3426 = vld [vmem:[#allocation8 + $0x50] sm:$0xff]
      %v3427 = vld [vmem:[#allocation8 + $0x58] sm:$0xff]
      %v3428 = vld [vmem:[#allocation8 + $0x60] sm:$0xff]
      %v3429 = vld [vmem:[#allocation8 + $0x68] sm:$0xff]
      %v3430 = vld [vmem:[#allocation8 + $0x70] sm:$0xff]
      %v3431 = vld [vmem:[#allocation8 + $0x78] sm:$0xff]
      %v3432 = vld [vmem:[#allocation8 + $0x80] sm:$0xff]
      %v3433 = vld [vmem:[#allocation8 + $0x88] sm:$0xff]
      %v3434 = vld [vmem:[#allocation8 + $0x90] sm:$0xff]
      %v3435 = vld [vmem:[#allocation8 + $0x98] sm:$0xff]
      %v3436 = vld [vmem:[#allocation8 + $0xa0] sm:$0xff]
      %v3437 = vld [vmem:[#allocation8 + $0xa8] sm:$0xff]
      %v3438 = vld [vmem:[#allocation8 + $0xb0] sm:$0xff]
      %v3439 = vld [vmem:[#allocation8 + $0xb8] sm:$0xff]
      %v3440 = vld [vmem:[#allocation8 + $0xc0] sm:$0xff]
      %v3441 = vld [vmem:[#allocation8 + $0xc8] sm:$0xff]
      %v3442 = vld [vmem:[#allocation8 + $0xd0] sm:$0xff]
      %v3443 = vld [vmem:[#allocation8 + $0xd8] sm:$0xff]
      %v3444 = vld [vmem:[#allocation8 + $0xe0] sm:$0xff]
      %v3445 = vld [vmem:[#allocation8 + $0xe8] sm:$0xff]
      %v3446 = vld [vmem:[#allocation8 + $0xf0] sm:$0xff]
      %v3447 = vld [vmem:[#allocation8 + $0xf8] sm:$0xff]
      %v3448 = vld [vmem:[#allocation8 + $0x100] sm:$0xff]
      %v3449 = vld [vmem:[#allocation8 + $0x108] sm:$0xff]
      %v3450 = vld [vmem:[#allocation8 + $0x110] sm:$0xff]
      %v3451 = vld [vmem:[#allocation8 + $0x118] sm:$0xff]
      %v3452 = vld [vmem:[#allocation8 + $0x120] sm:$0xff]
      %v3453 = vld [vmem:[#allocation8 + $0x128] sm:$0xff]
      %v3454 = vld [vmem:[#allocation8 + $0x130] sm:$0xff]
      %v3455 = vld [vmem:[#allocation8 + $0x138] sm:$0xff]
      %v3456 = vld [vmem:[#allocation8 + $0x140] sm:$0xff]
      %v3457 = vld [vmem:[#allocation8 + $0x148] sm:$0xff]
      %v3458 = vld [vmem:[#allocation8 + $0x150] sm:$0xff]
      %v3459 = vld [vmem:[#allocation8 + $0x158] sm:$0xff]
      %v3460 = vld [vmem:[#allocation8 + $0x160] sm:$0xff]
      %v3461 = vld [vmem:[#allocation8 + $0x168] sm:$0xff]
      %v3462 = vld [vmem:[#allocation8 + $0x170] sm:$0xff]
      %v3463 = vld [vmem:[#allocation8 + $0x178] sm:$0xff]
      %v3464 = vld [vmem:[#allocation8 + $0x180] sm:$0xff]
      %v3465 = vld [vmem:[#allocation8 + $0x188] sm:$0xff]
      %v3466 = vld [vmem:[#allocation8 + $0x190] sm:$0xff]
      %v3467 = vld [vmem:[#allocation8 + $0x198] sm:$0xff]
      %v3468 = vld [vmem:[#allocation8 + $0x1a0] sm:$0xff]
      %v3469 = vld [vmem:[#allocation8 + $0x1a8] sm:$0xff]
      %v3470 = vld [vmem:[#allocation8 + $0x1b0] sm:$0xff]
      %v3471 = vld [vmem:[#allocation8 + $0x1b8] sm:$0xff]
      %v3472 = vld [vmem:[#allocation8 + $0x1c0] sm:$0xff]
      %v3473 = vld [vmem:[#allocation8 + $0x1c8] sm:$0xff]
      %v3474 = vld [vmem:[#allocation8 + $0x1d0] sm:$0xff]
      %v3475 = vld [vmem:[#allocation8 + $0x1d8] sm:$0xff]
      %v3476 = vld [vmem:[#allocation8 + $0x1e0] sm:$0xff]
      %v3477 = vld [vmem:[#allocation8 + $0x1e8] sm:$0xff]
      %v3478 = vld [vmem:[#allocation8 + $0x1f0] sm:$0xff]
      %v3479 = vld [vmem:[#allocation8 + $0x1f8] sm:$0xff]
      %v3480 = vld [vmem:[#allocation8 + $0x200] sm:$0xff]
      %v3481 = vld [vmem:[#allocation8 + $0x208] sm:$0xff]
      %v3482 = vld [vmem:[#allocation8 + $0x210] sm:$0xff]
      %v3483 = vld [vmem:[#allocation8 + $0x218] sm:$0xff]
      %v3484 = vld [vmem:[#allocation8 + $0x220] sm:$0xff]
      %v3485 = vld [vmem:[#allocation8 + $0x228] sm:$0xff]
      %v3486 = vld [vmem:[#allocation8 + $0x230] sm:$0xff]
      %v3487 = vld [vmem:[#allocation8 + $0x238] sm:$0xff]
      %v3488 = vld [vmem:[#allocation8 + $0x240] sm:$0xff]
      %v3489 = vld [vmem:[#allocation8 + $0x248] sm:$0xff]
      %v3490 = vld [vmem:[#allocation8 + $0x250] sm:$0xff]
      %v3491 = vld [vmem:[#allocation8 + $0x258] sm:$0xff]
      %v3492 = vld [vmem:[#allocation8 + $0x260] sm:$0xff]
      %v3493 = vld [vmem:[#allocation8 + $0x268] sm:$0xff]
      %v3494 = vld [vmem:[#allocation8 + $0x270] sm:$0xff]
      %v3495 = vld [vmem:[#allocation8 + $0x278] sm:$0xff]
      %v3496 = vld [vmem:[#allocation8 + $0x280] sm:$0xff]
      %v3497 = vld [vmem:[#allocation8 + $0x288] sm:$0xff]
      %v3498 = vld [vmem:[#allocation8 + $0x290] sm:$0xff]
      %v3499 = vld [vmem:[#allocation8 + $0x298] sm:$0xff]
      %v3500 = vld [vmem:[#allocation8 + $0x2a0] sm:$0xff]
      %v3501 = vld [vmem:[#allocation8 + $0x2a8] sm:$0xff]
      %v3502 = vld [vmem:[#allocation8 + $0x2b0] sm:$0xff]
      %v3503 = vld [vmem:[#allocation8 + $0x2b8] sm:$0xff]
      %v3504 = vld [vmem:[#allocation8 + $0x2c0] sm:$0xff]
      %v3505 = vld [vmem:[#allocation8 + $0x2c8] sm:$0xff]
      %v3506 = vld [vmem:[#allocation8 + $0x2d0] sm:$0xff]
      %v3507 = vld [vmem:[#allocation8 + $0x2d8] sm:$0xff]
      %v3508 = vld [vmem:[#allocation8 + $0x2e0] sm:$0xff]
      %v3509 = vld [vmem:[#allocation8 + $0x2e8] sm:$0xff]
      %v3510 = vld [vmem:[#allocation8 + $0x2f0] sm:$0xff]
      %v3511 = vld [vmem:[#allocation8 + $0x2f8] sm:$0xff]
      %v3512 = vld [vmem:[#allocation8 + $0x300] sm:$0xff]
      %v3513 = vld [vmem:[#allocation8 + $0x308] sm:$0xff]
      %v3514 = vld [vmem:[#allocation8 + $0x310] sm:$0xff]
      %v3515 = vld [vmem:[#allocation8 + $0x318] sm:$0xff]
      %v3516 = vld [vmem:[#allocation8 + $0x320] sm:$0xff]
      %v3517 = vld [vmem:[#allocation8 + $0x328] sm:$0xff]
      %v3518 = vld [vmem:[#allocation8 + $0x330] sm:$0xff]
      %v3519 = vld [vmem:[#allocation8 + $0x338] sm:$0xff]
      %v3520 = vld [vmem:[#allocation8 + $0x340] sm:$0xff]
      %v3521 = vld [vmem:[#allocation8 + $0x348] sm:$0xff]
      %v3522 = vld [vmem:[#allocation8 + $0x350] sm:$0xff]
      %v3523 = vld [vmem:[#allocation8 + $0x358] sm:$0xff]
      %v3524 = vld [vmem:[#allocation8 + $0x360] sm:$0xff]
      %v3525 = vld [vmem:[#allocation8 + $0x368] sm:$0xff]
      %v3526 = vld [vmem:[#allocation8 + $0x370] sm:$0xff]
      %v3527 = vld [vmem:[#allocation8 + $0x378] sm:$0xff]
      %v3528 = vld [vmem:[#allocation8 + $0x380] sm:$0xff]
      %v3529 = vld [vmem:[#allocation8 + $0x388] sm:$0xff]
      %v3530 = vld [vmem:[#allocation8 + $0x390] sm:$0xff]
      %v3531 = vld [vmem:[#allocation8 + $0x398] sm:$0xff]
      %v3532 = vld [vmem:[#allocation8 + $0x3a0] sm:$0xff]
      %v3533 = vld [vmem:[#allocation8 + $0x3a8] sm:$0xff]
      %v3534 = vld [vmem:[#allocation8 + $0x3b0] sm:$0xff]
      %v3535 = vld [vmem:[#allocation8 + $0x3b8] sm:$0xff]
      %v3536 = vld [vmem:[#allocation8 + $0x3c0] sm:$0xff]
      %v3537 = vld [vmem:[#allocation8 + $0x3c8] sm:$0xff]
      %v3538 = vld [vmem:[#allocation8 + $0x3d0] sm:$0xff]
      %v3539 = vld [vmem:[#allocation8 + $0x3d8] sm:$0xff]
      %v3540 = vld [vmem:[#allocation8 + $0x3e0] sm:$0xff]
      %v3541 = vld [vmem:[#allocation8 + $0x3e8] sm:$0xff]
      %v3542 = vld [vmem:[#allocation8 + $0x3f0] sm:$0xff]
      %v3543 = vld [vmem:[#allocation8 + $0x3f8] sm:$0xff]
      %v3544 = vld [vmem:[%s4] sm:$0xf]
      %v3546 = vlaneseq
      %v3547 = vshrl.u32 %v3546, 7
      %v3548 = vsub.s32 0, %v3547
      %v3549 = vrot.slane %v3544, %v3548
      %v3550 = vlaneseq
      %v3551 = vshrl.u32 %v3550, 7
      %v3552 = vsub.s32 1, %v3551
      %v3553 = vrot.slane %v3544, %v3552
      %v3554 = vlaneseq
      %v3555 = vshrl.u32 %v3554, 7
      %v3556 = vsub.s32 2, %v3555
      %v3557 = vrot.slane %v3544, %v3556
      %v3558 = vlaneseq
      %v3559 = vshrl.u32 %v3558, 7
      %v3560 = vsub.s32 3, %v3559
      %v3561 = vrot.slane %v3544, %v3560
      %v3694 = vunpack.c.l.b16 %v3416
      %v3695 = vunpack.c.h.b16 %v3416
      %v3696 = vunpack.c.l.b16 %v3417
      %v3697 = vunpack.c.h.b16 %v3417
      %v3698 = vunpack.c.l.b16 %v3418
      %v3699 = vunpack.c.h.b16 %v3418
      %v3700 = vunpack.c.l.b16 %v3419
      %v3701 = vunpack.c.h.b16 %v3419
      %v3702 = vunpack.c.l.b16 %v3420
      %v3703 = vunpack.c.h.b16 %v3420
      %v3704 = vunpack.c.l.b16 %v3421
      %v3705 = vunpack.c.h.b16 %v3421
      %v3706 = vunpack.c.l.b16 %v3422
      %v3707 = vunpack.c.h.b16 %v3422
      %v3708 = vunpack.c.l.b16 %v3423
      %v3709 = vunpack.c.h.b16 %v3423
      %v3710 = vunpack.c.l.b16 %v3424
      %v3711 = vunpack.c.h.b16 %v3424
      %v3712 = vunpack.c.l.b16 %v3425
      %v3713 = vunpack.c.h.b16 %v3425
      %v3714 = vunpack.c.l.b16 %v3426
      %v3715 = vunpack.c.h.b16 %v3426
      %v3716 = vunpack.c.l.b16 %v3427
      %v3717 = vunpack.c.h.b16 %v3427
      %v3718 = vunpack.c.l.b16 %v3428
      %v3719 = vunpack.c.h.b16 %v3428
      %v3720 = vunpack.c.l.b16 %v3429
      %v3721 = vunpack.c.h.b16 %v3429
      %v3722 = vunpack.c.l.b16 %v3430
      %v3723 = vunpack.c.h.b16 %v3430
      %v3724 = vunpack.c.l.b16 %v3431
      %v3725 = vunpack.c.h.b16 %v3431
      %v3726 = vunpack.c.l.b16 %v3432
      %v3727 = vunpack.c.h.b16 %v3432
      %v3728 = vunpack.c.l.b16 %v3433
      %v3729 = vunpack.c.h.b16 %v3433
      %v3730 = vunpack.c.l.b16 %v3434
      %v3731 = vunpack.c.h.b16 %v3434
      %v3732 = vunpack.c.l.b16 %v3435
      %v3733 = vunpack.c.h.b16 %v3435
      %v3734 = vunpack.c.l.b16 %v3436
      %v3735 = vunpack.c.h.b16 %v3436
      %v3736 = vunpack.c.l.b16 %v3437
      %v3737 = vunpack.c.h.b16 %v3437
      %v3738 = vunpack.c.l.b16 %v3438
      %v3739 = vunpack.c.h.b16 %v3438
      %v3740 = vunpack.c.l.b16 %v3439
      %v3741 = vunpack.c.h.b16 %v3439
      %v3742 = vunpack.c.l.b16 %v3440
      %v3743 = vunpack.c.h.b16 %v3440
      %v3744 = vunpack.c.l.b16 %v3441
      %v3745 = vunpack.c.h.b16 %v3441
      %v3746 = vunpack.c.l.b16 %v3442
      %v3747 = vunpack.c.h.b16 %v3442
      %v3748 = vunpack.c.l.b16 %v3443
      %v3749 = vunpack.c.h.b16 %v3443
      %v3750 = vunpack.c.l.b16 %v3444
      %v3751 = vunpack.c.h.b16 %v3444
      %v3752 = vunpack.c.l.b16 %v3445
      %v3753 = vunpack.c.h.b16 %v3445
      %v3754 = vunpack.c.l.b16 %v3446
      %v3755 = vunpack.c.h.b16 %v3446
      %v3756 = vunpack.c.l.b16 %v3447
      %v3757 = vunpack.c.h.b16 %v3447
      %v3758 = vunpack.c.l.b16 %v3448
      %v3759 = vunpack.c.h.b16 %v3448
      %v3760 = vunpack.c.l.b16 %v3449
      %v3761 = vunpack.c.h.b16 %v3449
      %v3762 = vunpack.c.l.b16 %v3450
      %v3763 = vunpack.c.h.b16 %v3450
      %v3764 = vunpack.c.l.b16 %v3451
      %v3765 = vunpack.c.h.b16 %v3451
      %v3766 = vunpack.c.l.b16 %v3452
      %v3767 = vunpack.c.h.b16 %v3452
      %v3768 = vunpack.c.l.b16 %v3453
      %v3769 = vunpack.c.h.b16 %v3453
      %v3770 = vunpack.c.l.b16 %v3454
      %v3771 = vunpack.c.h.b16 %v3454
      %v3772 = vunpack.c.l.b16 %v3455
      %v3773 = vunpack.c.h.b16 %v3455
      %v3774 = vunpack.c.l.b16 %v3456
      %v3775 = vunpack.c.h.b16 %v3456
      %v3776 = vunpack.c.l.b16 %v3457
      %v3777 = vunpack.c.h.b16 %v3457
      %v3778 = vunpack.c.l.b16 %v3458
      %v3779 = vunpack.c.h.b16 %v3458
      %v3780 = vunpack.c.l.b16 %v3459
      %v3781 = vunpack.c.h.b16 %v3459
      %v3782 = vunpack.c.l.b16 %v3460
      %v3783 = vunpack.c.h.b16 %v3460
      %v3784 = vunpack.c.l.b16 %v3461
      %v3785 = vunpack.c.h.b16 %v3461
      %v3786 = vunpack.c.l.b16 %v3462
      %v3787 = vunpack.c.h.b16 %v3462
      %v3788 = vunpack.c.l.b16 %v3463
      %v3789 = vunpack.c.h.b16 %v3463
      %v3790 = vunpack.c.l.b16 %v3464
      %v3791 = vunpack.c.h.b16 %v3464
      %v3792 = vunpack.c.l.b16 %v3465
      %v3793 = vunpack.c.h.b16 %v3465
      %v3794 = vunpack.c.l.b16 %v3466
      %v3795 = vunpack.c.h.b16 %v3466
      %v3796 = vunpack.c.l.b16 %v3467
      %v3797 = vunpack.c.h.b16 %v3467
      %v3798 = vunpack.c.l.b16 %v3468
      %v3799 = vunpack.c.h.b16 %v3468
      %v3800 = vunpack.c.l.b16 %v3469
      %v3801 = vunpack.c.h.b16 %v3469
      %v3802 = vunpack.c.l.b16 %v3470
      %v3803 = vunpack.c.h.b16 %v3470
      %v3804 = vunpack.c.l.b16 %v3471
      %v3805 = vunpack.c.h.b16 %v3471
      %v3806 = vunpack.c.l.b16 %v3472
      %v3807 = vunpack.c.h.b16 %v3472
      %v3808 = vunpack.c.l.b16 %v3473
      %v3809 = vunpack.c.h.b16 %v3473
      %v3810 = vunpack.c.l.b16 %v3474
      %v3811 = vunpack.c.h.b16 %v3474
      %v3812 = vunpack.c.l.b16 %v3475
      %v3813 = vunpack.c.h.b16 %v3475
      %v3814 = vunpack.c.l.b16 %v3476
      %v3815 = vunpack.c.h.b16 %v3476
      %v3816 = vunpack.c.l.b16 %v3477
      %v3817 = vunpack.c.h.b16 %v3477
      %v3818 = vunpack.c.l.b16 %v3478
      %v3819 = vunpack.c.h.b16 %v3478
      %v3820 = vunpack.c.l.b16 %v3479
      %v3821 = vunpack.c.h.b16 %v3479
      %v3822 = vunpack.c.l.b16 %v3480
      %v3823 = vunpack.c.h.b16 %v3480
      %v3824 = vunpack.c.l.b16 %v3481
      %v3825 = vunpack.c.h.b16 %v3481
      %v3826 = vunpack.c.l.b16 %v3482
      %v3827 = vunpack.c.h.b16 %v3482
      %v3828 = vunpack.c.l.b16 %v3483
      %v3829 = vunpack.c.h.b16 %v3483
      %v3830 = vunpack.c.l.b16 %v3484
      %v3831 = vunpack.c.h.b16 %v3484
      %v3832 = vunpack.c.l.b16 %v3485
      %v3833 = vunpack.c.h.b16 %v3485
      %v3834 = vunpack.c.l.b16 %v3486
      %v3835 = vunpack.c.h.b16 %v3486
      %v3836 = vunpack.c.l.b16 %v3487
      %v3837 = vunpack.c.h.b16 %v3487
      %v3838 = vunpack.c.l.b16 %v3488
      %v3839 = vunpack.c.h.b16 %v3488
      %v3840 = vunpack.c.l.b16 %v3489
      %v3841 = vunpack.c.h.b16 %v3489
      %v3842 = vunpack.c.l.b16 %v3490
      %v3843 = vunpack.c.h.b16 %v3490
      %v3844 = vunpack.c.l.b16 %v3491
      %v3845 = vunpack.c.h.b16 %v3491
      %v3846 = vunpack.c.l.b16 %v3492
      %v3847 = vunpack.c.h.b16 %v3492
      %v3848 = vunpack.c.l.b16 %v3493
      %v3849 = vunpack.c.h.b16 %v3493
      %v3850 = vunpack.c.l.b16 %v3494
      %v3851 = vunpack.c.h.b16 %v3494
      %v3852 = vunpack.c.l.b16 %v3495
      %v3853 = vunpack.c.h.b16 %v3495
      %v3854 = vunpack.c.l.b16 %v3496
      %v3855 = vunpack.c.h.b16 %v3496
      %v3856 = vunpack.c.l.b16 %v3497
      %v3857 = vunpack.c.h.b16 %v3497
      %v3858 = vunpack.c.l.b16 %v3498
      %v3859 = vunpack.c.h.b16 %v3498
      %v3860 = vunpack.c.l.b16 %v3499
      %v3861 = vunpack.c.h.b16 %v3499
      %v3862 = vunpack.c.l.b16 %v3500
      %v3863 = vunpack.c.h.b16 %v3500
      %v3864 = vunpack.c.l.b16 %v3501
      %v3865 = vunpack.c.h.b16 %v3501
      %v3866 = vunpack.c.l.b16 %v3502
      %v3867 = vunpack.c.h.b16 %v3502
      %v3868 = vunpack.c.l.b16 %v3503
      %v3869 = vunpack.c.h.b16 %v3503
      %v3870 = vunpack.c.l.b16 %v3504
      %v3871 = vunpack.c.h.b16 %v3504
      %v3872 = vunpack.c.l.b16 %v3505
      %v3873 = vunpack.c.h.b16 %v3505
      %v3874 = vunpack.c.l.b16 %v3506
      %v3875 = vunpack.c.h.b16 %v3506
      %v3876 = vunpack.c.l.b16 %v3507
      %v3877 = vunpack.c.h.b16 %v3507
      %v3878 = vunpack.c.l.b16 %v3508
      %v3879 = vunpack.c.h.b16 %v3508
      %v3880 = vunpack.c.l.b16 %v3509
      %v3881 = vunpack.c.h.b16 %v3509
      %v3882 = vunpack.c.l.b16 %v3510
      %v3883 = vunpack.c.h.b16 %v3510
      %v3884 = vunpack.c.l.b16 %v3511
      %v3885 = vunpack.c.h.b16 %v3511
      %v3886 = vunpack.c.l.b16 %v3512
      %v3887 = vunpack.c.h.b16 %v3512
      %v3888 = vunpack.c.l.b16 %v3513
      %v3889 = vunpack.c.h.b16 %v3513
      %v3890 = vunpack.c.l.b16 %v3514
      %v3891 = vunpack.c.h.b16 %v3514
      %v3892 = vunpack.c.l.b16 %v3515
      %v3893 = vunpack.c.h.b16 %v3515
      %v3894 = vunpack.c.l.b16 %v3516
      %v3895 = vunpack.c.h.b16 %v3516
      %v3896 = vunpack.c.l.b16 %v3517
      %v3897 = vunpack.c.h.b16 %v3517
      %v3898 = vunpack.c.l.b16 %v3518
      %v3899 = vunpack.c.h.b16 %v3518
      %v3900 = vunpack.c.l.b16 %v3519
      %v3901 = vunpack.c.h.b16 %v3519
      %v3902 = vunpack.c.l.b16 %v3520
      %v3903 = vunpack.c.h.b16 %v3520
      %v3904 = vunpack.c.l.b16 %v3521
      %v3905 = vunpack.c.h.b16 %v3521
      %v3906 = vunpack.c.l.b16 %v3522
      %v3907 = vunpack.c.h.b16 %v3522
      %v3908 = vunpack.c.l.b16 %v3523
      %v3909 = vunpack.c.h.b16 %v3523
      %v3910 = vunpack.c.l.b16 %v3524
      %v3911 = vunpack.c.h.b16 %v3524
      %v3912 = vunpack.c.l.b16 %v3525
      %v3913 = vunpack.c.h.b16 %v3525
      %v3914 = vunpack.c.l.b16 %v3526
      %v3915 = vunpack.c.h.b16 %v3526
      %v3916 = vunpack.c.l.b16 %v3527
      %v3917 = vunpack.c.h.b16 %v3527
      %v3918 = vunpack.c.l.b16 %v3528
      %v3919 = vunpack.c.h.b16 %v3528
      %v3920 = vunpack.c.l.b16 %v3529
      %v3921 = vunpack.c.h.b16 %v3529
      %v3922 = vunpack.c.l.b16 %v3530
      %v3923 = vunpack.c.h.b16 %v3530
      %v3924 = vunpack.c.l.b16 %v3531
      %v3925 = vunpack.c.h.b16 %v3531
      %v3926 = vunpack.c.l.b16 %v3532
      %v3927 = vunpack.c.h.b16 %v3532
      %v3928 = vunpack.c.l.b16 %v3533
      %v3929 = vunpack.c.h.b16 %v3533
      %v3930 = vunpack.c.l.b16 %v3534
      %v3931 = vunpack.c.h.b16 %v3534
      %v3932 = vunpack.c.l.b16 %v3535
      %v3933 = vunpack.c.h.b16 %v3535
      %v3934 = vunpack.c.l.b16 %v3536
      %v3935 = vunpack.c.h.b16 %v3536
      %v3936 = vunpack.c.l.b16 %v3537
      %v3937 = vunpack.c.h.b16 %v3537
      %v3938 = vunpack.c.l.b16 %v3538
      %v3939 = vunpack.c.h.b16 %v3538
      %v3940 = vunpack.c.l.b16 %v3539
      %v3941 = vunpack.c.h.b16 %v3539
      %v3942 = vunpack.c.l.b16 %v3540
      %v3943 = vunpack.c.h.b16 %v3540
      %v3944 = vunpack.c.l.b16 %v3541
      %v3945 = vunpack.c.h.b16 %v3541
      %v3946 = vunpack.c.l.b16 %v3542
      %v3947 = vunpack.c.h.b16 %v3542
      %v3948 = vunpack.c.l.b16 %v3543
      %v3949 = vunpack.c.h.b16 %v3543
      %v3950 = vpack.c.b16 %v3698, %v3694
      %v3951 = vpack.c.b16 %v3699, %v3695
      %v3952 = vpack.c.b16 %v3700, %v3696
      %v3953 = vpack.c.b16 %v3701, %v3697
      %v3954 = vpack.c.b16 %v3706, %v3702
      %v3955 = vpack.c.b16 %v3707, %v3703
      %v3956 = vpack.c.b16 %v3708, %v3704
      %v3957 = vpack.c.b16 %v3709, %v3705
      %v3958 = vpack.c.b16 %v3714, %v3710
      %v3959 = vpack.c.b16 %v3715, %v3711
      %v3960 = vpack.c.b16 %v3716, %v3712
      %v3961 = vpack.c.b16 %v3717, %v3713
      %v3962 = vpack.c.b16 %v3722, %v3718
      %v3963 = vpack.c.b16 %v3723, %v3719
      %v3964 = vpack.c.b16 %v3724, %v3720
      %v3965 = vpack.c.b16 %v3725, %v3721
      %v3966 = vpack.c.b16 %v3730, %v3726
      %v3967 = vpack.c.b16 %v3731, %v3727
      %v3968 = vpack.c.b16 %v3732, %v3728
      %v3969 = vpack.c.b16 %v3733, %v3729
      %v3970 = vpack.c.b16 %v3738, %v3734
      %v3971 = vpack.c.b16 %v3739, %v3735
      %v3972 = vpack.c.b16 %v3740, %v3736
      %v3973 = vpack.c.b16 %v3741, %v3737
      %v3974 = vpack.c.b16 %v3746, %v3742
      %v3975 = vpack.c.b16 %v3747, %v3743
      %v3976 = vpack.c.b16 %v3748, %v3744
      %v3977 = vpack.c.b16 %v3749, %v3745
      %v3978 = vpack.c.b16 %v3754, %v3750
      %v3979 = vpack.c.b16 %v3755, %v3751
      %v3980 = vpack.c.b16 %v3756, %v3752
      %v3981 = vpack.c.b16 %v3757, %v3753
      %v3982 = vpack.c.b16 %v3762, %v3758
      %v3983 = vpack.c.b16 %v3763, %v3759
      %v3984 = vpack.c.b16 %v3764, %v3760
      %v3985 = vpack.c.b16 %v3765, %v3761
      %v3986 = vpack.c.b16 %v3770, %v3766
      %v3987 = vpack.c.b16 %v3771, %v3767
      %v3988 = vpack.c.b16 %v3772, %v3768
      %v3989 = vpack.c.b16 %v3773, %v3769
      %v3990 = vpack.c.b16 %v3778, %v3774
      %v3991 = vpack.c.b16 %v3779, %v3775
      %v3992 = vpack.c.b16 %v3780, %v3776
      %v3993 = vpack.c.b16 %v3781, %v3777
      %v3994 = vpack.c.b16 %v3786, %v3782
      %v3995 = vpack.c.b16 %v3787, %v3783
      %v3996 = vpack.c.b16 %v3788, %v3784
      %v3997 = vpack.c.b16 %v3789, %v3785
      %v3998 = vpack.c.b16 %v3794, %v3790
      %v3999 = vpack.c.b16 %v3795, %v3791
      %v4000 = vpack.c.b16 %v3796, %v3792
      %v4001 = vpack.c.b16 %v3797, %v3793
      %v4002 = vpack.c.b16 %v3802, %v3798
      %v4003 = vpack.c.b16 %v3803, %v3799
      %v4004 = vpack.c.b16 %v3804, %v3800
      %v4005 = vpack.c.b16 %v3805, %v3801
      %v4006 = vpack.c.b16 %v3810, %v3806
      %v4007 = vpack.c.b16 %v3811, %v3807
      %v4008 = vpack.c.b16 %v3812, %v3808
      %v4009 = vpack.c.b16 %v3813, %v3809
      %v4010 = vpack.c.b16 %v3818, %v3814
      %v4011 = vpack.c.b16 %v3819, %v3815
      %v4012 = vpack.c.b16 %v3820, %v3816
      %v4013 = vpack.c.b16 %v3821, %v3817
      %v4014 = vpack.c.b16 %v3826, %v3822
      %v4015 = vpack.c.b16 %v3827, %v3823
      %v4016 = vpack.c.b16 %v3828, %v3824
      %v4017 = vpack.c.b16 %v3829, %v3825
      %v4018 = vpack.c.b16 %v3834, %v3830
      %v4019 = vpack.c.b16 %v3835, %v3831
      %v4020 = vpack.c.b16 %v3836, %v3832
      %v4021 = vpack.c.b16 %v3837, %v3833
      %v4022 = vpack.c.b16 %v3842, %v3838
      %v4023 = vpack.c.b16 %v3843, %v3839
      %v4024 = vpack.c.b16 %v3844, %v3840
      %v4025 = vpack.c.b16 %v3845, %v3841
      %v4026 = vpack.c.b16 %v3850, %v3846
      %v4027 = vpack.c.b16 %v3851, %v3847
      %v4028 = vpack.c.b16 %v3852, %v3848
      %v4029 = vpack.c.b16 %v3853, %v3849
      %v4030 = vpack.c.b16 %v3858, %v3854
      %v4031 = vpack.c.b16 %v3859, %v3855
      %v4032 = vpack.c.b16 %v3860, %v3856
      %v4033 = vpack.c.b16 %v3861, %v3857
      %v4034 = vpack.c.b16 %v3866, %v3862
      %v4035 = vpack.c.b16 %v3867, %v3863
      %v4036 = vpack.c.b16 %v3868, %v3864
      %v4037 = vpack.c.b16 %v3869, %v3865
      %v4038 = vpack.c.b16 %v3874, %v3870
      %v4039 = vpack.c.b16 %v3875, %v3871
      %v4040 = vpack.c.b16 %v3876, %v3872
      %v4041 = vpack.c.b16 %v3877, %v3873
      %v4042 = vpack.c.b16 %v3882, %v3878
      %v4043 = vpack.c.b16 %v3883, %v3879
      %v4044 = vpack.c.b16 %v3884, %v3880
      %v4045 = vpack.c.b16 %v3885, %v3881
      %v4046 = vpack.c.b16 %v3890, %v3886
      %v4047 = vpack.c.b16 %v3891, %v3887
      %v4048 = vpack.c.b16 %v3892, %v3888
      %v4049 = vpack.c.b16 %v3893, %v3889
      %v4050 = vpack.c.b16 %v3898, %v3894
      %v4051 = vpack.c.b16 %v3899, %v3895
      %v4052 = vpack.c.b16 %v3900, %v3896
      %v4053 = vpack.c.b16 %v3901, %v3897
      %v4054 = vpack.c.b16 %v3906, %v3902
      %v4055 = vpack.c.b16 %v3907, %v3903
      %v4056 = vpack.c.b16 %v3908, %v3904
      %v4057 = vpack.c.b16 %v3909, %v3905
      %v4058 = vpack.c.b16 %v3914, %v3910
      %v4059 = vpack.c.b16 %v3915, %v3911
      %v4060 = vpack.c.b16 %v3916, %v3912
      %v4061 = vpack.c.b16 %v3917, %v3913
      %v4062 = vpack.c.b16 %v3922, %v3918
      %v4063 = vpack.c.b16 %v3923, %v3919
      %v4064 = vpack.c.b16 %v3924, %v3920
      %v4065 = vpack.c.b16 %v3925, %v3921
      %v4066 = vpack.c.b16 %v3930, %v3926
      %v4067 = vpack.c.b16 %v3931, %v3927
      %v4068 = vpack.c.b16 %v3932, %v3928
      %v4069 = vpack.c.b16 %v3933, %v3929
      %v4070 = vpack.c.b16 %v3938, %v3934
      %v4071 = vpack.c.b16 %v3939, %v3935
      %v4072 = vpack.c.b16 %v3940, %v3936
      %v4073 = vpack.c.b16 %v3941, %v3937
      %v4074 = vpack.c.b16 %v3946, %v3942
      %v4075 = vpack.c.b16 %v3947, %v3943
      %v4076 = vpack.c.b16 %v3948, %v3944
      %v4077 = vpack.c.b16 %v3949, %v3945
      %4206 = vmatprep.subr.bf16.mxu0 %v3951
      %4207 = vmatpush1.bf16.msra.mxu0 %v3950
      %4208 = vmatprep.subr.bf16.mxu0 %v3955
      %4209 = vmatpush1.bf16.msra.mxu0 %v3954
      %4210 = vmatprep.subr.bf16.mxu0 %v3959
      %4211 = vmatpush1.bf16.msra.mxu0 %v3958
      %4212 = vmatprep.subr.bf16.mxu0 %v3963
      %4213 = vmatpush1.bf16.msra.mxu0 %v3962
      %4214 = vmatprep.subr.bf16.mxu0 %v3967
      %4215 = vmatpush1.bf16.msra.mxu0 %v3966
      %4216 = vmatprep.subr.bf16.mxu0 %v3971
      %4217 = vmatpush1.bf16.msra.mxu0 %v3970
      %4218 = vmatprep.subr.bf16.mxu0 %v3975
      %4219 = vmatpush1.bf16.msra.mxu0 %v3974
      %4220 = vmatprep.subr.bf16.mxu0 %v3979
      %4221 = vmatpush1.bf16.msra.mxu0 %v3978
      %4222 = vmatprep.subr.bf16.mxu0 %v3983
      %4223 = vmatpush1.bf16.msra.mxu0 %v3982
      %4224 = vmatprep.subr.bf16.mxu0 %v3987
      %4225 = vmatpush1.bf16.msra.mxu0 %v3986
      %4226 = vmatprep.subr.bf16.mxu0 %v3991
      %4227 = vmatpush1.bf16.msra.mxu0 %v3990
      %4228 = vmatprep.subr.bf16.mxu0 %v3995
      %4229 = vmatpush1.bf16.msra.mxu0 %v3994
      %4230 = vmatprep.subr.bf16.mxu0 %v3999
      %4231 = vmatpush1.bf16.msra.mxu0 %v3998
      %4232 = vmatprep.subr.bf16.mxu0 %v4003
      %4233 = vmatpush1.bf16.msra.mxu0 %v4002
      %4234 = vmatprep.subr.bf16.mxu0 %v4007
      %4235 = vmatpush1.bf16.msra.mxu0 %v4006
      %4236 = vmatprep.subr.bf16.mxu0 %v4011
      %4237 = vmatpush1.bf16.msra.mxu0 %v4010
      %4238 = vmatprep.mubr.bf16.mxu0 %v3385
      %4239 = vmatmul.mubr.bf16.gmra.mrb[0].mxu0 %v3384
      %v4240 = vpop.f32.mrb[0].mxu0
      %v4241 = vadd.f32 %v3549, %v4240
      %v4242 = vpop.f32.mrb[0].mxu0
      %v4243 = vadd.f32 %v3553, %v4242
      %v4244 = vpop.f32.mrb[0].mxu0
      %v4245 = vadd.f32 %v3549, %v4244
      %v4246 = vpop.f32.mrb[0].mxu0
      %v4247 = vadd.f32 %v3553, %v4246
      %4248 = vmatprep.mubr.bf16.mxu0 %v3389
      %4249 = vmatmul.mubr.bf16.gmra.mrb[0].mxu0 %v3388
      %v4250 = vpop.f32.mrb[0].mxu0
      %v4251 = vadd.f32 %v3549, %v4250
      %v4252 = vpop.f32.mrb[0].mxu0
      %v4253 = vadd.f32 %v3553, %v4252
      %v4254 = vpop.f32.mrb[0].mxu0
      %v4255 = vadd.f32 %v3549, %v4254
      %v4256 = vpop.f32.mrb[0].mxu0
      %v4257 = vadd.f32 %v3553, %v4256
      %4258 = vmatprep.mubr.bf16.mxu0 %v3393
      %4259 = vmatmul.mubr.bf16.gmra.mrb[0].mxu0 %v3392
      %v4260 = vpop.f32.mrb[0].mxu0
      %v4261 = vadd.f32 %v3549, %v4260
      %v4262 = vpop.f32.mrb[0].mxu0
      %v4263 = vadd.f32 %v3553, %v4262
      %v4264 = vpop.f32.mrb[0].mxu0
      %v4265 = vadd.f32 %v3549, %v4264
      %v4266 = vpop.f32.mrb[0].mxu0
      %v4267 = vadd.f32 %v3553, %v4266
      %4268 = vmatprep.mubr.bf16.mxu0 %v3397
      %4269 = vmatmul.mubr.bf16.gmra.mrb[0].mxu0 %v3396
      %v4270 = vpop.f32.mrb[0].mxu0
      %v4271 = vadd.f32 %v3549, %v4270
      %v4272 = vpop.f32.mrb[0].mxu0
      %v4273 = vadd.f32 %v3553, %v4272
      %v4274 = vpop.f32.mrb[0].mxu0
      %v4275 = vadd.f32 %v3549, %v4274
      %v4276 = vpop.f32.mrb[0].mxu0
      %v4277 = vadd.f32 %v3553, %v4276
      %4278 = vmatprep.mubr.bf16.mxu0 %v3401
      %4279 = vmatmul.mubr.bf16.gmra.mrb[0].mxu0 %v3400
      %v4280 = vpop.f32.mrb[0].mxu0
      %v4281 = vadd.f32 %v3549, %v4280
      %v4282 = vpop.f32.mrb[0].mxu0
      %v4283 = vadd.f32 %v3553, %v4282
      %v4284 = vpop.f32.mrb[0].mxu0
      %v4285 = vadd.f32 %v3549, %v4284
      %v4286 = vpop.f32.mrb[0].mxu0
      %v4287 = vadd.f32 %v3553, %v4286
      %4288 = vmatprep.mubr.bf16.mxu0 %v3405
      %4289 = vmatmul.mubr.bf16.gmra.mrb[0].mxu0 %v3404
      %v4290 = vpop.f32.mrb[0].mxu0
      %v4291 = vadd.f32 %v3549, %v4290
      %v4292 = vpop.f32.mrb[0].mxu0
      %v4293 = vadd.f32 %v3553, %v4292
      %v4294 = vpop.f32.mrb[0].mxu0
      %v4295 = vadd.f32 %v3549, %v4294
      %v4296 = vpop.f32.mrb[0].mxu0
      %v4297 = vadd.f32 %v3553, %v4296
      %4298 = vmatprep.mubr.bf16.mxu0 %v3409
      %4299 = vmatmul.mubr.bf16.gmra.mrb[0].mxu0 %v3408
      %v4300 = vpop.f32.mrb[0].mxu0
      %v4301 = vadd.f32 %v3549, %v4300
      %v4302 = vpop.f32.mrb[0].mxu0
      %v4303 = vadd.f32 %v3553, %v4302
      %v4304 = vpop.f32.mrb[0].mxu0
      %v4305 = vadd.f32 %v3549, %v4304
      %v4306 = vpop.f32.mrb[0].mxu0
      %v4307 = vadd.f32 %v3553, %v4306
      %4308 = vmatprep.mubr.bf16.mxu0 %v3413
      %4309 = vmatmul.mubr.bf16.gmra.mrb[0].mxu0 %v3412
      %v4310 = vpop.f32.mrb[0].mxu0
      %v4311 = vadd.f32 %v3549, %v4310
      %v4312 = vpop.f32.mrb[0].mxu0
      %v4313 = vadd.f32 %v3553, %v4312
      %v4314 = vpop.f32.mrb[0].mxu0
      %v4315 = vadd.f32 %v3549, %v4314
      %v4316 = vpop.f32.mrb[0].mxu0
      %v4317 = vadd.f32 %v3553, %v4316
      %4318 = vdwg.mxu0
      %4319 = vmatprep.subr.bf16.mxu0 %v4015
      %4320 = vmatpush1.bf16.msra.mxu0 %v4014
      %4321 = vmatprep.subr.bf16.mxu0 %v4019
      %4322 = vmatpush1.bf16.msra.mxu0 %v4018
      %4323 = vmatprep.subr.bf16.mxu0 %v4023
      %4324 = vmatpush1.bf16.msra.mxu0 %v4022
      %4325 = vmatprep.subr.bf16.mxu0 %v4027
      %4326 = vmatpush1.bf16.msra.mxu0 %v4026
      %4327 = vmatprep.subr.bf16.mxu0 %v4031
      %4328 = vmatpush1.bf16.msra.mxu0 %v4030
      %4329 = vmatprep.subr.bf16.mxu0 %v4035
      %4330 = vmatpush1.bf16.msra.mxu0 %v4034
      %4331 = vmatprep.subr.bf16.mxu0 %v4039
      %4332 = vmatpush1.bf16.msra.mxu0 %v4038
      %4333 = vmatprep.subr.bf16.mxu0 %v4043
      %4334 = vmatpush1.bf16.msra.mxu0 %v4042
      %4335 = vmatprep.subr.bf16.mxu0 %v4047
      %4336 = vmatpush1.bf16.msra.mxu0 %v4046
      %4337 = vmatprep.subr.bf16.mxu0 %v4051
      %4338 = vmatpush1.bf16.msra.mxu0 %v4050
      %4339 = vmatprep.subr.bf16.mxu0 %v4055
      %4340 = vmatpush1.bf16.msra.mxu0 %v4054
      %4341 = vmatprep.subr.bf16.mxu0 %v4059
      %4342 = vmatpush1.bf16.msra.mxu0 %v4058
      %4343 = vmatprep.subr.bf16.mxu0 %v4063
      %4344 = vmatpush1.bf16.msra.mxu0 %v4062
      %4345 = vmatprep.subr.bf16.mxu0 %v4067
      %4346 = vmatpush1.bf16.msra.mxu0 %v4066
      %4347 = vmatprep.subr.bf16.mxu0 %v4071
      %4348 = vmatpush1.bf16.msra.mxu0 %v4070
      %4349 = vmatprep.subr.bf16.mxu0 %v4075
      %4350 = vmatpush1.bf16.msra.mxu0 %v4074
      %4351 = vmatprep.mubr.bf16.mxu0 %v3387
      %4352 = vmatmul.mubr.bf16.gmra.mrb[0].mxu0 %v3386
      %v4353 = vpop.f32.mrb[0].mxu0
      %v4354 = vadd.f32 %v4241, %v4353
      %v4355 = vpop.f32.mrb[0].mxu0
      %v4356 = vadd.f32 %v4243, %v4355
      %v4357 = vpop.f32.mrb[0].mxu0
      %v4358 = vadd.f32 %v4245, %v4357
      %v4359 = vpop.f32.mrb[0].mxu0
      %v4360 = vadd.f32 %v4247, %v4359
      %4361 = vmatprep.mubr.bf16.mxu0 %v3391
      %4362 = vmatmul.mubr.bf16.gmra.mrb[0].mxu0 %v3390
      %v4363 = vpop.f32.mrb[0].mxu0
      %v4364 = vadd.f32 %v4251, %v4363
      %v4365 = vpop.f32.mrb[0].mxu0
      %v4366 = vadd.f32 %v4253, %v4365
      %v4367 = vpop.f32.mrb[0].mxu0
      %v4368 = vadd.f32 %v4255, %v4367
      %v4369 = vpop.f32.mrb[0].mxu0
      %v4370 = vadd.f32 %v4257, %v4369
      %4371 = vmatprep.mubr.bf16.mxu0 %v3395
      %4372 = vmatmul.mubr.bf16.gmra.mrb[0].mxu0 %v3394
      %v4373 = vpop.f32.mrb[0].mxu0
      %v4374 = vadd.f32 %v4261, %v4373
      %v4375 = vpop.f32.mrb[0].mxu0
      %v4376 = vadd.f32 %v4263, %v4375
      %v4377 = vpop.f32.mrb[0].mxu0
      %v4378 = vadd.f32 %v4265, %v4377
      %v4379 = vpop.f32.mrb[0].mxu0
      %v4380 = vadd.f32 %v4267, %v4379
      %4381 = vmatprep.mubr.bf16.mxu0 %v3399
      %4382 = vmatmul.mubr.bf16.gmra.mrb[0].mxu0 %v3398
      %v4383 = vpop.f32.mrb[0].mxu0
      %v4384 = vadd.f32 %v4271, %v4383
      %v4385 = vpop.f32.mrb[0].mxu0
      %v4386 = vadd.f32 %v4273, %v4385
      %v4387 = vpop.f32.mrb[0].mxu0
      %v4388 = vadd.f32 %v4275, %v4387
      %v4389 = vpop.f32.mrb[0].mxu0
      %v4390 = vadd.f32 %v4277, %v4389
      %4391 = vmatprep.mubr.bf16.mxu0 %v3403
      %4392 = vmatmul.mubr.bf16.gmra.mrb[0].mxu0 %v3402
      %v4393 = vpop.f32.mrb[0].mxu0
      %v4394 = vadd.f32 %v4281, %v4393
      %v4395 = vpop.f32.mrb[0].mxu0
      %v4396 = vadd.f32 %v4283, %v4395
      %v4397 = vpop.f32.mrb[0].mxu0
      %v4398 = vadd.f32 %v4285, %v4397
      %v4399 = vpop.f32.mrb[0].mxu0
      %v4400 = vadd.f32 %v4287, %v4399
      %4401 = vmatprep.mubr.bf16.mxu0 %v3407
      %4402 = vmatmul.mubr.bf16.gmra.mrb[0].mxu0 %v3406
      %v4403 = vpop.f32.mrb[0].mxu0
      %v4404 = vadd.f32 %v4291, %v4403
      %v4405 = vpop.f32.mrb[0].mxu0
      %v4406 = vadd.f32 %v4293, %v4405
      %v4407 = vpop.f32.mrb[0].mxu0
      %v4408 = vadd.f32 %v4295, %v4407
      %v4409 = vpop.f32.mrb[0].mxu0
      %v4410 = vadd.f32 %v4297, %v4409
      %4411 = vmatprep.mubr.bf16.mxu0 %v3411
      %4412 = vmatmul.mubr.bf16.gmra.mrb[0].mxu0 %v3410
      %v4413 = vpop.f32.mrb[0].mxu0
      %v4414 = vadd.f32 %v4301, %v4413
      %v4415 = vpop.f32.mrb[0].mxu0
      %v4416 = vadd.f32 %v4303, %v4415
      %v4417 = vpop.f32.mrb[0].mxu0
      %v4418 = vadd.f32 %v4305, %v4417
      %v4419 = vpop.f32.mrb[0].mxu0
      %v4420 = vadd.f32 %v4307, %v4419
      %4421 = vmatprep.mubr.bf16.mxu0 %v3415
      %4422 = vmatmul.mubr.bf16.gmra.mrb[0].mxu0 %v3414
      %v4423 = vpop.f32.mrb[0].mxu0
      %v4424 = vadd.f32 %v4311, %v4423
      %v4425 = vpop.f32.mrb[0].mxu0
      %v4426 = vadd.f32 %v4313, %v4425
      %v4427 = vpop.f32.mrb[0].mxu0
      %v4428 = vadd.f32 %v4315, %v4427
      %v4429 = vpop.f32.mrb[0].mxu0
      %v4430 = vadd.f32 %v4317, %v4429
      %4431 = vdwg.mxu0
      %4432 = vmatprep.subr.bf16.mxu0 %v3953
      %4433 = vmatpush1.bf16.msra.mxu0 %v3952
      %4434 = vmatprep.subr.bf16.mxu0 %v3957
      %4435 = vmatpush1.bf16.msra.mxu0 %v3956
      %4436 = vmatprep.subr.bf16.mxu0 %v3961
      %4437 = vmatpush1.bf16.msra.mxu0 %v3960
      %4438 = vmatprep.subr.bf16.mxu0 %v3965
      %4439 = vmatpush1.bf16.msra.mxu0 %v3964
      %4440 = vmatprep.subr.bf16.mxu0 %v3969
      %4441 = vmatpush1.bf16.msra.mxu0 %v3968
      %4442 = vmatprep.subr.bf16.mxu0 %v3973
      %4443 = vmatpush1.bf16.msra.mxu0 %v3972
      %4444 = vmatprep.subr.bf16.mxu0 %v3977
      %4445 = vmatpush1.bf16.msra.mxu0 %v3976
      %4446 = vmatprep.subr.bf16.mxu0 %v3981
      %4447 = vmatpush1.bf16.msra.mxu0 %v3980
      %4448 = vmatprep.subr.bf16.mxu0 %v3985
      %4449 = vmatpush1.bf16.msra.mxu0 %v3984
      %4450 = vmatprep.subr.bf16.mxu0 %v3989
      %4451 = vmatpush1.bf16.msra.mxu0 %v3988
      %4452 = vmatprep.subr.bf16.mxu0 %v3993
      %4453 = vmatpush1.bf16.msra.mxu0 %v3992
      %4454 = vmatprep.subr.bf16.mxu0 %v3997
      %4455 = vmatpush1.bf16.msra.mxu0 %v3996
      %4456 = vmatprep.subr.bf16.mxu0 %v4001
      %4457 = vmatpush1.bf16.msra.mxu0 %v4000
      %4458 = vmatprep.subr.bf16.mxu0 %v4005
      %4459 = vmatpush1.bf16.msra.mxu0 %v4004
      %4460 = vmatprep.subr.bf16.mxu0 %v4009
      %4461 = vmatpush1.bf16.msra.mxu0 %v4008
      %4462 = vmatprep.subr.bf16.mxu0 %v4013
      %4463 = vmatpush1.bf16.msra.mxu0 %v4012
      %4464 = vmatprep.mubr.bf16.mxu0 %v3385
      %4465 = vmatmul.mubr.bf16.gmra.mrb[0].mxu0 %v3384
      %v4466 = vpop.f32.mrb[0].mxu0
      %v4467 = vadd.f32 %v3557, %v4466
      %v4468 = vpop.f32.mrb[0].mxu0
      %v4469 = vadd.f32 %v3561, %v4468
      %v4470 = vpop.f32.mrb[0].mxu0
      %v4471 = vadd.f32 %v3557, %v4470
      %v4472 = vpop.f32.mrb[0].mxu0
      %v4473 = vadd.f32 %v3561, %v4472
      %4474 = vmatprep.mubr.bf16.mxu0 %v3389
      %4475 = vmatmul.mubr.bf16.gmra.mrb[0].mxu0 %v3388
      %v4476 = vpop.f32.mrb[0].mxu0
      %v4477 = vadd.f32 %v3557, %v4476
      %v4478 = vpop.f32.mrb[0].mxu0
      %v4479 = vadd.f32 %v3561, %v4478
      %v4480 = vpop.f32.mrb[0].mxu0
      %v4481 = vadd.f32 %v3557, %v4480
      %v4482 = vpop.f32.mrb[0].mxu0
      %v4483 = vadd.f32 %v3561, %v4482
      %4484 = vmatprep.mubr.bf16.mxu0 %v3393
      %4485 = vmatmul.mubr.bf16.gmra.mrb[0].mxu0 %v3392
      %v4486 = vpop.f32.mrb[0].mxu0
      %v4487 = vadd.f32 %v3557, %v4486
      %v4488 = vpop.f32.mrb[0].mxu0
      %v4489 = vadd.f32 %v3561, %v4488
      %v4490 = vpop.f32.mrb[0].mxu0
      %v4491 = vadd.f32 %v3557, %v4490
      %v4492 = vpop.f32.mrb[0].mxu0
      %v4493 = vadd.f32 %v3561, %v4492
      %4494 = vmatprep.mubr.bf16.mxu0 %v3397
      %4495 = vmatmul.mubr.bf16.gmra.mrb[0].mxu0 %v3396
      %v4496 = vpop.f32.mrb[0].mxu0
      %v4497 = vadd.f32 %v3557, %v4496
      %v4498 = vpop.f32.mrb[0].mxu0
      %v4499 = vadd.f32 %v3561, %v4498
      %v4500 = vpop.f32.mrb[0].mxu0
      %v4501 = vadd.f32 %v3557, %v4500
      %v4502 = vpop.f32.mrb[0].mxu0
      %v4503 = vadd.f32 %v3561, %v4502
      %4504 = vmatprep.mubr.bf16.mxu0 %v3401
      %4505 = vmatmul.mubr.bf16.gmra.mrb[0].mxu0 %v3400
      %v4506 = vpop.f32.mrb[0].mxu0
      %v4507 = vadd.f32 %v3557, %v4506
      %v4508 = vpop.f32.mrb[0].mxu0
      %v4509 = vadd.f32 %v3561, %v4508
      %v4510 = vpop.f32.mrb[0].mxu0
      %v4511 = vadd.f32 %v3557, %v4510
      %v4512 = vpop.f32.mrb[0].mxu0
      %v4513 = vadd.f32 %v3561, %v4512
      %4514 = vmatprep.mubr.bf16.mxu0 %v3405
      %4515 = vmatmul.mubr.bf16.gmra.mrb[0].mxu0 %v3404
      %v4516 = vpop.f32.mrb[0].mxu0
      %v4517 = vadd.f32 %v3557, %v4516
      %v4518 = vpop.f32.mrb[0].mxu0
      %v4519 = vadd.f32 %v3561, %v4518
      %v4520 = vpop.f32.mrb[0].mxu0
      %v4521 = vadd.f32 %v3557, %v4520
      %v4522 = vpop.f32.mrb[0].mxu0
      %v4523 = vadd.f32 %v3561, %v4522
      %4524 = vmatprep.mubr.bf16.mxu0 %v3409
      %4525 = vmatmul.mubr.bf16.gmra.mrb[0].mxu0 %v3408
      %v4526 = vpop.f32.mrb[0].mxu0
      %v4527 = vadd.f32 %v3557, %v4526
      %v4528 = vpop.f32.mrb[0].mxu0
      %v4529 = vadd.f32 %v3561, %v4528
      %v4530 = vpop.f32.mrb[0].mxu0
      %v4531 = vadd.f32 %v3557, %v4530
      %v4532 = vpop.f32.mrb[0].mxu0
      %v4533 = vadd.f32 %v3561, %v4532
      %4534 = vmatprep.mubr.bf16.mxu0 %v3413
      %4535 = vmatmul.mubr.bf16.gmra.mrb[0].mxu0 %v3412
      %v4536 = vpop.f32.mrb[0].mxu0
      %v4537 = vadd.f32 %v3557, %v4536
      %v4538 = vpop.f32.mrb[0].mxu0
      %v4539 = vadd.f32 %v3561, %v4538
      %v4540 = vpop.f32.mrb[0].mxu0
      %v4541 = vadd.f32 %v3557, %v4540
      %v4542 = vpop.f32.mrb[0].mxu0
      %v4543 = vadd.f32 %v3561, %v4542
      %4544 = vdwg.mxu0
      %4545 = vmatprep.subr.bf16.mxu0 %v4017
      %4546 = vmatpush1.bf16.msra.mxu0 %v4016
      %4547 = vmatprep.subr.bf16.mxu0 %v4021
      %4548 = vmatpush1.bf16.msra.mxu0 %v4020
      %4549 = vmatprep.subr.bf16.mxu0 %v4025
      %4550 = vmatpush1.bf16.msra.mxu0 %v4024
      %4551 = vmatprep.subr.bf16.mxu0 %v4029
      %4552 = vmatpush1.bf16.msra.mxu0 %v4028
      %4553 = vmatprep.subr.bf16.mxu0 %v4033
      %4554 = vmatpush1.bf16.msra.mxu0 %v4032
      %4555 = vmatprep.subr.bf16.mxu0 %v4037
      %4556 = vmatpush1.bf16.msra.mxu0 %v4036
      %4557 = vmatprep.subr.bf16.mxu0 %v4041
      %4558 = vmatpush1.bf16.msra.mxu0 %v4040
      %4559 = vmatprep.subr.bf16.mxu0 %v4045
      %4560 = vmatpush1.bf16.msra.mxu0 %v4044
      %4561 = vmatprep.subr.bf16.mxu0 %v4049
      %4562 = vmatpush1.bf16.msra.mxu0 %v4048
      %4563 = vmatprep.subr.bf16.mxu0 %v4053
      %4564 = vmatpush1.bf16.msra.mxu0 %v4052
      %4565 = vmatprep.subr.bf16.mxu0 %v4057
      %4566 = vmatpush1.bf16.msra.mxu0 %v4056
      %4567 = vmatprep.subr.bf16.mxu0 %v4061
      %4568 = vmatpush1.bf16.msra.mxu0 %v4060
      %4569 = vmatprep.subr.bf16.mxu0 %v4065
      %4570 = vmatpush1.bf16.msra.mxu0 %v4064
      %4571 = vmatprep.subr.bf16.mxu0 %v4069
      %4572 = vmatpush1.bf16.msra.mxu0 %v4068
      %4573 = vmatprep.subr.bf16.mxu0 %v4073
      %4574 = vmatpush1.bf16.msra.mxu0 %v4072
      %4575 = vmatprep.subr.bf16.mxu0 %v4077
      %4576 = vmatpush1.bf16.msra.mxu0 %v4076
      %4577 = vmatprep.mubr.bf16.mxu0 %v3387
      %4578 = vmatmul.mubr.bf16.gmra.mrb[0].mxu0 %v3386
      %v4579 = vpop.f32.mrb[0].mxu0
      %v4580 = vadd.f32 %v4467, %v4579
      %v4581 = vpop.f32.mrb[0].mxu0
      %v4582 = vadd.f32 %v4469, %v4581
      %v4583 = vpop.f32.mrb[0].mxu0
      %v4584 = vadd.f32 %v4471, %v4583
      %v4585 = vpop.f32.mrb[0].mxu0
      %v4586 = vadd.f32 %v4473, %v4585
      %4587 = vmatprep.mubr.bf16.mxu0 %v3391
      %4588 = vmatmul.mubr.bf16.gmra.mrb[0].mxu0 %v3390
      %v4589 = vpop.f32.mrb[0].mxu0
      %v4590 = vadd.f32 %v4477, %v4589
      %v4591 = vpop.f32.mrb[0].mxu0
      %v4592 = vadd.f32 %v4479, %v4591
      %v4593 = vpop.f32.mrb[0].mxu0
      %v4594 = vadd.f32 %v4481, %v4593
      %v4595 = vpop.f32.mrb[0].mxu0
      %v4596 = vadd.f32 %v4483, %v4595
      %4597 = vmatprep.mubr.bf16.mxu0 %v3395
      %4598 = vmatmul.mubr.bf16.gmra.mrb[0].mxu0 %v3394
      %v4599 = vpop.f32.mrb[0].mxu0
      %v4600 = vadd.f32 %v4487, %v4599
      %v4601 = vpop.f32.mrb[0].mxu0
      %v4602 = vadd.f32 %v4489, %v4601
      %v4603 = vpop.f32.mrb[0].mxu0
      %v4604 = vadd.f32 %v4491, %v4603
      %v4605 = vpop.f32.mrb[0].mxu0
      %v4606 = vadd.f32 %v4493, %v4605
      %4607 = vmatprep.mubr.bf16.mxu0 %v3399
      %4608 = vmatmul.mubr.bf16.gmra.mrb[0].mxu0 %v3398
      %v4609 = vpop.f32.mrb[0].mxu0
      %v4610 = vadd.f32 %v4497, %v4609
      %v4611 = vpop.f32.mrb[0].mxu0
      %v4612 = vadd.f32 %v4499, %v4611
      %v4613 = vpop.f32.mrb[0].mxu0
      %v4614 = vadd.f32 %v4501, %v4613
      %v4615 = vpop.f32.mrb[0].mxu0
      %v4616 = vadd.f32 %v4503, %v4615
      %4617 = vmatprep.mubr.bf16.mxu0 %v3403
      %4618 = vmatmul.mubr.bf16.gmra.mrb[0].mxu0 %v3402
      %v4619 = vpop.f32.mrb[0].mxu0
      %v4620 = vadd.f32 %v4507, %v4619
      %v4621 = vpop.f32.mrb[0].mxu0
      %v4622 = vadd.f32 %v4509, %v4621
      %v4623 = vpop.f32.mrb[0].mxu0
      %v4624 = vadd.f32 %v4511, %v4623
      %v4625 = vpop.f32.mrb[0].mxu0
      %v4626 = vadd.f32 %v4513, %v4625
      %4627 = vmatprep.mubr.bf16.mxu0 %v3407
      %4628 = vmatmul.mubr.bf16.gmra.mrb[0].mxu0 %v3406
      %v4629 = vpop.f32.mrb[0].mxu0
      %v4630 = vadd.f32 %v4517, %v4629
      %v4631 = vpop.f32.mrb[0].mxu0
      %v4632 = vadd.f32 %v4519, %v4631
      %v4633 = vpop.f32.mrb[0].mxu0
      %v4634 = vadd.f32 %v4521, %v4633
      %v4635 = vpop.f32.mrb[0].mxu0
      %v4636 = vadd.f32 %v4523, %v4635
      %4637 = vmatprep.mubr.bf16.mxu0 %v3411
      %4638 = vmatmul.mubr.bf16.gmra.mrb[0].mxu0 %v3410
      %v4639 = vpop.f32.mrb[0].mxu0
      %v4640 = vadd.f32 %v4527, %v4639
      %v4641 = vpop.f32.mrb[0].mxu0
      %v4642 = vadd.f32 %v4529, %v4641
      %v4643 = vpop.f32.mrb[0].mxu0
      %v4644 = vadd.f32 %v4531, %v4643
      %v4645 = vpop.f32.mrb[0].mxu0
      %v4646 = vadd.f32 %v4533, %v4645
      %4647 = vmatprep.mubr.bf16.mxu0 %v3415
      %4648 = vmatmul.mubr.bf16.gmra.mrb[0].mxu0 %v3414
      %v4649 = vpop.f32.mrb[0].mxu0
      %v4650 = vadd.f32 %v4537, %v4649
      %v4651 = vpop.f32.mrb[0].mxu0
      %v4652 = vadd.f32 %v4539, %v4651
      %v4653 = vpop.f32.mrb[0].mxu0
      %v4654 = vadd.f32 %v4541, %v4653
      %v4655 = vpop.f32.mrb[0].mxu0
      %v4656 = vadd.f32 %v4543, %v4655
      %4657 = vdwg.mxu0
      %v4658 = vmax.f32 %v4354, 0.0
      %v4659 = vmax.f32 %v4356, 0.0
      %v4660 = vmax.f32 %v4580, 0.0
      %v4661 = vmax.f32 %v4582, 0.0
      %v4662 = vmax.f32 %v4358, 0.0
      %v4663 = vmax.f32 %v4360, 0.0
      %v4664 = vmax.f32 %v4584, 0.0
      %v4665 = vmax.f32 %v4586, 0.0
      %v4666 = vmax.f32 %v4364, 0.0
      %v4667 = vmax.f32 %v4366, 0.0
      %v4668 = vmax.f32 %v4590, 0.0
      %v4669 = vmax.f32 %v4592, 0.0
      %v4670 = vmax.f32 %v4368, 0.0
      %v4671 = vmax.f32 %v4370, 0.0
      %v4672 = vmax.f32 %v4594, 0.0
      %v4673 = vmax.f32 %v4596, 0.0
      %v4674 = vmax.f32 %v4374, 0.0
      %v4675 = vmax.f32 %v4376, 0.0
      %v4676 = vmax.f32 %v4600, 0.0
      %v4677 = vmax.f32 %v4602, 0.0
      %v4678 = vmax.f32 %v4378, 0.0
      %v4679 = vmax.f32 %v4380, 0.0
      %v4680 = vmax.f32 %v4604, 0.0
      %v4681 = vmax.f32 %v4606, 0.0
      %v4682 = vmax.f32 %v4384, 0.0
      %v4683 = vmax.f32 %v4386, 0.0
      %v4684 = vmax.f32 %v4610, 0.0
      %v4685 = vmax.f32 %v4612, 0.0
      %v4686 = vmax.f32 %v4388, 0.0
      %v4687 = vmax.f32 %v4390, 0.0
      %v4688 = vmax.f32 %v4614, 0.0
      %v4689 = vmax.f32 %v4616, 0.0
      %v4690 = vmax.f32 %v4394, 0.0
      %v4691 = vmax.f32 %v4396, 0.0
      %v4692 = vmax.f32 %v4620, 0.0
      %v4693 = vmax.f32 %v4622, 0.0
      %v4694 = vmax.f32 %v4398, 0.0
      %v4695 = vmax.f32 %v4400, 0.0
      %v4696 = vmax.f32 %v4624, 0.0
      %v4697 = vmax.f32 %v4626, 0.0
      %v4698 = vmax.f32 %v4404, 0.0
      %v4699 = vmax.f32 %v4406, 0.0
      %v4700 = vmax.f32 %v4630, 0.0
      %v4701 = vmax.f32 %v4632, 0.0
      %v4702 = vmax.f32 %v4408, 0.0
      %v4703 = vmax.f32 %v4410, 0.0
      %v4704 = vmax.f32 %v4634, 0.0
      %v4705 = vmax.f32 %v4636, 0.0
      %v4706 = vmax.f32 %v4414, 0.0
      %v4707 = vmax.f32 %v4416, 0.0
      %v4708 = vmax.f32 %v4640, 0.0
      %v4709 = vmax.f32 %v4642, 0.0
      %v4710 = vmax.f32 %v4418, 0.0
      %v4711 = vmax.f32 %v4420, 0.0
      %v4712 = vmax.f32 %v4644, 0.0
      %v4713 = vmax.f32 %v4646, 0.0
      %v4714 = vmax.f32 %v4424, 0.0
      %v4715 = vmax.f32 %v4426, 0.0
      %v4716 = vmax.f32 %v4650, 0.0
      %v4717 = vmax.f32 %v4652, 0.0
      %v4718 = vmax.f32 %v4428, 0.0
      %v4719 = vmax.f32 %v4430, 0.0
      %v4720 = vmax.f32 %v4654, 0.0
      %v4721 = vmax.f32 %v4656, 0.0
      %v4722 = vpack.c.bf16 %v4662, %v4658
      %v4723 = vpack.c.bf16 %v4663, %v4659
      %v4724 = vpack.c.bf16 %v4664, %v4660
      %v4725 = vpack.c.bf16 %v4665, %v4661
      %v4726 = vpack.c.bf16 %v4670, %v4666
      %v4727 = vpack.c.bf16 %v4671, %v4667
      %v4728 = vpack.c.bf16 %v4672, %v4668
      %v4729 = vpack.c.bf16 %v4673, %v4669
      %v4730 = vpack.c.bf16 %v4678, %v4674
      %v4731 = vpack.c.bf16 %v4679, %v4675
      %v4732 = vpack.c.bf16 %v4680, %v4676
      %v4733 = vpack.c.bf16 %v4681, %v4677
      %v4734 = vpack.c.bf16 %v4686, %v4682
      %v4735 = vpack.c.bf16 %v4687, %v4683
      %v4736 = vpack.c.bf16 %v4688, %v4684
      %v4737 = vpack.c.bf16 %v4689, %v4685
      %v4738 = vpack.c.bf16 %v4694, %v4690
      %v4739 = vpack.c.bf16 %v4695, %v4691
      %v4740 = vpack.c.bf16 %v4696, %v4692
      %v4741 = vpack.c.bf16 %v4697, %v4693
      %v4742 = vpack.c.bf16 %v4702, %v4698
      %v4743 = vpack.c.bf16 %v4703, %v4699
      %v4744 = vpack.c.bf16 %v4704, %v4700
      %v4745 = vpack.c.bf16 %v4705, %v4701
      %v4746 = vpack.c.bf16 %v4710, %v4706
      %v4747 = vpack.c.bf16 %v4711, %v4707
      %v4748 = vpack.c.bf16 %v4712, %v4708
      %v4749 = vpack.c.bf16 %v4713, %v4709
      %v4750 = vpack.c.bf16 %v4718, %v4714
      %v4751 = vpack.c.bf16 %v4719, %v4715
      %v4752 = vpack.c.bf16 %v4720, %v4716
      %v4753 = vpack.c.bf16 %v4721, %v4717
      %v4754 = vld [vmem:[#allocation9] sm:$0xf]
      %v4755 = vld [vmem:[#allocation9 + $0x4] sm:$0xf]
      %v4756 = vld [vmem:[#allocation9 + $0x8] sm:$0xf]
      %v4757 = vld [vmem:[#allocation9 + $0xc] sm:$0xf]
      %v4758 = vld [vmem:[#allocation9 + $0x10] sm:$0xf]
      %v4759 = vld [vmem:[#allocation9 + $0x14] sm:$0xf]
      %v4760 = vld [vmem:[#allocation9 + $0x18] sm:$0xf]
      %v4761 = vld [vmem:[#allocation9 + $0x1c] sm:$0xf]
      %v4762 = vld [vmem:[#allocation9 + $0x20] sm:$0xf]
      %v4763 = vld [vmem:[#allocation9 + $0x24] sm:$0xf]
      %v4764 = vld [vmem:[#allocation9 + $0x28] sm:$0xf]
      %v4765 = vld [vmem:[#allocation9 + $0x2c] sm:$0xf]
      %v4766 = vld [vmem:[#allocation9 + $0x30] sm:$0xf]
      %v4767 = vld [vmem:[#allocation9 + $0x34] sm:$0xf]
      %v4768 = vld [vmem:[#allocation9 + $0x38] sm:$0xf]
      %v4769 = vld [vmem:[#allocation9 + $0x3c] sm:$0xf]
      %v4770 = vld [vmem:[#allocation9 + $0x40] sm:$0xf]
      %v4771 = vld [vmem:[#allocation9 + $0x44] sm:$0xf]
      %v4772 = vld [vmem:[#allocation9 + $0x48] sm:$0xf]
      %v4773 = vld [vmem:[#allocation9 + $0x4c] sm:$0xf]
      %v4774 = vld [vmem:[#allocation9 + $0x50] sm:$0xf]
      %v4775 = vld [vmem:[#allocation9 + $0x54] sm:$0xf]
      %v4776 = vld [vmem:[#allocation9 + $0x58] sm:$0xf]
      %v4777 = vld [vmem:[#allocation9 + $0x5c] sm:$0xf]
      %v4778 = vld [vmem:[#allocation9 + $0x60] sm:$0xf]
      %v4779 = vld [vmem:[#allocation9 + $0x64] sm:$0xf]
      %v4780 = vld [vmem:[#allocation9 + $0x68] sm:$0xf]
      %v4781 = vld [vmem:[#allocation9 + $0x6c] sm:$0xf]
      %v4782 = vld [vmem:[#allocation9 + $0x70] sm:$0xf]
      %v4783 = vld [vmem:[#allocation9 + $0x74] sm:$0xf]
      %v4784 = vld [vmem:[#allocation9 + $0x78] sm:$0xf]
      %v4785 = vld [vmem:[#allocation9 + $0x7c] sm:$0xf]
      %v4786 = vld [vmem:[#allocation9 + $0x80] sm:$0xf]
      %v4787 = vld [vmem:[#allocation9 + $0x84] sm:$0xf]
      %v4788 = vld [vmem:[#allocation9 + $0x88] sm:$0xf]
      %v4789 = vld [vmem:[#allocation9 + $0x8c] sm:$0xf]
      %v4790 = vld [vmem:[#allocation9 + $0x90] sm:$0xf]
      %v4791 = vld [vmem:[#allocation9 + $0x94] sm:$0xf]
      %v4792 = vld [vmem:[#allocation9 + $0x98] sm:$0xf]
      %v4793 = vld [vmem:[#allocation9 + $0x9c] sm:$0xf]
      %v4794 = vld [vmem:[#allocation9 + $0xa0] sm:$0xf]
      %v4795 = vld [vmem:[#allocation9 + $0xa4] sm:$0xf]
      %v4796 = vld [vmem:[#allocation9 + $0xa8] sm:$0xf]
      %v4797 = vld [vmem:[#allocation9 + $0xac] sm:$0xf]
      %v4798 = vld [vmem:[#allocation9 + $0xb0] sm:$0xf]
      %v4799 = vld [vmem:[#allocation9 + $0xb4] sm:$0xf]
      %v4800 = vld [vmem:[#allocation9 + $0xb8] sm:$0xf]
      %v4801 = vld [vmem:[#allocation9 + $0xbc] sm:$0xf]
      %v4802 = vld [vmem:[#allocation9 + $0xc0] sm:$0xf]
      %v4803 = vld [vmem:[#allocation9 + $0xc4] sm:$0xf]
      %v4804 = vld [vmem:[#allocation9 + $0xc8] sm:$0xf]
      %v4805 = vld [vmem:[#allocation9 + $0xcc] sm:$0xf]
      %v4806 = vld [vmem:[#allocation9 + $0xd0] sm:$0xf]
      %v4807 = vld [vmem:[#allocation9 + $0xd4] sm:$0xf]
      %v4808 = vld [vmem:[#allocation9 + $0xd8] sm:$0xf]
      %v4809 = vld [vmem:[#allocation9 + $0xdc] sm:$0xf]
      %v4810 = vld [vmem:[#allocation9 + $0xe0] sm:$0xf]
      %v4811 = vld [vmem:[#allocation9 + $0xe4] sm:$0xf]
      %v4812 = vld [vmem:[#allocation9 + $0xe8] sm:$0xf]
      %v4813 = vld [vmem:[#allocation9 + $0xec] sm:$0xf]
      %v4814 = vld [vmem:[#allocation9 + $0xf0] sm:$0xf]
      %v4815 = vld [vmem:[#allocation9 + $0xf4] sm:$0xf]
      %v4816 = vld [vmem:[#allocation9 + $0xf8] sm:$0xf]
      %v4817 = vld [vmem:[#allocation9 + $0xfc] sm:$0xf]
      %v4818 = vld [vmem:[%s6] sm:$0x1]
      %v4820 = vlaneseq
      %v4821 = vshrl.u32 %v4820, 7
      %v4822 = vsub.s32 0, %v4821
      %v4823 = vrot.slane %v4818, %v4822
      %v4889 = vunpack.c.l.b16 %v4754
      %v4890 = vunpack.c.l.b16 %v4755
      %v4891 = vunpack.c.l.b16 %v4756
      %v4892 = vunpack.c.l.b16 %v4757
      %v4893 = vunpack.c.l.b16 %v4758
      %v4894 = vunpack.c.l.b16 %v4759
      %v4895 = vunpack.c.l.b16 %v4760
      %v4896 = vunpack.c.l.b16 %v4761
      %v4897 = vunpack.c.l.b16 %v4762
      %v4898 = vunpack.c.l.b16 %v4763
      %v4899 = vunpack.c.l.b16 %v4764
      %v4900 = vunpack.c.l.b16 %v4765
      %v4901 = vunpack.c.l.b16 %v4766
      %v4902 = vunpack.c.l.b16 %v4767
      %v4903 = vunpack.c.l.b16 %v4768
      %v4904 = vunpack.c.l.b16 %v4769
      %v4905 = vunpack.c.l.b16 %v4770
      %v4906 = vunpack.c.l.b16 %v4771
      %v4907 = vunpack.c.l.b16 %v4772
      %v4908 = vunpack.c.l.b16 %v4773
      %v4909 = vunpack.c.l.b16 %v4774
      %v4910 = vunpack.c.l.b16 %v4775
      %v4911 = vunpack.c.l.b16 %v4776
      %v4912 = vunpack.c.l.b16 %v4777
      %v4913 = vunpack.c.l.b16 %v4778
      %v4914 = vunpack.c.l.b16 %v4779
      %v4915 = vunpack.c.l.b16 %v4780
      %v4916 = vunpack.c.l.b16 %v4781
      %v4917 = vunpack.c.l.b16 %v4782
      %v4918 = vunpack.c.l.b16 %v4783
      %v4919 = vunpack.c.l.b16 %v4784
      %v4920 = vunpack.c.l.b16 %v4785
      %v4921 = vunpack.c.l.b16 %v4786
      %v4922 = vunpack.c.l.b16 %v4787
      %v4923 = vunpack.c.l.b16 %v4788
      %v4924 = vunpack.c.l.b16 %v4789
      %v4925 = vunpack.c.l.b16 %v4790
      %v4926 = vunpack.c.l.b16 %v4791
      %v4927 = vunpack.c.l.b16 %v4792
      %v4928 = vunpack.c.l.b16 %v4793
      %v4929 = vunpack.c.l.b16 %v4794
      %v4930 = vunpack.c.l.b16 %v4795
      %v4931 = vunpack.c.l.b16 %v4796
      %v4932 = vunpack.c.l.b16 %v4797
      %v4933 = vunpack.c.l.b16 %v4798
      %v4934 = vunpack.c.l.b16 %v4799
      %v4935 = vunpack.c.l.b16 %v4800
      %v4936 = vunpack.c.l.b16 %v4801
      %v4937 = vunpack.c.l.b16 %v4802
      %v4938 = vunpack.c.l.b16 %v4803
      %v4939 = vunpack.c.l.b16 %v4804
      %v4940 = vunpack.c.l.b16 %v4805
      %v4941 = vunpack.c.l.b16 %v4806
      %v4942 = vunpack.c.l.b16 %v4807
      %v4943 = vunpack.c.l.b16 %v4808
      %v4944 = vunpack.c.l.b16 %v4809
      %v4945 = vunpack.c.l.b16 %v4810
      %v4946 = vunpack.c.l.b16 %v4811
      %v4947 = vunpack.c.l.b16 %v4812
      %v4948 = vunpack.c.l.b16 %v4813
      %v4949 = vunpack.c.l.b16 %v4814
      %v4950 = vunpack.c.l.b16 %v4815
      %v4951 = vunpack.c.l.b16 %v4816
      %v4952 = vunpack.c.l.b16 %v4817
      %v4953 = vpack.c.b16 %v4890, %v4889
      %v4954 = vpack.c.b16 %v4892, %v4891
      %v4955 = vpack.c.b16 %v4894, %v4893
      %v4956 = vpack.c.b16 %v4896, %v4895
      %v4957 = vpack.c.b16 %v4898, %v4897
      %v4958 = vpack.c.b16 %v4900, %v4899
      %v4959 = vpack.c.b16 %v4902, %v4901
      %v4960 = vpack.c.b16 %v4904, %v4903
      %v4961 = vpack.c.b16 %v4906, %v4905
      %v4962 = vpack.c.b16 %v4908, %v4907
      %v4963 = vpack.c.b16 %v4910, %v4909
      %v4964 = vpack.c.b16 %v4912, %v4911
      %v4965 = vpack.c.b16 %v4914, %v4913
      %v4966 = vpack.c.b16 %v4916, %v4915
      %v4967 = vpack.c.b16 %v4918, %v4917
      %v4968 = vpack.c.b16 %v4920, %v4919
      %v4969 = vpack.c.b16 %v4922, %v4921
      %v4970 = vpack.c.b16 %v4924, %v4923
      %v4971 = vpack.c.b16 %v4926, %v4925
      %v4972 = vpack.c.b16 %v4928, %v4927
      %v4973 = vpack.c.b16 %v4930, %v4929
      %v4974 = vpack.c.b16 %v4932, %v4931
      %v4975 = vpack.c.b16 %v4934, %v4933
      %v4976 = vpack.c.b16 %v4936, %v4935
      %v4977 = vpack.c.b16 %v4938, %v4937
      %v4978 = vpack.c.b16 %v4940, %v4939
      %v4979 = vpack.c.b16 %v4942, %v4941
      %v4980 = vpack.c.b16 %v4944, %v4943
      %v4981 = vpack.c.b16 %v4946, %v4945
      %v4982 = vpack.c.b16 %v4948, %v4947
      %v4983 = vpack.c.b16 %v4950, %v4949
      %v4984 = vpack.c.b16 %v4952, %v4951
      %5017 = vmatprep.subr.bf16.mxu0 0
      %5018 = vmatpush1.bf16.msra.mxu0 %v4953
      %5019 = vmatprep.subr.bf16.mxu0 0
      %5020 = vmatpush1.bf16.msra.mxu0 %v4954
      %5021 = vmatprep.subr.bf16.mxu0 0
      %5022 = vmatpush1.bf16.msra.mxu0 %v4955
      %5023 = vmatprep.subr.bf16.mxu0 0
      %5024 = vmatpush1.bf16.msra.mxu0 %v4956
      %5025 = vmatprep.subr.bf16.mxu0 0
      %5026 = vmatpush1.bf16.msra.mxu0 %v4957
      %5027 = vmatprep.subr.bf16.mxu0 0
      %5028 = vmatpush1.bf16.msra.mxu0 %v4958
      %5029 = vmatprep.subr.bf16.mxu0 0
      %5030 = vmatpush1.bf16.msra.mxu0 %v4959
      %5031 = vmatprep.subr.bf16.mxu0 0
      %5032 = vmatpush1.bf16.msra.mxu0 %v4960
      %5033 = vmatprep.subr.bf16.mxu0 0
      %5034 = vmatpush1.bf16.msra.mxu0 %v4961
      %5035 = vmatprep.subr.bf16.mxu0 0
      %5036 = vmatpush1.bf16.msra.mxu0 %v4962
      %5037 = vmatprep.subr.bf16.mxu0 0
      %5038 = vmatpush1.bf16.msra.mxu0 %v4963
      %5039 = vmatprep.subr.bf16.mxu0 0
      %5040 = vmatpush1.bf16.msra.mxu0 %v4964
      %5041 = vmatprep.subr.bf16.mxu0 0
      %5042 = vmatpush1.bf16.msra.mxu0 %v4965
      %5043 = vmatprep.subr.bf16.mxu0 0
      %5044 = vmatpush1.bf16.msra.mxu0 %v4966
      %5045 = vmatprep.subr.bf16.mxu0 0
      %5046 = vmatpush1.bf16.msra.mxu0 %v4967
      %5047 = vmatprep.subr.bf16.mxu0 0
      %5048 = vmatpush1.bf16.msra.mxu0 %v4968
      %5049 = vmatprep.mubr.bf16.mxu0 %v4723
      %5050 = vmatmul.mubr.bf16.gmra.mrb[0].mxu0 %v4722
      %v5051 = vpop.f32.mrb[0].mxu0
      %v5052 = vadd.f32 %v4823, %v5051
      %v5053 = vpop.f32.mrb[0].mxu0
      %v5054 = vpop.f32.mrb[0].mxu0
      %v5055 = vadd.f32 %v4823, %v5054
      %v5056 = vpop.f32.mrb[0].mxu0
      %5057 = vmatprep.mubr.bf16.mxu0 %v4727
      %5058 = vmatmul.mubr.bf16.gmra.mrb[0].mxu0 %v4726
      %v5059 = vpop.f32.mrb[0].mxu0
      %v5060 = vadd.f32 %v4823, %v5059
      %v5061 = vpop.f32.mrb[0].mxu0
      %v5062 = vpop.f32.mrb[0].mxu0
      %v5063 = vadd.f32 %v4823, %v5062
      %v5064 = vpop.f32.mrb[0].mxu0
      %5065 = vmatprep.mubr.bf16.mxu0 %v4731
      %5066 = vmatmul.mubr.bf16.gmra.mrb[0].mxu0 %v4730
      %v5067 = vpop.f32.mrb[0].mxu0
      %v5068 = vadd.f32 %v4823, %v5067
      %v5069 = vpop.f32.mrb[0].mxu0
      %v5070 = vpop.f32.mrb[0].mxu0
      %v5071 = vadd.f32 %v4823, %v5070
      %v5072 = vpop.f32.mrb[0].mxu0
      %5073 = vmatprep.mubr.bf16.mxu0 %v4735
      %5074 = vmatmul.mubr.bf16.gmra.mrb[0].mxu0 %v4734
      %v5075 = vpop.f32.mrb[0].mxu0
      %v5076 = vadd.f32 %v4823, %v5075
      %v5077 = vpop.f32.mrb[0].mxu0
      %v5078 = vpop.f32.mrb[0].mxu0
      %v5079 = vadd.f32 %v4823, %v5078
      %v5080 = vpop.f32.mrb[0].mxu0
      %5081 = vmatprep.mubr.bf16.mxu0 %v4739
      %5082 = vmatmul.mubr.bf16.gmra.mrb[0].mxu0 %v4738
      %v5083 = vpop.f32.mrb[0].mxu0
      %v5084 = vadd.f32 %v4823, %v5083
      %v5085 = vpop.f32.mrb[0].mxu0
      %v5086 = vpop.f32.mrb[0].mxu0
      %v5087 = vadd.f32 %v4823, %v5086
      %v5088 = vpop.f32.mrb[0].mxu0
      %5089 = vmatprep.mubr.bf16.mxu0 %v4743
      %5090 = vmatmul.mubr.bf16.gmra.mrb[0].mxu0 %v4742
      %v5091 = vpop.f32.mrb[0].mxu0
      %v5092 = vadd.f32 %v4823, %v5091
      %v5093 = vpop.f32.mrb[0].mxu0
      %v5094 = vpop.f32.mrb[0].mxu0
      %v5095 = vadd.f32 %v4823, %v5094
      %v5096 = vpop.f32.mrb[0].mxu0
      %5097 = vmatprep.mubr.bf16.mxu0 %v4747
      %5098 = vmatmul.mubr.bf16.gmra.mrb[0].mxu0 %v4746
      %v5099 = vpop.f32.mrb[0].mxu0
      %v5100 = vadd.f32 %v4823, %v5099
      %v5101 = vpop.f32.mrb[0].mxu0
      %v5102 = vpop.f32.mrb[0].mxu0
      %v5103 = vadd.f32 %v4823, %v5102
      %v5104 = vpop.f32.mrb[0].mxu0
      %5105 = vmatprep.mubr.bf16.mxu0 %v4751
      %5106 = vmatmul.mubr.bf16.gmra.mrb[0].mxu0 %v4750
      %v5107 = vpop.f32.mrb[0].mxu0
      %v5108 = vadd.f32 %v4823, %v5107
      %v5109 = vpop.f32.mrb[0].mxu0
      %v5110 = vpop.f32.mrb[0].mxu0
      %v5111 = vadd.f32 %v4823, %v5110
      %v5112 = vpop.f32.mrb[0].mxu0
      %5113 = vdwg.mxu0
      %5114 = vmatprep.subr.bf16.mxu0 0
      %5115 = vmatpush1.bf16.msra.mxu0 %v4969
      %5116 = vmatprep.subr.bf16.mxu0 0
      %5117 = vmatpush1.bf16.msra.mxu0 %v4970
      %5118 = vmatprep.subr.bf16.mxu0 0
      %5119 = vmatpush1.bf16.msra.mxu0 %v4971
      %5120 = vmatprep.subr.bf16.mxu0 0
      %5121 = vmatpush1.bf16.msra.mxu0 %v4972
      %5122 = vmatprep.subr.bf16.mxu0 0
      %5123 = vmatpush1.bf16.msra.mxu0 %v4973
      %5124 = vmatprep.subr.bf16.mxu0 0
      %5125 = vmatpush1.bf16.msra.mxu0 %v4974
      %5126 = vmatprep.subr.bf16.mxu0 0
      %5127 = vmatpush1.bf16.msra.mxu0 %v4975
      %5128 = vmatprep.subr.bf16.mxu0 0
      %5129 = vmatpush1.bf16.msra.mxu0 %v4976
      %5130 = vmatprep.subr.bf16.mxu0 0
      %5131 = vmatpush1.bf16.msra.mxu0 %v4977
      %5132 = vmatprep.subr.bf16.mxu0 0
      %5133 = vmatpush1.bf16.msra.mxu0 %v4978
      %5134 = vmatprep.subr.bf16.mxu0 0
      %5135 = vmatpush1.bf16.msra.mxu0 %v4979
      %5136 = vmatprep.subr.bf16.mxu0 0
      %5137 = vmatpush1.bf16.msra.mxu0 %v4980
      %5138 = vmatprep.subr.bf16.mxu0 0
      %5139 = vmatpush1.bf16.msra.mxu0 %v4981
      %5140 = vmatprep.subr.bf16.mxu0 0
      %5141 = vmatpush1.bf16.msra.mxu0 %v4982
      %5142 = vmatprep.subr.bf16.mxu0 0
      %5143 = vmatpush1.bf16.msra.mxu0 %v4983
      %5144 = vmatprep.subr.bf16.mxu0 0
      %5145 = vmatpush1.bf16.msra.mxu0 %v4984
      %5146 = vmatprep.mubr.bf16.mxu0 %v4725
      %5147 = vmatmul.mubr.bf16.gmra.mrb[0].mxu0 %v4724
      %v5148 = vpop.f32.mrb[0].mxu0
      %v5149 = vadd.f32 %v5052, %v5148
      %v5150 = vpop.f32.mrb[0].mxu0
      %v5151 = vpop.f32.mrb[0].mxu0
      %v5152 = vadd.f32 %v5055, %v5151
      %v5153 = vpop.f32.mrb[0].mxu0
      %5154 = vmatprep.mubr.bf16.mxu0 %v4729
      %5155 = vmatmul.mubr.bf16.gmra.mrb[0].mxu0 %v4728
      %v5156 = vpop.f32.mrb[0].mxu0
      %v5157 = vadd.f32 %v5060, %v5156
      %v5158 = vpop.f32.mrb[0].mxu0
      %v5159 = vpop.f32.mrb[0].mxu0
      %v5160 = vadd.f32 %v5063, %v5159
      %v5161 = vpop.f32.mrb[0].mxu0
      %5162 = vmatprep.mubr.bf16.mxu0 %v4733
      %5163 = vmatmul.mubr.bf16.gmra.mrb[0].mxu0 %v4732
      %v5164 = vpop.f32.mrb[0].mxu0
      %v5165 = vadd.f32 %v5068, %v5164
      %v5166 = vpop.f32.mrb[0].mxu0
      %v5167 = vpop.f32.mrb[0].mxu0
      %v5168 = vadd.f32 %v5071, %v5167
      %v5169 = vpop.f32.mrb[0].mxu0
      %5170 = vmatprep.mubr.bf16.mxu0 %v4737
      %5171 = vmatmul.mubr.bf16.gmra.mrb[0].mxu0 %v4736
      %v5172 = vpop.f32.mrb[0].mxu0
      %v5173 = vadd.f32 %v5076, %v5172
      %v5174 = vpop.f32.mrb[0].mxu0
      %v5175 = vpop.f32.mrb[0].mxu0
      %v5176 = vadd.f32 %v5079, %v5175
      %v5177 = vpop.f32.mrb[0].mxu0
      %5178 = vmatprep.mubr.bf16.mxu0 %v4741
      %5179 = vmatmul.mubr.bf16.gmra.mrb[0].mxu0 %v4740
      %v5180 = vpop.f32.mrb[0].mxu0
      %v5181 = vadd.f32 %v5084, %v5180
      %v5182 = vpop.f32.mrb[0].mxu0
      %v5183 = vpop.f32.mrb[0].mxu0
      %v5184 = vadd.f32 %v5087, %v5183
      %v5185 = vpop.f32.mrb[0].mxu0
      %5186 = vmatprep.mubr.bf16.mxu0 %v4745
      %5187 = vmatmul.mubr.bf16.gmra.mrb[0].mxu0 %v4744
      %v5188 = vpop.f32.mrb[0].mxu0
      %v5189 = vadd.f32 %v5092, %v5188
      %v5190 = vpop.f32.mrb[0].mxu0
      %v5191 = vpop.f32.mrb[0].mxu0
      %v5192 = vadd.f32 %v5095, %v5191
      %v5193 = vpop.f32.mrb[0].mxu0
      %5194 = vmatprep.mubr.bf16.mxu0 %v4749
      %5195 = vmatmul.mubr.bf16.gmra.mrb[0].mxu0 %v4748
      %v5196 = vpop.f32.mrb[0].mxu0
      %v5197 = vadd.f32 %v5100, %v5196
      %v5198 = vpop.f32.mrb[0].mxu0
      %v5199 = vpop.f32.mrb[0].mxu0
      %v5200 = vadd.f32 %v5103, %v5199
      %v5201 = vpop.f32.mrb[0].mxu0
      %5202 = vmatprep.mubr.bf16.mxu0 %v4753
      %5203 = vmatmul.mubr.bf16.gmra.mrb[0].mxu0 %v4752
      %v5204 = vpop.f32.mrb[0].mxu0
      %v5205 = vadd.f32 %v5108, %v5204
      %v5206 = vpop.f32.mrb[0].mxu0
      %v5207 = vpop.f32.mrb[0].mxu0
      %v5208 = vadd.f32 %v5111, %v5207
      %v5209 = vpop.f32.mrb[0].mxu0
      %5210 = vdwg.mxu0
      %5211 = vst [vmem:[#allocation11] sm:$0xff] %v5149
      %5212 = vst [vmem:[#allocation11 + $0x8] sm:$0xff] %v5152
      %5213 = vst [vmem:[#allocation11 + $0x10] sm:$0xff] %v5157
      %5214 = vst [vmem:[#allocation11 + $0x18] sm:$0xff] %v5160
      %5215 = vst [vmem:[#allocation11 + $0x20] sm:$0xff] %v5165
      %5216 = vst [vmem:[#allocation11 + $0x28] sm:$0xff] %v5168
      %5217 = vst [vmem:[#allocation11 + $0x30] sm:$0xff] %v5173
      %5218 = vst [vmem:[#allocation11 + $0x38] sm:$0xff] %v5176
      %5219 = vst [vmem:[#allocation11 + $0x40] sm:$0xff] %v5181
      %5220 = vst [vmem:[#allocation11 + $0x48] sm:$0xff] %v5184
      %5221 = vst [vmem:[#allocation11 + $0x50] sm:$0xff] %v5189
      %5222 = vst [vmem:[#allocation11 + $0x58] sm:$0xff] %v5192
      %5223 = vst [vmem:[#allocation11 + $0x60] sm:$0xff] %v5197
      %5224 = vst [vmem:[#allocation11 + $0x68] sm:$0xff] %v5200
      %5225 = vst [vmem:[#allocation11 + $0x70] sm:$0xff] %v5205
      %5226 = vst [vmem:[#allocation11 + $0x78] sm:$0xff] %v5208
    $region53: #{tpu_custom_call.1} parent=1 // pred_fallthru
      _
    // Predicated region
    $region54: #{tpu_custom_call.1} parent=1 // pred_check
      _
    $region55: #{tpu_custom_call.1} parent=1 // pred_check_branch
      %5228 = sbr.rel (0) target = $region57
    $region56: #{tpu_custom_call.1} parent=1 // pred_region
      %s5230 = ssub.s32 2048, 2048
      %5231 = vsyncadd [#allocation5], %s5230
      %s5232 = sshll.u32 [#allocation11], 4
      %s5233 = int_to_ptr.vmem [resolvable:$true] %s5232
      %5238 = dma.vmem_to_hbm [thread:$0]  %s5233, 2048, %s7, [#allocation5], 128, 128, 8
    $region57: #{tpu_custom_call.1} parent=1 // pred_fallthru
      _
    // Predicated region
    $region58: #{tpu_custom_call.1} parent=1 // pred_check
      _
    $region59: #{tpu_custom_call.1} parent=1 // pred_check_branch
      %5240 = sbr.rel (0) target = $region61
    $region60: #{tpu_custom_call.1} parent=1 // pred_region
      %5241 = dma.done [#allocation5], 2048
    $region61: #{tpu_custom_call.1} parent=1 // pred_fallthru
      _
    %5242 = vsyncpa [#allocation4], 1
    %5243 = vsyncpa [#allocation7], 1
    %5244 = vsyncpa [#allocation10], 1
    %5245 = vsyncpa [#allocation5], 1

</llo_original>
